<compile_context>
chip_gen: v6e
topology: v6e:2x2x1
jax: 0.10.0
libtpu: 0.0.40
codegen_flags: <defaults>
</compile_context>

<pallas_src>
import functools

import jax
import jax.numpy as jnp
from jax import lax
from jax.experimental import pallas as pl
from jax.experimental.pallas import tpu as pltpu


# ----------------------------------------------------------------------------
# Fused kernel: all GRU layers + fc + sigmoid in a single invocation (no grid)
# ----------------------------------------------------------------------------
def _discriminator_fused_kernel(*refs, num_layers, seq_len, batch, latent_dim):
    T, B, D = seq_len, batch, latent_dim
    L = num_layers

    x_ref = refs[0]                      # [B, T, D]   batch-first input
    fc_w_ref = refs[1 + 4 * L]           # [D, D]
    fc_b_ref = refs[2 + 4 * L]           # [1, D]
    out_ref = refs[3 + 4 * L]            # [B, T, D]   batch-first output
    gi0_ref = refs[4 + 4 * L]            # [B, T, 3D]  scratch: layer-0 gi
    acts_ref = refs[5 + 4 * L]           # [B, T, D]   scratch: top-layer h_t

    # ---- read all weights once (small: ~15 vregs total for L=2, D=32) ------
    wih = [refs[1 + 4 * l][...] for l in range(L)]               # [D, 3D]
    whh = [refs[3 + 4 * l][...] for l in range(L)]               # [D, 3D] fused r|z|n
    # Hoist bias broadcasts out of the unrolled loop (no CSE for broadcasts).
    bgi = [None] + [jnp.broadcast_to(refs[2 + 4 * l][...], (B, 3 * D))
                    for l in range(1, L)]                        # [B, 3D]
    bhn = [jnp.broadcast_to(refs[4 + 4 * l][...], (B, D))
           for l in range(L)]                                    # [B, D]

    # ---- hoisted layer-0 input->hidden projection for ALL timesteps --------
    # [B, T, D] -> [B*T, D] is a tile-preserving (free) reshape (T == 8).
    x = x_ref[...].reshape(B * T, D).astype(jnp.float32)
    gi0 = jnp.dot(x, wih[0], preferred_element_type=jnp.float32) + refs[2][...]
    gi0_ref[...] = gi0.reshape(B, T, 3 * D)   # stage in VMEM, not in vregs

    # ---- one fused GRU cell: single h@Whh matmul, gates peeled by lane slice
    def cell(gi, h_prev, whh_l, bhn_l):
        gh = jnp.dot(h_prev, whh_l, preferred_element_type=jnp.float32)  # [B,3D]
        r = jax.nn.sigmoid(gi[:, 0:D] + gh[:, 0:D])
        z = jax.nn.sigmoid(gi[:, D:2 * D] + gh[:, D:2 * D])
        n = jnp.tanh(gi[:, 2 * D:3 * D] + r * (gh[:, 2 * D:3 * D] + bhn_l))
        return (1.0 - z) * n + z * h_prev

    # ---- wavefront recurrence: one unrolled time loop over all layers -------
    h = [jnp.zeros((B, D), jnp.float32) for _ in range(L)]
    for t in range(T):
        gi = gi0_ref[:, t, :]                                    # [B, 3D]
        h[0] = cell(gi, h[0], whh[0], bhn[0])
        for l in range(1, L):
            gi = (jnp.dot(h[l - 1], wih[l],
                          preferred_element_type=jnp.float32) + bgi[l])
            h[l] = cell(gi, h[l], whh[l], bhn[l])
        acts_ref[:, t, :] = h[L - 1]          # top-layer output -> VMEM scratch

    # ---- fc + sigmoid over all timesteps in one matmul, single bulk store ---
    act = acts_ref[...].reshape(B * T, D)
    y = jax.nn.sigmoid(
        jnp.dot(act, fc_w_ref[...], preferred_element_type=jnp.float32)
        + fc_b_ref[...])
    out_ref[...] = y.reshape(B, T, D).astype(out_ref.dtype)


# ----------------------------------------------------------------------------
# Forward wrapper: single pallas_call, batch-first in and out (no transposes)
# ----------------------------------------------------------------------------
@jax.jit
def discriminator_forward(H, kparams):
    """H: [B, T, D] (batch_first, like PyTorch). Returns Y: [B, T, D]."""
    B, T, D = H.shape
    L = len(kparams["layers"])

    inputs = [H.astype(jnp.float32)]
    for layer in kparams["layers"]:
        inputs += [layer["wih_t"], layer["b_gi"], layer["whh_t"], layer["bhh_n"]]
    inputs += [kparams["fc_w_t"], kparams["fc_b"]]

    kernel = functools.partial(
        _discriminator_fused_kernel,
        num_layers=L, seq_len=T, batch=B, latent_dim=D)

    return pl.pallas_call(
        kernel,
        out_shape=jax.ShapeDtypeStruct((B, T, D), jnp.float32),
        # No grid / no BlockSpecs: every operand is a full-array VMEM block and
        # the kernel runs exactly once (total footprint < 100 KB).
        scratch_shapes=[
            pltpu.VMEM((B, T, 3 * D), jnp.float32),   # layer-0 gi staging
            pltpu.VMEM((B, T, D), jnp.float32),       # top-layer activations
        ],
    )(*inputs)


# ----------------------------------------------------------------------------
# Parameters: raw PyTorch-style init + conversion to the fused-kernel layout
# ----------------------------------------------------------------------------
def init_params(key, latent_dim, num_layers):
    """Raw params with nn.GRU / nn.Linear shapes (input==hidden==latent_dim)."""
    D = latent_dim
    bound = float(D) ** -0.5
    layers = []
    for _ in range(num_layers):
        key, k1, k2, k3, k4 = jax.random.split(key, 5)
        layers.append(dict(
            wih=jax.random.uniform(k1, (3 * D, D), jnp.float32, -bound, bound),
            whh=jax.random.uniform(k2, (3 * D, D), jnp.float32, -bound, bound),
            bih=jax.random.uniform(k3, (3 * D,), jnp.float32, -bound, bound),
            bhh=jax.random.uniform(k4, (3 * D,), jnp.float32, -bound, bound),
        ))
    key, k1, k2 = jax.random.split(key, 3)
    fc_w = jax.random.uniform(k1, (D, D), jnp.float32, -bound, bound)
    fc_b = jax.random.uniform(k2, (D,), jnp.float32, -bound, bound)
    return dict(layers=layers, fc_w=fc_w, fc_b=fc_b)


def prepare_params(raw):
    """Convert raw PyTorch-layout params to the fused-kernel layout (one-time)."""
    D = raw["fc_w"].shape[0]
    layers = []
    for lp in raw["layers"]:
        wih, whh, bih, bhh = lp["wih"], lp["whh"], lp["bih"], lp["bhh"]
        # Fold bih+bhh for the r and z gates; keep only bih for n (bhh_n is
        # applied inside r * (h @ Whh_n + bhh_n)).
        b_gi = jnp.concatenate([
            bih[0:D] + bhh[0:D],
            bih[D:2 * D] + bhh[D:2 * D],
            bih[2 * D:3 * D],
        ]).reshape(1, 3 * D)
        layers.append(dict(
            wih_t=wih.T,                      # [D, 3D]  gates r|z|n
            b_gi=b_gi,                        # [1, 3D]
            whh_t=whh.T,                      # [D, 3D]  fused r|z|n (one matmul)
            bhh_n=bhh[2 * D:3 * D].reshape(1, D),
        ))
    return dict(layers=layers,
                fc_w_t=raw["fc_w"].T,
                fc_b=raw["fc_b"].reshape(1, D))


# ----------------------------------------------------------------------------
# Pure-JAX reference (lax.scan GRU) for correctness checking
# ----------------------------------------------------------------------------
def reference_forward(H, raw):
    B, T, D = H.shape
    x = jnp.transpose(H.astype(jnp.float32), (1, 0, 2))  # [T, B, D]
    for lp in raw["layers"]:
        wih_t, whh_t = lp["wih"].T, lp["whh"].T
        bih, bhh = lp["bih"], lp["bhh"]

        def step(h, xt, wih_t=wih_t, whh_t=whh_t, bih=bih, bhh=bhh):
            gi = xt @ wih_t + bih
            gh = h @ whh_t + bhh
            i_r, i_z, i_n = gi[:, :D], gi[:, D:2 * D], gi[:, 2 * D:]
            h_r, h_z, h_n = gh[:, :D], gh[:, D:2 * D], gh[:, 2 * D:]
            r = jax.nn.sigmoid(i_r + h_r)
            z = jax.nn.sigmoid(i_z + h_z)
            n = jnp.tanh(i_n + r * h_n)
            h_new = (1.0 - z) * n + z * h
            return h_new, h_new

        _, x = lax.scan(step, jnp.zeros((B, D), jnp.float32), x)
    y = jax.nn.sigmoid(x @ raw["fc_w"].T + raw["fc_b"])
    return jnp.transpose(y, (1, 0, 2))


if __name__ == "__main__":
    # Discriminator('gru', feat_dim=6, seq_len=8, latent_dim=32, num_layers=2)
    # (feat_dim is unused by the forward pass)
    batch, seq_len, latent_dim, num_layers = 8, 8, 32, 2

    key = jax.random.PRNGKey(0)
    key, kH, kP = jax.random.split(key, 3)
    H = jax.random.normal(kH, (batch, seq_len, latent_dim), jnp.float32)

    raw_params = init_params(kP, latent_dim, num_layers)
    kparams = prepare_params(raw_params)

    Y = discriminator_forward(H, kparams)
    Y = jax.block_until_ready(Y)

    Y_ref = reference_forward(H, raw_params)
    assert Y.shape == (batch, seq_len, latent_dim)
    assert jnp.allclose(Y, Y_ref, atol=1e-5, rtol=1e-5), "mismatch vs reference"

    print("KERNEL_OK")
</pallas_src>

<mosaic_0001>
module attributes {stable_mosaic.version = 11 : i64} {
  func.func @_discriminator_fused_kernel(%arg0: memref<8x8x32xf32, #tpu.memory_space<vmem>>, %arg1: memref<32x96xf32, #tpu.memory_space<vmem>>, %arg2: memref<1x96xf32, #tpu.memory_space<vmem>>, %arg3: memref<32x96xf32, #tpu.memory_space<vmem>>, %arg4: memref<1x32xf32, #tpu.memory_space<vmem>>, %arg5: memref<32x96xf32, #tpu.memory_space<vmem>>, %arg6: memref<1x96xf32, #tpu.memory_space<vmem>>, %arg7: memref<32x96xf32, #tpu.memory_space<vmem>>, %arg8: memref<1x32xf32, #tpu.memory_space<vmem>>, %arg9: memref<32x32xf32, #tpu.memory_space<vmem>>, %arg10: memref<1x32xf32, #tpu.memory_space<vmem>>, %arg11: memref<8x8x32xf32, #tpu.memory_space<vmem>>, %arg12: memref<8x8x96xf32, #tpu.memory_space<vmem>>, %arg13: memref<8x8x32xf32, #tpu.memory_space<vmem>>) attributes {dimension_semantics = [], scalar_prefetch = 0 : i64, scratch_operands = 2 : i64, tpu.core_type = #tpu.core_type<tc>} {
    %c0 = arith.constant 0 : index
    %c0_0 = arith.constant 0 : index
    %0 = vector.load %arg1[%c0, %c0_0] : memref<32x96xf32, #tpu.memory_space<vmem>>, vector<32x96xf32>
    %c0_1 = arith.constant 0 : index
    %c0_2 = arith.constant 0 : index
    %1 = vector.load %arg5[%c0_1, %c0_2] : memref<32x96xf32, #tpu.memory_space<vmem>>, vector<32x96xf32>
    %c0_3 = arith.constant 0 : index
    %c0_4 = arith.constant 0 : index
    %2 = vector.load %arg3[%c0_3, %c0_4] : memref<32x96xf32, #tpu.memory_space<vmem>>, vector<32x96xf32>
    %c0_5 = arith.constant 0 : index
    %c0_6 = arith.constant 0 : index
    %3 = vector.load %arg7[%c0_5, %c0_6] : memref<32x96xf32, #tpu.memory_space<vmem>>, vector<32x96xf32>
    %c0_7 = arith.constant 0 : index
    %c0_8 = arith.constant 0 : index
    %4 = vector.load %arg6[%c0_7, %c0_8] : memref<1x96xf32, #tpu.memory_space<vmem>>, vector<1x96xf32>
    %5 = vector.shape_cast %4 : vector<1x96xf32> to vector<1x96xf32>
    %6 = vector.broadcast %5 : vector<1x96xf32> to vector<8x96xf32>
    %c0_9 = arith.constant 0 : index
    %c0_10 = arith.constant 0 : index
    %7 = vector.load %arg4[%c0_9, %c0_10] : memref<1x32xf32, #tpu.memory_space<vmem>>, vector<1x32xf32>
    %8 = vector.shape_cast %7 : vector<1x32xf32> to vector<1x32xf32>
    %9 = vector.broadcast %8 : vector<1x32xf32> to vector<8x32xf32>
    %c0_11 = arith.constant 0 : index
    %c0_12 = arith.constant 0 : index
    %10 = vector.load %arg8[%c0_11, %c0_12] : memref<1x32xf32, #tpu.memory_space<vmem>>, vector<1x32xf32>
    %11 = vector.shape_cast %10 : vector<1x32xf32> to vector<1x32xf32>
    %12 = vector.broadcast %11 : vector<1x32xf32> to vector<8x32xf32>
    %c0_13 = arith.constant 0 : index
    %c0_14 = arith.constant 0 : index
    %c0_15 = arith.constant 0 : index
    %13 = vector.load %arg0[%c0_13, %c0_14, %c0_15] : memref<8x8x32xf32, #tpu.memory_space<vmem>>, vector<8x8x32xf32>
    %14 = vector.shape_cast %13 : vector<8x8x32xf32> to vector<64x32xf32>
    %cst = arith.constant dense<0.000000e+00> : vector<64x96xf32>
    %15 = tpu.matmul %14, %0, %cst {dimension_numbers = #tpu.dot_dimension_numbers<[1], [0], [0], [1], [0, 0, 1, 1], [], []>} : vector<64x32xf32>, vector<32x96xf32>, vector<64x96xf32> -> vector<64x96xf32>
    %c0_16 = arith.constant 0 : index
    %c0_17 = arith.constant 0 : index
    %16 = vector.load %arg2[%c0_16, %c0_17] : memref<1x96xf32, #tpu.memory_space<vmem>>, vector<1x96xf32>
    %17 = vector.broadcast %16 : vector<1x96xf32> to vector<64x96xf32>
    %18 = arith.addf %15, %17 : vector<64x96xf32>
    %19 = vector.shape_cast %18 : vector<64x96xf32> to vector<8x8x96xf32>
    %c0_18 = arith.constant 0 : index
    %c0_19 = arith.constant 0 : index
    %c0_20 = arith.constant 0 : index
    %20 = vector.load %arg12[%c0_18, %c0_19, %c0_20] : memref<8x8x96xf32, #tpu.memory_space<vmem>>, vector<8x8x96xf32>
    tpu.vector_store %arg12[%c0_18, %c0_19, %c0_20], %19 {strides = array<i32>} : memref<8x8x96xf32, #tpu.memory_space<vmem>>, vector<8x8x96xf32>,
    %cst_21 = arith.constant 0.000000e+00 : f32
    %21 = vector.broadcast %cst_21 : f32 to vector<8x32xf32>
    %cst_22 = arith.constant 0.000000e+00 : f32
    %22 = vector.broadcast %cst_22 : f32 to vector<8x32xf32>
    %c0_23 = arith.constant 0 : index
    %c0_24 = arith.constant 0 : index
    %c0_25 = arith.constant 0 : index
    %23 = vector.load %arg12[%c0_23, %c0_24, %c0_25] : memref<8x8x96xf32, #tpu.memory_space<vmem>>, vector<8x1x96xf32>
    %24 = vector.shape_cast %23 : vector<8x1x96xf32> to vector<8x96xf32>
    %cst_26 = arith.constant dense<0.000000e+00> : vector<8x96xf32>
    %25 = tpu.matmul %21, %2, %cst_26 {dimension_numbers = #tpu.dot_dimension_numbers<[1], [0], [0], [1], [0, 0, 1, 1], [], []>} : vector<8x32xf32>, vector<32x96xf32>, vector<8x96xf32> -> vector<8x96xf32>
    %26 = vector.extract_strided_slice %24 {offsets = [0, 0], sizes = [8, 32], strides = [1, 1]} : vector<8x96xf32> to vector<8x32xf32>
    %27 = vector.extract_strided_slice %25 {offsets = [0, 0], sizes = [8, 32], strides = [1, 1]} : vector<8x96xf32> to vector<8x32xf32>
    %28 = arith.addf %26, %27 : vector<8x32xf32>
    %29 = arith.negf %28 : vector<8x32xf32>
    %30 = math.exp %29 : vector<8x32xf32>
    %cst_27 = arith.constant 1.000000e+00 : f32
    %31 = vector.broadcast %cst_27 : f32 to vector<8x32xf32>
    %32 = arith.addf %31, %30 : vector<8x32xf32>
    %33 = arith.divf %31, %32 : vector<8x32xf32>
    %34 = vector.extract_strided_slice %24 {offsets = [0, 32], sizes = [8, 32], strides = [1, 1]} : vector<8x96xf32> to vector<8x32xf32>
    %35 = vector.extract_strided_slice %25 {offsets = [0, 32], sizes = [8, 32], strides = [1, 1]} : vector<8x96xf32> to vector<8x32xf32>
    %36 = arith.addf %34, %35 : vector<8x32xf32>
    %37 = arith.negf %36 : vector<8x32xf32>
    %38 = math.exp %37 : vector<8x32xf32>
    %cst_28 = arith.constant 1.000000e+00 : f32
    %39 = vector.broadcast %cst_28 : f32 to vector<8x32xf32>
    %40 = arith.addf %39, %38 : vector<8x32xf32>
    %41 = arith.divf %39, %40 : vector<8x32xf32>
    %42 = vector.extract_strided_slice %24 {offsets = [0, 64], sizes = [8, 32], strides = [1, 1]} : vector<8x96xf32> to vector<8x32xf32>
    %43 = vector.extract_strided_slice %25 {offsets = [0, 64], sizes = [8, 32], strides = [1, 1]} : vector<8x96xf32> to vector<8x32xf32>
    %44 = arith.addf %43, %9 : vector<8x32xf32>
    %45 = arith.mulf %33, %44 : vector<8x32xf32>
    %46 = arith.addf %42, %45 : vector<8x32xf32>
    %47 = math.tanh %46 : vector<8x32xf32>
    %cst_29 = arith.constant 1.000000e+00 : f32
    %48 = vector.broadcast %cst_29 : f32 to vector<8x32xf32>
    %49 = arith.subf %48, %41 : vector<8x32xf32>
    %50 = arith.mulf %49, %47 : vector<8x32xf32>
    %51 = arith.mulf %41, %21 : vector<8x32xf32>
    %52 = arith.addf %50, %51 : vector<8x32xf32>
    %cst_30 = arith.constant dense<0.000000e+00> : vector<8x96xf32>
    %53 = tpu.matmul %52, %1, %cst_30 {dimension_numbers = #tpu.dot_dimension_numbers<[1], [0], [0], [1], [0, 0, 1, 1], [], []>} : vector<8x32xf32>, vector<32x96xf32>, vector<8x96xf32> -> vector<8x96xf32>
    %54 = arith.addf %53, %6 : vector<8x96xf32>
    %cst_31 = arith.constant dense<0.000000e+00> : vector<8x96xf32>
    %55 = tpu.matmul %22, %3, %cst_31 {dimension_numbers = #tpu.dot_dimension_numbers<[1], [0], [0], [1], [0, 0, 1, 1], [], []>} : vector<8x32xf32>, vector<32x96xf32>, vector<8x96xf32> -> vector<8x96xf32>
    %56 = vector.extract_strided_slice %54 {offsets = [0, 0], sizes = [8, 32], strides = [1, 1]} : vector<8x96xf32> to vector<8x32xf32>
    %57 = vector.extract_strided_slice %55 {offsets = [0, 0], sizes = [8, 32], strides = [1, 1]} : vector<8x96xf32> to vector<8x32xf32>
    %58 = arith.addf %56, %57 : vector<8x32xf32>
    %59 = arith.negf %58 : vector<8x32xf32>
    %60 = math.exp %59 : vector<8x32xf32>
    %cst_32 = arith.constant 1.000000e+00 : f32
    %61 = vector.broadcast %cst_32 : f32 to vector<8x32xf32>
    %62 = arith.addf %61, %60 : vector<8x32xf32>
    %63 = arith.divf %61, %62 : vector<8x32xf32>
    %64 = vector.extract_strided_slice %54 {offsets = [0, 32], sizes = [8, 32], strides = [1, 1]} : vector<8x96xf32> to vector<8x32xf32>
    %65 = vector.extract_strided_slice %55 {offsets = [0, 32], sizes = [8, 32], strides = [1, 1]} : vector<8x96xf32> to vector<8x32xf32>
    %66 = arith.addf %64, %65 : vector<8x32xf32>
    %67 = arith.negf %66 : vector<8x32xf32>
    %68 = math.exp %67 : vector<8x32xf32>
    %cst_33 = arith.constant 1.000000e+00 : f32
    %69 = vector.broadcast %cst_33 : f32 to vector<8x32xf32>
    %70 = arith.addf %69, %68 : vector<8x32xf32>
    %71 = arith.divf %69, %70 : vector<8x32xf32>
    %72 = vector.extract_strided_slice %54 {offsets = [0, 64], sizes = [8, 32], strides = [1, 1]} : vector<8x96xf32> to vector<8x32xf32>
    %73 = vector.extract_strided_slice %55 {offsets = [0, 64], sizes = [8, 32], strides = [1, 1]} : vector<8x96xf32> to vector<8x32xf32>
    %74 = arith.addf %73, %12 : vector<8x32xf32>
    %75 = arith.mulf %63, %74 : vector<8x32xf32>
    %76 = arith.addf %72, %75 : vector<8x32xf32>
    %77 = math.tanh %76 : vector<8x32xf32>
    %cst_34 = arith.constant 1.000000e+00 : f32
    %78 = vector.broadcast %cst_34 : f32 to vector<8x32xf32>
    %79 = arith.subf %78, %71 : vector<8x32xf32>
    %80 = arith.mulf %79, %77 : vector<8x32xf32>
    %81 = arith.mulf %71, %22 : vector<8x32xf32>
    %82 = arith.addf %80, %81 : vector<8x32xf32>
    %c0_35 = arith.constant 0 : index
    %c0_36 = arith.constant 0 : index
    %c0_37 = arith.constant 0 : index
    %83 = vector.load %arg13[%c0_35, %c0_36, %c0_37] : memref<8x8x32xf32, #tpu.memory_space<vmem>>, vector<8x1x32xf32>
    %84 = vector.shape_cast %83 : vector<8x1x32xf32> to vector<8x32xf32>
    %85 = vector.shape_cast %82 : vector<8x32xf32> to vector<8x1x32xf32>
    tpu.vector_store %arg13[%c0_35, %c0_36, %c0_37], %85 {strides = array<i32>} : memref<8x8x32xf32, #tpu.memory_space<vmem>>, vector<8x1x32xf32>,
    %c0_38 = arith.constant 0 : index
    %c1 = arith.constant 1 : index
    %c0_39 = arith.constant 0 : index
    %86 = vector.load %arg12[%c0_38, %c1, %c0_39] : memref<8x8x96xf32, #tpu.memory_space<vmem>>, vector<8x1x96xf32>
    %87 = vector.shape_cast %86 : vector<8x1x96xf32> to vector<8x96xf32>
    %cst_40 = arith.constant dense<0.000000e+00> : vector<8x96xf32>
    %88 = tpu.matmul %52, %2, %cst_40 {dimension_numbers = #tpu.dot_dimension_numbers<[1], [0], [0], [1], [0, 0, 1, 1], [], []>} : vector<8x32xf32>, vector<32x96xf32>, vector<8x96xf32> -> vector<8x96xf32>
    %89 = vector.extract_strided_slice %87 {offsets = [0, 0], sizes = [8, 32], strides = [1, 1]} : vector<8x96xf32> to vector<8x32xf32>
    %90 = vector.extract_strided_slice %88 {offsets = [0, 0], sizes = [8, 32], strides = [1, 1]} : vector<8x96xf32> to vector<8x32xf32>
    %91 = arith.addf %89, %90 : vector<8x32xf32>
    %92 = arith.negf %91 : vector<8x32xf32>
    %93 = math.exp %92 : vector<8x32xf32>
    %cst_41 = arith.constant 1.000000e+00 : f32
    %94 = vector.broadcast %cst_41 : f32 to vector<8x32xf32>
    %95 = arith.addf %94, %93 : vector<8x32xf32>
    %96 = arith.divf %94, %95 : vector<8x32xf32>
    %97 = vector.extract_strided_slice %87 {offsets = [0, 32], sizes = [8, 32], strides = [1, 1]} : vector<8x96xf32> to vector<8x32xf32>
    %98 = vector.extract_strided_slice %88 {offsets = [0, 32], sizes = [8, 32], strides = [1, 1]} : vector<8x96xf32> to vector<8x32xf32>
    %99 = arith.addf %97, %98 : vector<8x32xf32>
    %100 = arith.negf %99 : vector<8x32xf32>
    %101 = math.exp %100 : vector<8x32xf32>
    %cst_42 = arith.constant 1.000000e+00 : f32
    %102 = vector.broadcast %cst_42 : f32 to vector<8x32xf32>
    %103 = arith.addf %102, %101 : vector<8x32xf32>
    %104 = arith.divf %102, %103 : vector<8x32xf32>
    %105 = vector.extract_strided_slice %87 {offsets = [0, 64], sizes = [8, 32], strides = [1, 1]} : vector<8x96xf32> to vector<8x32xf32>
    %106 = vector.extract_strided_slice %88 {offsets = [0, 64], sizes = [8, 32], strides = [1, 1]} : vector<8x96xf32> to vector<8x32xf32>
    %107 = arith.addf %106, %9 : vector<8x32xf32>
    %108 = arith.mulf %96, %107 : vector<8x32xf32>
    %109 = arith.addf %105, %108 : vector<8x32xf32>
    %110 = math.tanh %109 : vector<8x32xf32>
    %cst_43 = arith.constant 1.000000e+00 : f32
    %111 = vector.broadcast %cst_43 : f32 to vector<8x32xf32>
    %112 = arith.subf %111, %104 : vector<8x32xf32>
    %113 = arith.mulf %112, %110 : vector<8x32xf32>
    %114 = arith.mulf %104, %52 : vector<8x32xf32>
    %115 = arith.addf %113, %114 : vector<8x32xf32>
    %cst_44 = arith.constant dense<0.000000e+00> : vector<8x96xf32>
    %116 = tpu.matmul %115, %1, %cst_44 {dimension_numbers = #tpu.dot_dimension_numbers<[1], [0], [0], [1], [0, 0, 1, 1], [], []>} : vector<8x32xf32>, vector<32x96xf32>, vector<8x96xf32> -> vector<8x96xf32>
    %117 = arith.addf %116, %6 : vector<8x96xf32>
    %cst_45 = arith.constant dense<0.000000e+00> : vector<8x96xf32>
    %118 = tpu.matmul %82, %3, %cst_45 {dimension_numbers = #tpu.dot_dimension_numbers<[1], [0], [0], [1], [0, 0, 1, 1], [], []>} : vector<8x32xf32>, vector<32x96xf32>, vector<8x96xf32> -> vector<8x96xf32>
    %119 = vector.extract_strided_slice %117 {offsets = [0, 0], sizes = [8, 32], strides = [1, 1]} : vector<8x96xf32> to vector<8x32xf32>
    %120 = vector.extract_strided_slice %118 {offsets = [0, 0], sizes = [8, 32], strides = [1, 1]} : vector<8x96xf32> to vector<8x32xf32>
    %121 = arith.addf %119, %120 : vector<8x32xf32>
    %122 = arith.negf %121 : vector<8x32xf32>
    %123 = math.exp %122 : vector<8x32xf32>
    %cst_46 = arith.constant 1.000000e+00 : f32
    %124 = vector.broadcast %cst_46 : f32 to vector<8x32xf32>
    %125 = arith.addf %124, %123 : vector<8x32xf32>
    %126 = arith.divf %124, %125 : vector<8x32xf32>
    %127 = vector.extract_strided_slice %117 {offsets = [0, 32], sizes = [8, 32], strides = [1, 1]} : vector<8x96xf32> to vector<8x32xf32>
    %128 = vector.extract_strided_slice %118 {offsets = [0, 32], sizes = [8, 32], strides = [1, 1]} : vector<8x96xf32> to vector<8x32xf32>
    %129 = arith.addf %127, %128 : vector<8x32xf32>
    %130 = arith.negf %129 : vector<8x32xf32>
    %131 = math.exp %130 : vector<8x32xf32>
    %cst_47 = arith.constant 1.000000e+00 : f32
    %132 = vector.broadcast %cst_47 : f32 to vector<8x32xf32>
    %133 = arith.addf %132, %131 : vector<8x32xf32>
    %134 = arith.divf %132, %133 : vector<8x32xf32>
    %135 = vector.extract_strided_slice %117 {offsets = [0, 64], sizes = [8, 32], strides = [1, 1]} : vector<8x96xf32> to vector<8x32xf32>
    %136 = vector.extract_strided_slice %118 {offsets = [0, 64], sizes = [8, 32], strides = [1, 1]} : vector<8x96xf32> to vector<8x32xf32>
    %137 = arith.addf %136, %12 : vector<8x32xf32>
    %138 = arith.mulf %126, %137 : vector<8x32xf32>
    %139 = arith.addf %135, %138 : vector<8x32xf32>
    %140 = math.tanh %139 : vector<8x32xf32>
    %cst_48 = arith.constant 1.000000e+00 : f32
    %141 = vector.broadcast %cst_48 : f32 to vector<8x32xf32>
    %142 = arith.subf %141, %134 : vector<8x32xf32>
    %143 = arith.mulf %142, %140 : vector<8x32xf32>
    %144 = arith.mulf %134, %82 : vector<8x32xf32>
    %145 = arith.addf %143, %144 : vector<8x32xf32>
    %c0_49 = arith.constant 0 : index
    %c1_50 = arith.constant 1 : index
    %c0_51 = arith.constant 0 : index
    %146 = vector.load %arg13[%c0_49, %c1_50, %c0_51] : memref<8x8x32xf32, #tpu.memory_space<vmem>>, vector<8x1x32xf32>
    %147 = vector.shape_cast %146 : vector<8x1x32xf32> to vector<8x32xf32>
    %148 = vector.shape_cast %145 : vector<8x32xf32> to vector<8x1x32xf32>
    tpu.vector_store %arg13[%c0_49, %c1_50, %c0_51], %148 {strides = array<i32>} : memref<8x8x32xf32, #tpu.memory_space<vmem>>, vector<8x1x32xf32>,
    %c0_52 = arith.constant 0 : index
    %c2 = arith.constant 2 : index
    %c0_53 = arith.constant 0 : index
    %149 = vector.load %arg12[%c0_52, %c2, %c0_53] : memref<8x8x96xf32, #tpu.memory_space<vmem>>, vector<8x1x96xf32>
    %150 = vector.shape_cast %149 : vector<8x1x96xf32> to vector<8x96xf32>
    %cst_54 = arith.constant dense<0.000000e+00> : vector<8x96xf32>
    %151 = tpu.matmul %115, %2, %cst_54 {dimension_numbers = #tpu.dot_dimension_numbers<[1], [0], [0], [1], [0, 0, 1, 1], [], []>} : vector<8x32xf32>, vector<32x96xf32>, vector<8x96xf32> -> vector<8x96xf32>
    %152 = vector.extract_strided_slice %150 {offsets = [0, 0], sizes = [8, 32], strides = [1, 1]} : vector<8x96xf32> to vector<8x32xf32>
    %153 = vector.extract_strided_slice %151 {offsets = [0, 0], sizes = [8, 32], strides = [1, 1]} : vector<8x96xf32> to vector<8x32xf32>
    %154 = arith.addf %152, %153 : vector<8x32xf32>
    %155 = arith.negf %154 : vector<8x32xf32>
    %156 = math.exp %155 : vector<8x32xf32>
    %cst_55 = arith.constant 1.000000e+00 : f32
    %157 = vector.broadcast %cst_55 : f32 to vector<8x32xf32>
    %158 = arith.addf %157, %156 : vector<8x32xf32>
    %159 = arith.divf %157, %158 : vector<8x32xf32>
    %160 = vector.extract_strided_slice %150 {offsets = [0, 32], sizes = [8, 32], strides = [1, 1]} : vector<8x96xf32> to vector<8x32xf32>
    %161 = vector.extract_strided_slice %151 {offsets = [0, 32], sizes = [8, 32], strides = [1, 1]} : vector<8x96xf32> to vector<8x32xf32>
    %162 = arith.addf %160, %161 : vector<8x32xf32>
    %163 = arith.negf %162 : vector<8x32xf32>
    %164 = math.exp %163 : vector<8x32xf32>
    %cst_56 = arith.constant 1.000000e+00 : f32
    %165 = vector.broadcast %cst_56 : f32 to vector<8x32xf32>
    %166 = arith.addf %165, %164 : vector<8x32xf32>
    %167 = arith.divf %165, %166 : vector<8x32xf32>
    %168 = vector.extract_strided_slice %150 {offsets = [0, 64], sizes = [8, 32], strides = [1, 1]} : vector<8x96xf32> to vector<8x32xf32>
    %169 = vector.extract_strided_slice %151 {offsets = [0, 64], sizes = [8, 32], strides = [1, 1]} : vector<8x96xf32> to vector<8x32xf32>
    %170 = arith.addf %169, %9 : vector<8x32xf32>
    %171 = arith.mulf %159, %170 : vector<8x32xf32>
    %172 = arith.addf %168, %171 : vector<8x32xf32>
    %173 = math.tanh %172 : vector<8x32xf32>
    %cst_57 = arith.constant 1.000000e+00 : f32
    %174 = vector.broadcast %cst_57 : f32 to vector<8x32xf32>
    %175 = arith.subf %174, %167 : vector<8x32xf32>
    %176 = arith.mulf %175, %173 : vector<8x32xf32>
    %177 = arith.mulf %167, %115 : vector<8x32xf32>
    %178 = arith.addf %176, %177 : vector<8x32xf32>
    %cst_58 = arith.constant dense<0.000000e+00> : vector<8x96xf32>
    %179 = tpu.matmul %178, %1, %cst_58 {dimension_numbers = #tpu.dot_dimension_numbers<[1], [0], [0], [1], [0, 0, 1, 1], [], []>} : vector<8x32xf32>, vector<32x96xf32>, vector<8x96xf32> -> vector<8x96xf32>
    %180 = arith.addf %179, %6 : vector<8x96xf32>
    %cst_59 = arith.constant dense<0.000000e+00> : vector<8x96xf32>
    %181 = tpu.matmul %145, %3, %cst_59 {dimension_numbers = #tpu.dot_dimension_numbers<[1], [0], [0], [1], [0, 0, 1, 1], [], []>} : vector<8x32xf32>, vector<32x96xf32>, vector<8x96xf32> -> vector<8x96xf32>
    %182 = vector.extract_strided_slice %180 {offsets = [0, 0], sizes = [8, 32], strides = [1, 1]} : vector<8x96xf32> to vector<8x32xf32>
    %183 = vector.extract_strided_slice %181 {offsets = [0, 0], sizes = [8, 32], strides = [1, 1]} : vector<8x96xf32> to vector<8x32xf32>
    %184 = arith.addf %182, %183 : vector<8x32xf32>
    %185 = arith.negf %184 : vector<8x32xf32>
    %186 = math.exp %185 : vector<8x32xf32>
    %cst_60 = arith.constant 1.000000e+00 : f32
    %187 = vector.broadcast %cst_60 : f32 to vector<8x32xf32>
    %188 = arith.addf %187, %186 : vector<8x32xf32>
    %189 = arith.divf %187, %188 : vector<8x32xf32>
    %190 = vector.extract_strided_slice %180 {offsets = [0, 32], sizes = [8, 32], strides = [1, 1]} : vector<8x96xf32> to vector<8x32xf32>
    %191 = vector.extract_strided_slice %181 {offsets = [0, 32], sizes = [8, 32], strides = [1, 1]} : vector<8x96xf32> to vector<8x32xf32>
    %192 = arith.addf %190, %191 : vector<8x32xf32>
    %193 = arith.negf %192 : vector<8x32xf32>
    %194 = math.exp %193 : vector<8x32xf32>
    %cst_61 = arith.constant 1.000000e+00 : f32
    %195 = vector.broadcast %cst_61 : f32 to vector<8x32xf32>
    %196 = arith.addf %195, %194 : vector<8x32xf32>
    %197 = arith.divf %195, %196 : vector<8x32xf32>
    %198 = vector.extract_strided_slice %180 {offsets = [0, 64], sizes = [8, 32], strides = [1, 1]} : vector<8x96xf32> to vector<8x32xf32>
    %199 = vector.extract_strided_slice %181 {offsets = [0, 64], sizes = [8, 32], strides = [1, 1]} : vector<8x96xf32> to vector<8x32xf32>
    %200 = arith.addf %199, %12 : vector<8x32xf32>
    %201 = arith.mulf %189, %200 : vector<8x32xf32>
    %202 = arith.addf %198, %201 : vector<8x32xf32>
    %203 = math.tanh %202 : vector<8x32xf32>
    %cst_62 = arith.constant 1.000000e+00 : f32
    %204 = vector.broadcast %cst_62 : f32 to vector<8x32xf32>
    %205 = arith.subf %204, %197 : vector<8x32xf32>
    %206 = arith.mulf %205, %203 : vector<8x32xf32>
    %207 = arith.mulf %197, %145 : vector<8x32xf32>
    %208 = arith.addf %206, %207 : vector<8x32xf32>
    %c0_63 = arith.constant 0 : index
    %c2_64 = arith.constant 2 : index
    %c0_65 = arith.constant 0 : index
    %209 = vector.load %arg13[%c0_63, %c2_64, %c0_65] : memref<8x8x32xf32, #tpu.memory_space<vmem>>, vector<8x1x32xf32>
    %210 = vector.shape_cast %209 : vector<8x1x32xf32> to vector<8x32xf32>
    %211 = vector.shape_cast %208 : vector<8x32xf32> to vector<8x1x32xf32>
    tpu.vector_store %arg13[%c0_63, %c2_64, %c0_65], %211 {strides = array<i32>} : memref<8x8x32xf32, #tpu.memory_space<vmem>>, vector<8x1x32xf32>,
    %c0_66 = arith.constant 0 : index
    %c3 = arith.constant 3 : index
    %c0_67 = arith.constant 0 : index
    %212 = vector.load %arg12[%c0_66, %c3, %c0_67] : memref<8x8x96xf32, #tpu.memory_space<vmem>>, vector<8x1x96xf32>
    %213 = vector.shape_cast %212 : vector<8x1x96xf32> to vector<8x96xf32>
    %cst_68 = arith.constant dense<0.000000e+00> : vector<8x96xf32>
    %214 = tpu.matmul %178, %2, %cst_68 {dimension_numbers = #tpu.dot_dimension_numbers<[1], [0], [0], [1], [0, 0, 1, 1], [], []>} : vector<8x32xf32>, vector<32x96xf32>, vector<8x96xf32> -> vector<8x96xf32>
    %215 = vector.extract_strided_slice %213 {offsets = [0, 0], sizes = [8, 32], strides = [1, 1]} : vector<8x96xf32> to vector<8x32xf32>
    %216 = vector.extract_strided_slice %214 {offsets = [0, 0], sizes = [8, 32], strides = [1, 1]} : vector<8x96xf32> to vector<8x32xf32>
    %217 = arith.addf %215, %216 : vector<8x32xf32>
    %218 = arith.negf %217 : vector<8x32xf32>
    %219 = math.exp %218 : vector<8x32xf32>
    %cst_69 = arith.constant 1.000000e+00 : f32
    %220 = vector.broadcast %cst_69 : f32 to vector<8x32xf32>
    %221 = arith.addf %220, %219 : vector<8x32xf32>
    %222 = arith.divf %220, %221 : vector<8x32xf32>
    %223 = vector.extract_strided_slice %213 {offsets = [0, 32], sizes = [8, 32], strides = [1, 1]} : vector<8x96xf32> to vector<8x32xf32>
    %224 = vector.extract_strided_slice %214 {offsets = [0, 32], sizes = [8, 32], strides = [1, 1]} : vector<8x96xf32> to vector<8x32xf32>
    %225 = arith.addf %223, %224 : vector<8x32xf32>
    %226 = arith.negf %225 : vector<8x32xf32>
    %227 = math.exp %226 : vector<8x32xf32>
    %cst_70 = arith.constant 1.000000e+00 : f32
    %228 = vector.broadcast %cst_70 : f32 to vector<8x32xf32>
    %229 = arith.addf %228, %227 : vector<8x32xf32>
    %230 = arith.divf %228, %229 : vector<8x32xf32>
    %231 = vector.extract_strided_slice %213 {offsets = [0, 64], sizes = [8, 32], strides = [1, 1]} : vector<8x96xf32> to vector<8x32xf32>
    %232 = vector.extract_strided_slice %214 {offsets = [0, 64], sizes = [8, 32], strides = [1, 1]} : vector<8x96xf32> to vector<8x32xf32>
    %233 = arith.addf %232, %9 : vector<8x32xf32>
    %234 = arith.mulf %222, %233 : vector<8x32xf32>
    %235 = arith.addf %231, %234 : vector<8x32xf32>
    %236 = math.tanh %235 : vector<8x32xf32>
    %cst_71 = arith.constant 1.000000e+00 : f32
    %237 = vector.broadcast %cst_71 : f32 to vector<8x32xf32>
    %238 = arith.subf %237, %230 : vector<8x32xf32>
    %239 = arith.mulf %238, %236 : vector<8x32xf32>
    %240 = arith.mulf %230, %178 : vector<8x32xf32>
    %241 = arith.addf %239, %240 : vector<8x32xf32>
    %cst_72 = arith.constant dense<0.000000e+00> : vector<8x96xf32>
    %242 = tpu.matmul %241, %1, %cst_72 {dimension_numbers = #tpu.dot_dimension_numbers<[1], [0], [0], [1], [0, 0, 1, 1], [], []>} : vector<8x32xf32>, vector<32x96xf32>, vector<8x96xf32> -> vector<8x96xf32>
    %243 = arith.addf %242, %6 : vector<8x96xf32>
    %cst_73 = arith.constant dense<0.000000e+00> : vector<8x96xf32>
    %244 = tpu.matmul %208, %3, %cst_73 {dimension_numbers = #tpu.dot_dimension_numbers<[1], [0], [0], [1], [0, 0, 1, 1], [], []>} : vector<8x32xf32>, vector<32x96xf32>, vector<8x96xf32> -> vector<8x96xf32>
    %245 = vector.extract_strided_slice %243 {offsets = [0, 0], sizes = [8, 32], strides = [1, 1]} : vector<8x96xf32> to vector<8x32xf32>
    %246 = vector.extract_strided_slice %244 {offsets = [0, 0], sizes = [8, 32], strides = [1, 1]} : vector<8x96xf32> to vector<8x32xf32>
    %247 = arith.addf %245, %246 : vector<8x32xf32>
    %248 = arith.negf %247 : vector<8x32xf32>
    %249 = math.exp %248 : vector<8x32xf32>
    %cst_74 = arith.constant 1.000000e+00 : f32
    %250 = vector.broadcast %cst_74 : f32 to vector<8x32xf32>
    %251 = arith.addf %250, %249 : vector<8x32xf32>
    %252 = arith.divf %250, %251 : vector<8x32xf32>
    %253 = vector.extract_strided_slice %243 {offsets = [0, 32], sizes = [8, 32], strides = [1, 1]} : vector<8x96xf32> to vector<8x32xf32>
    %254 = vector.extract_strided_slice %244 {offsets = [0, 32], sizes = [8, 32], strides = [1, 1]} : vector<8x96xf32> to vector<8x32xf32>
    %255 = arith.addf %253, %254 : vector<8x32xf32>
    %256 = arith.negf %255 : vector<8x32xf32>
    %257 = math.exp %256 : vector<8x32xf32>
    %cst_75 = arith.constant 1.000000e+00 : f32
    %258 = vector.broadcast %cst_75 : f32 to vector<8x32xf32>
    %259 = arith.addf %258, %257 : vector<8x32xf32>
    %260 = arith.divf %258, %259 : vector<8x32xf32>
    %261 = vector.extract_strided_slice %243 {offsets = [0, 64], sizes = [8, 32], strides = [1, 1]} : vector<8x96xf32> to vector<8x32xf32>
    %262 = vector.extract_strided_slice %244 {offsets = [0, 64], sizes = [8, 32], strides = [1, 1]} : vector<8x96xf32> to vector<8x32xf32>
    %263 = arith.addf %262, %12 : vector<8x32xf32>
    %264 = arith.mulf %252, %263 : vector<8x32xf32>
    %265 = arith.addf %261, %264 : vector<8x32xf32>
    %266 = math.tanh %265 : vector<8x32xf32>
    %cst_76 = arith.constant 1.000000e+00 : f32
    %267 = vector.broadcast %cst_76 : f32 to vector<8x32xf32>
    %268 = arith.subf %267, %260 : vector<8x32xf32>
    %269 = arith.mulf %268, %266 : vector<8x32xf32>
    %270 = arith.mulf %260, %208 : vector<8x32xf32>
    %271 = arith.addf %269, %270 : vector<8x32xf32>
    %c0_77 = arith.constant 0 : index
    %c3_78 = arith.constant 3 : index
    %c0_79 = arith.constant 0 : index
    %272 = vector.load %arg13[%c0_77, %c3_78, %c0_79] : memref<8x8x32xf32, #tpu.memory_space<vmem>>, vector<8x1x32xf32>
    %273 = vector.shape_cast %272 : vector<8x1x32xf32> to vector<8x32xf32>
    %274 = vector.shape_cast %271 : vector<8x32xf32> to vector<8x1x32xf32>
    tpu.vector_store %arg13[%c0_77, %c3_78, %c0_79], %274 {strides = array<i32>} : memref<8x8x32xf32, #tpu.memory_space<vmem>>, vector<8x1x32xf32>,
    %c0_80 = arith.constant 0 : index
    %c4 = arith.constant 4 : index
    %c0_81 = arith.constant 0 : index
    %275 = vector.load %arg12[%c0_80, %c4, %c0_81] : memref<8x8x96xf32, #tpu.memory_space<vmem>>, vector<8x1x96xf32>
    %276 = vector.shape_cast %275 : vector<8x1x96xf32> to vector<8x96xf32>
    %cst_82 = arith.constant dense<0.000000e+00> : vector<8x96xf32>
    %277 = tpu.matmul %241, %2, %cst_82 {dimension_numbers = #tpu.dot_dimension_numbers<[1], [0], [0], [1], [0, 0, 1, 1], [], []>} : vector<8x32xf32>, vector<32x96xf32>, vector<8x96xf32> -> vector<8x96xf32>
    %278 = vector.extract_strided_slice %276 {offsets = [0, 0], sizes = [8, 32], strides = [1, 1]} : vector<8x96xf32> to vector<8x32xf32>
    %279 = vector.extract_strided_slice %277 {offsets = [0, 0], sizes = [8, 32], strides = [1, 1]} : vector<8x96xf32> to vector<8x32xf32>
    %280 = arith.addf %278, %279 : vector<8x32xf32>
    %281 = arith.negf %280 : vector<8x32xf32>
    %282 = math.exp %281 : vector<8x32xf32>
    %cst_83 = arith.constant 1.000000e+00 : f32
    %283 = vector.broadcast %cst_83 : f32 to vector<8x32xf32>
    %284 = arith.addf %283, %282 : vector<8x32xf32>
    %285 = arith.divf %283, %284 : vector<8x32xf32>
    %286 = vector.extract_strided_slice %276 {offsets = [0, 32], sizes = [8, 32], strides = [1, 1]} : vector<8x96xf32> to vector<8x32xf32>
    %287 = vector.extract_strided_slice %277 {offsets = [0, 32], sizes = [8, 32], strides = [1, 1]} : vector<8x96xf32> to vector<8x32xf32>
    %288 = arith.addf %286, %287 : vector<8x32xf32>
    %289 = arith.negf %288 : vector<8x32xf32>
    %290 = math.exp %289 : vector<8x32xf32>
    %cst_84 = arith.constant 1.000000e+00 : f32
    %291 = vector.broadcast %cst_84 : f32 to vector<8x32xf32>
    %292 = arith.addf %291, %290 : vector<8x32xf32>
    %293 = arith.divf %291, %292 : vector<8x32xf32>
    %294 = vector.extract_strided_slice %276 {offsets = [0, 64], sizes = [8, 32], strides = [1, 1]} : vector<8x96xf32> to vector<8x32xf32>
    %295 = vector.extract_strided_slice %277 {offsets = [0, 64], sizes = [8, 32], strides = [1, 1]} : vector<8x96xf32> to vector<8x32xf32>
    %296 = arith.addf %295, %9 : vector<8x32xf32>
    %297 = arith.mulf %285, %296 : vector<8x32xf32>
    %298 = arith.addf %294, %297 : vector<8x32xf32>
    %299 = math.tanh %298 : vector<8x32xf32>
    %cst_85 = arith.constant 1.000000e+00 : f32
    %300 = vector.broadcast %cst_85 : f32 to vector<8x32xf32>
    %301 = arith.subf %300, %293 : vector<8x32xf32>
    %302 = arith.mulf %301, %299 : vector<8x32xf32>
    %303 = arith.mulf %293, %241 : vector<8x32xf32>
    %304 = arith.addf %302, %303 : vector<8x32xf32>
    %cst_86 = arith.constant dense<0.000000e+00> : vector<8x96xf32>
    %305 = tpu.matmul %304, %1, %cst_86 {dimension_numbers = #tpu.dot_dimension_numbers<[1], [0], [0], [1], [0, 0, 1, 1], [], []>} : vector<8x32xf32>, vector<32x96xf32>, vector<8x96xf32> -> vector<8x96xf32>
    %306 = arith.addf %305, %6 : vector<8x96xf32>
    %cst_87 = arith.constant dense<0.000000e+00> : vector<8x96xf32>
    %307 = tpu.matmul %271, %3, %cst_87 {dimension_numbers = #tpu.dot_dimension_numbers<[1], [0], [0], [1], [0, 0, 1, 1], [], []>} : vector<8x32xf32>, vector<32x96xf32>, vector<8x96xf32> -> vector<8x96xf32>
    %308 = vector.extract_strided_slice %306 {offsets = [0, 0], sizes = [8, 32], strides = [1, 1]} : vector<8x96xf32> to vector<8x32xf32>
    %309 = vector.extract_strided_slice %307 {offsets = [0, 0], sizes = [8, 32], strides = [1, 1]} : vector<8x96xf32> to vector<8x32xf32>
    %310 = arith.addf %308, %309 : vector<8x32xf32>
    %311 = arith.negf %310 : vector<8x32xf32>
    %312 = math.exp %311 : vector<8x32xf32>
    %cst_88 = arith.constant 1.000000e+00 : f32
    %313 = vector.broadcast %cst_88 : f32 to vector<8x32xf32>
    %314 = arith.addf %313, %312 : vector<8x32xf32>
    %315 = arith.divf %313, %314 : vector<8x32xf32>
    %316 = vector.extract_strided_slice %306 {offsets = [0, 32], sizes = [8, 32], strides = [1, 1]} : vector<8x96xf32> to vector<8x32xf32>
    %317 = vector.extract_strided_slice %307 {offsets = [0, 32], sizes = [8, 32], strides = [1, 1]} : vector<8x96xf32> to vector<8x32xf32>
    %318 = arith.addf %316, %317 : vector<8x32xf32>
    %319 = arith.negf %318 : vector<8x32xf32>
    %320 = math.exp %319 : vector<8x32xf32>
    %cst_89 = arith.constant 1.000000e+00 : f32
    %321 = vector.broadcast %cst_89 : f32 to vector<8x32xf32>
    %322 = arith.addf %321, %320 : vector<8x32xf32>
    %323 = arith.divf %321, %322 : vector<8x32xf32>
    %324 = vector.extract_strided_slice %306 {offsets = [0, 64], sizes = [8, 32], strides = [1, 1]} : vector<8x96xf32> to vector<8x32xf32>
    %325 = vector.extract_strided_slice %307 {offsets = [0, 64], sizes = [8, 32], strides = [1, 1]} : vector<8x96xf32> to vector<8x32xf32>
    %326 = arith.addf %325, %12 : vector<8x32xf32>
    %327 = arith.mulf %315, %326 : vector<8x32xf32>
    %328 = arith.addf %324, %327 : vector<8x32xf32>
    %329 = math.tanh %328 : vector<8x32xf32>
    %cst_90 = arith.constant 1.000000e+00 : f32
    %330 = vector.broadcast %cst_90 : f32 to vector<8x32xf32>
    %331 = arith.subf %330, %323 : vector<8x32xf32>
    %332 = arith.mulf %331, %329 : vector<8x32xf32>
    %333 = arith.mulf %323, %271 : vector<8x32xf32>
    %334 = arith.addf %332, %333 : vector<8x32xf32>
    %c0_91 = arith.constant 0 : index
    %c4_92 = arith.constant 4 : index
    %c0_93 = arith.constant 0 : index
    %335 = vector.load %arg13[%c0_91, %c4_92, %c0_93] : memref<8x8x32xf32, #tpu.memory_space<vmem>>, vector<8x1x32xf32>
    %336 = vector.shape_cast %335 : vector<8x1x32xf32> to vector<8x32xf32>
    %337 = vector.shape_cast %334 : vector<8x32xf32> to vector<8x1x32xf32>
    tpu.vector_store %arg13[%c0_91, %c4_92, %c0_93], %337 {strides = array<i32>} : memref<8x8x32xf32, #tpu.memory_space<vmem>>, vector<8x1x32xf32>,
    %c0_94 = arith.constant 0 : index
    %c5 = arith.constant 5 : index
    %c0_95 = arith.constant 0 : index
    %338 = vector.load %arg12[%c0_94, %c5, %c0_95] : memref<8x8x96xf32, #tpu.memory_space<vmem>>, vector<8x1x96xf32>
    %339 = vector.shape_cast %338 : vector<8x1x96xf32> to vector<8x96xf32>
    %cst_96 = arith.constant dense<0.000000e+00> : vector<8x96xf32>
    %340 = tpu.matmul %304, %2, %cst_96 {dimension_numbers = #tpu.dot_dimension_numbers<[1], [0], [0], [1], [0, 0, 1, 1], [], []>} : vector<8x32xf32>, vector<32x96xf32>, vector<8x96xf32> -> vector<8x96xf32>
    %341 = vector.extract_strided_slice %339 {offsets = [0, 0], sizes = [8, 32], strides = [1, 1]} : vector<8x96xf32> to vector<8x32xf32>
    %342 = vector.extract_strided_slice %340 {offsets = [0, 0], sizes = [8, 32], strides = [1, 1]} : vector<8x96xf32> to vector<8x32xf32>
    %343 = arith.addf %341, %342 : vector<8x32xf32>
    %344 = arith.negf %343 : vector<8x32xf32>
    %345 = math.exp %344 : vector<8x32xf32>
    %cst_97 = arith.constant 1.000000e+00 : f32
    %346 = vector.broadcast %cst_97 : f32 to vector<8x32xf32>
    %347 = arith.addf %346, %345 : vector<8x32xf32>
    %348 = arith.divf %346, %347 : vector<8x32xf32>
    %349 = vector.extract_strided_slice %339 {offsets = [0, 32], sizes = [8, 32], strides = [1, 1]} : vector<8x96xf32> to vector<8x32xf32>
    %350 = vector.extract_strided_slice %340 {offsets = [0, 32], sizes = [8, 32], strides = [1, 1]} : vector<8x96xf32> to vector<8x32xf32>
    %351 = arith.addf %349, %350 : vector<8x32xf32>
    %352 = arith.negf %351 : vector<8x32xf32>
    %353 = math.exp %352 : vector<8x32xf32>
    %cst_98 = arith.constant 1.000000e+00 : f32
    %354 = vector.broadcast %cst_98 : f32 to vector<8x32xf32>
    %355 = arith.addf %354, %353 : vector<8x32xf32>
    %356 = arith.divf %354, %355 : vector<8x32xf32>
    %357 = vector.extract_strided_slice %339 {offsets = [0, 64], sizes = [8, 32], strides = [1, 1]} : vector<8x96xf32> to vector<8x32xf32>
    %358 = vector.extract_strided_slice %340 {offsets = [0, 64], sizes = [8, 32], strides = [1, 1]} : vector<8x96xf32> to vector<8x32xf32>
    %359 = arith.addf %358, %9 : vector<8x32xf32>
    %360 = arith.mulf %348, %359 : vector<8x32xf32>
    %361 = arith.addf %357, %360 : vector<8x32xf32>
    %362 = math.tanh %361 : vector<8x32xf32>
    %cst_99 = arith.constant 1.000000e+00 : f32
    %363 = vector.broadcast %cst_99 : f32 to vector<8x32xf32>
    %364 = arith.subf %363, %356 : vector<8x32xf32>
    %365 = arith.mulf %364, %362 : vector<8x32xf32>
    %366 = arith.mulf %356, %304 : vector<8x32xf32>
    %367 = arith.addf %365, %366 : vector<8x32xf32>
    %cst_100 = arith.constant dense<0.000000e+00> : vector<8x96xf32>
    %368 = tpu.matmul %367, %1, %cst_100 {dimension_numbers = #tpu.dot_dimension_numbers<[1], [0], [0], [1], [0, 0, 1, 1], [], []>} : vector<8x32xf32>, vector<32x96xf32>, vector<8x96xf32> -> vector<8x96xf32>
    %369 = arith.addf %368, %6 : vector<8x96xf32>
    %cst_101 = arith.constant dense<0.000000e+00> : vector<8x96xf32>
    %370 = tpu.matmul %334, %3, %cst_101 {dimension_numbers = #tpu.dot_dimension_numbers<[1], [0], [0], [1], [0, 0, 1, 1], [], []>} : vector<8x32xf32>, vector<32x96xf32>, vector<8x96xf32> -> vector<8x96xf32>
    %371 = vector.extract_strided_slice %369 {offsets = [0, 0], sizes = [8, 32], strides = [1, 1]} : vector<8x96xf32> to vector<8x32xf32>
    %372 = vector.extract_strided_slice %370 {offsets = [0, 0], sizes = [8, 32], strides = [1, 1]} : vector<8x96xf32> to vector<8x32xf32>
    %373 = arith.addf %371, %372 : vector<8x32xf32>
    %374 = arith.negf %373 : vector<8x32xf32>
    %375 = math.exp %374 : vector<8x32xf32>
    %cst_102 = arith.constant 1.000000e+00 : f32
    %376 = vector.broadcast %cst_102 : f32 to vector<8x32xf32>
    %377 = arith.addf %376, %375 : vector<8x32xf32>
    %378 = arith.divf %376, %377 : vector<8x32xf32>
    %379 = vector.extract_strided_slice %369 {offsets = [0, 32], sizes = [8, 32], strides = [1, 1]} : vector<8x96xf32> to vector<8x32xf32>
    %380 = vector.extract_strided_slice %370 {offsets = [0, 32], sizes = [8, 32], strides = [1, 1]} : vector<8x96xf32> to vector<8x32xf32>
    %381 = arith.addf %379, %380 : vector<8x32xf32>
    %382 = arith.negf %381 : vector<8x32xf32>
    %383 = math.exp %382 : vector<8x32xf32>
    %cst_103 = arith.constant 1.000000e+00 : f32
    %384 = vector.broadcast %cst_103 : f32 to vector<8x32xf32>
    %385 = arith.addf %384, %383 : vector<8x32xf32>
    %386 = arith.divf %384, %385 : vector<8x32xf32>
    %387 = vector.extract_strided_slice %369 {offsets = [0, 64], sizes = [8, 32], strides = [1, 1]} : vector<8x96xf32> to vector<8x32xf32>
    %388 = vector.extract_strided_slice %370 {offsets = [0, 64], sizes = [8, 32], strides = [1, 1]} : vector<8x96xf32> to vector<8x32xf32>
    %389 = arith.addf %388, %12 : vector<8x32xf32>
    %390 = arith.mulf %378, %389 : vector<8x32xf32>
    %391 = arith.addf %387, %390 : vector<8x32xf32>
    %392 = math.tanh %391 : vector<8x32xf32>
    %cst_104 = arith.constant 1.000000e+00 : f32
    %393 = vector.broadcast %cst_104 : f32 to vector<8x32xf32>
    %394 = arith.subf %393, %386 : vector<8x32xf32>
    %395 = arith.mulf %394, %392 : vector<8x32xf32>
    %396 = arith.mulf %386, %334 : vector<8x32xf32>
    %397 = arith.addf %395, %396 : vector<8x32xf32>
    %c0_105 = arith.constant 0 : index
    %c5_106 = arith.constant 5 : index
    %c0_107 = arith.constant 0 : index
    %398 = vector.load %arg13[%c0_105, %c5_106, %c0_107] : memref<8x8x32xf32, #tpu.memory_space<vmem>>, vector<8x1x32xf32>
    %399 = vector.shape_cast %398 : vector<8x1x32xf32> to vector<8x32xf32>
    %400 = vector.shape_cast %397 : vector<8x32xf32> to vector<8x1x32xf32>
    tpu.vector_store %arg13[%c0_105, %c5_106, %c0_107], %400 {strides = array<i32>} : memref<8x8x32xf32, #tpu.memory_space<vmem>>, vector<8x1x32xf32>,
    %c0_108 = arith.constant 0 : index
    %c6 = arith.constant 6 : index
    %c0_109 = arith.constant 0 : index
    %401 = vector.load %arg12[%c0_108, %c6, %c0_109] : memref<8x8x96xf32, #tpu.memory_space<vmem>>, vector<8x1x96xf32>
    %402 = vector.shape_cast %401 : vector<8x1x96xf32> to vector<8x96xf32>
    %cst_110 = arith.constant dense<0.000000e+00> : vector<8x96xf32>
    %403 = tpu.matmul %367, %2, %cst_110 {dimension_numbers = #tpu.dot_dimension_numbers<[1], [0], [0], [1], [0, 0, 1, 1], [], []>} : vector<8x32xf32>, vector<32x96xf32>, vector<8x96xf32> -> vector<8x96xf32>
    %404 = vector.extract_strided_slice %402 {offsets = [0, 0], sizes = [8, 32], strides = [1, 1]} : vector<8x96xf32> to vector<8x32xf32>
    %405 = vector.extract_strided_slice %403 {offsets = [0, 0], sizes = [8, 32], strides = [1, 1]} : vector<8x96xf32> to vector<8x32xf32>
    %406 = arith.addf %404, %405 : vector<8x32xf32>
    %407 = arith.negf %406 : vector<8x32xf32>
    %408 = math.exp %407 : vector<8x32xf32>
    %cst_111 = arith.constant 1.000000e+00 : f32
    %409 = vector.broadcast %cst_111 : f32 to vector<8x32xf32>
    %410 = arith.addf %409, %408 : vector<8x32xf32>
    %411 = arith.divf %409, %410 : vector<8x32xf32>
    %412 = vector.extract_strided_slice %402 {offsets = [0, 32], sizes = [8, 32], strides = [1, 1]} : vector<8x96xf32> to vector<8x32xf32>
    %413 = vector.extract_strided_slice %403 {offsets = [0, 32], sizes = [8, 32], strides = [1, 1]} : vector<8x96xf32> to vector<8x32xf32>
    %414 = arith.addf %412, %413 : vector<8x32xf32>
    %415 = arith.negf %414 : vector<8x32xf32>
    %416 = math.exp %415 : vector<8x32xf32>
    %cst_112 = arith.constant 1.000000e+00 : f32
    %417 = vector.broadcast %cst_112 : f32 to vector<8x32xf32>
    %418 = arith.addf %417, %416 : vector<8x32xf32>
    %419 = arith.divf %417, %418 : vector<8x32xf32>
    %420 = vector.extract_strided_slice %402 {offsets = [0, 64], sizes = [8, 32], strides = [1, 1]} : vector<8x96xf32> to vector<8x32xf32>
    %421 = vector.extract_strided_slice %403 {offsets = [0, 64], sizes = [8, 32], strides = [1, 1]} : vector<8x96xf32> to vector<8x32xf32>
    %422 = arith.addf %421, %9 : vector<8x32xf32>
    %423 = arith.mulf %411, %422 : vector<8x32xf32>
    %424 = arith.addf %420, %423 : vector<8x32xf32>
    %425 = math.tanh %424 : vector<8x32xf32>
    %cst_113 = arith.constant 1.000000e+00 : f32
    %426 = vector.broadcast %cst_113 : f32 to vector<8x32xf32>
    %427 = arith.subf %426, %419 : vector<8x32xf32>
    %428 = arith.mulf %427, %425 : vector<8x32xf32>
    %429 = arith.mulf %419, %367 : vector<8x32xf32>
    %430 = arith.addf %428, %429 : vector<8x32xf32>
    %cst_114 = arith.constant dense<0.000000e+00> : vector<8x96xf32>
    %431 = tpu.matmul %430, %1, %cst_114 {dimension_numbers = #tpu.dot_dimension_numbers<[1], [0], [0], [1], [0, 0, 1, 1], [], []>} : vector<8x32xf32>, vector<32x96xf32>, vector<8x96xf32> -> vector<8x96xf32>
    %432 = arith.addf %431, %6 : vector<8x96xf32>
    %cst_115 = arith.constant dense<0.000000e+00> : vector<8x96xf32>
    %433 = tpu.matmul %397, %3, %cst_115 {dimension_numbers = #tpu.dot_dimension_numbers<[1], [0], [0], [1], [0, 0, 1, 1], [], []>} : vector<8x32xf32>, vector<32x96xf32>, vector<8x96xf32> -> vector<8x96xf32>
    %434 = vector.extract_strided_slice %432 {offsets = [0, 0], sizes = [8, 32], strides = [1, 1]} : vector<8x96xf32> to vector<8x32xf32>
    %435 = vector.extract_strided_slice %433 {offsets = [0, 0], sizes = [8, 32], strides = [1, 1]} : vector<8x96xf32> to vector<8x32xf32>
    %436 = arith.addf %434, %435 : vector<8x32xf32>
    %437 = arith.negf %436 : vector<8x32xf32>
    %438 = math.exp %437 : vector<8x32xf32>
    %cst_116 = arith.constant 1.000000e+00 : f32
    %439 = vector.broadcast %cst_116 : f32 to vector<8x32xf32>
    %440 = arith.addf %439, %438 : vector<8x32xf32>
    %441 = arith.divf %439, %440 : vector<8x32xf32>
    %442 = vector.extract_strided_slice %432 {offsets = [0, 32], sizes = [8, 32], strides = [1, 1]} : vector<8x96xf32> to vector<8x32xf32>
    %443 = vector.extract_strided_slice %433 {offsets = [0, 32], sizes = [8, 32], strides = [1, 1]} : vector<8x96xf32> to vector<8x32xf32>
    %444 = arith.addf %442, %443 : vector<8x32xf32>
    %445 = arith.negf %444 : vector<8x32xf32>
    %446 = math.exp %445 : vector<8x32xf32>
    %cst_117 = arith.constant 1.000000e+00 : f32
    %447 = vector.broadcast %cst_117 : f32 to vector<8x32xf32>
    %448 = arith.addf %447, %446 : vector<8x32xf32>
    %449 = arith.divf %447, %448 : vector<8x32xf32>
    %450 = vector.extract_strided_slice %432 {offsets = [0, 64], sizes = [8, 32], strides = [1, 1]} : vector<8x96xf32> to vector<8x32xf32>
    %451 = vector.extract_strided_slice %433 {offsets = [0, 64], sizes = [8, 32], strides = [1, 1]} : vector<8x96xf32> to vector<8x32xf32>
    %452 = arith.addf %451, %12 : vector<8x32xf32>
    %453 = arith.mulf %441, %452 : vector<8x32xf32>
    %454 = arith.addf %450, %453 : vector<8x32xf32>
    %455 = math.tanh %454 : vector<8x32xf32>
    %cst_118 = arith.constant 1.000000e+00 : f32
    %456 = vector.broadcast %cst_118 : f32 to vector<8x32xf32>
    %457 = arith.subf %456, %449 : vector<8x32xf32>
    %458 = arith.mulf %457, %455 : vector<8x32xf32>
    %459 = arith.mulf %449, %397 : vector<8x32xf32>
    %460 = arith.addf %458, %459 : vector<8x32xf32>
    %c0_119 = arith.constant 0 : index
    %c6_120 = arith.constant 6 : index
    %c0_121 = arith.constant 0 : index
    %461 = vector.load %arg13[%c0_119, %c6_120, %c0_121] : memref<8x8x32xf32, #tpu.memory_space<vmem>>, vector<8x1x32xf32>
    %462 = vector.shape_cast %461 : vector<8x1x32xf32> to vector<8x32xf32>
    %463 = vector.shape_cast %460 : vector<8x32xf32> to vector<8x1x32xf32>
    tpu.vector_store %arg13[%c0_119, %c6_120, %c0_121], %463 {strides = array<i32>} : memref<8x8x32xf32, #tpu.memory_space<vmem>>, vector<8x1x32xf32>,
    %c0_122 = arith.constant 0 : index
    %c7 = arith.constant 7 : index
    %c0_123 = arith.constant 0 : index
    %464 = vector.load %arg12[%c0_122, %c7, %c0_123] : memref<8x8x96xf32, #tpu.memory_space<vmem>>, vector<8x1x96xf32>
    %465 = vector.shape_cast %464 : vector<8x1x96xf32> to vector<8x96xf32>
    %cst_124 = arith.constant dense<0.000000e+00> : vector<8x96xf32>
    %466 = tpu.matmul %430, %2, %cst_124 {dimension_numbers = #tpu.dot_dimension_numbers<[1], [0], [0], [1], [0, 0, 1, 1], [], []>} : vector<8x32xf32>, vector<32x96xf32>, vector<8x96xf32> -> vector<8x96xf32>
    %467 = vector.extract_strided_slice %465 {offsets = [0, 0], sizes = [8, 32], strides = [1, 1]} : vector<8x96xf32> to vector<8x32xf32>
    %468 = vector.extract_strided_slice %466 {offsets = [0, 0], sizes = [8, 32], strides = [1, 1]} : vector<8x96xf32> to vector<8x32xf32>
    %469 = arith.addf %467, %468 : vector<8x32xf32>
    %470 = arith.negf %469 : vector<8x32xf32>
    %471 = math.exp %470 : vector<8x32xf32>
    %cst_125 = arith.constant 1.000000e+00 : f32
    %472 = vector.broadcast %cst_125 : f32 to vector<8x32xf32>
    %473 = arith.addf %472, %471 : vector<8x32xf32>
    %474 = arith.divf %472, %473 : vector<8x32xf32>
    %475 = vector.extract_strided_slice %465 {offsets = [0, 32], sizes = [8, 32], strides = [1, 1]} : vector<8x96xf32> to vector<8x32xf32>
    %476 = vector.extract_strided_slice %466 {offsets = [0, 32], sizes = [8, 32], strides = [1, 1]} : vector<8x96xf32> to vector<8x32xf32>
    %477 = arith.addf %475, %476 : vector<8x32xf32>
    %478 = arith.negf %477 : vector<8x32xf32>
    %479 = math.exp %478 : vector<8x32xf32>
    %cst_126 = arith.constant 1.000000e+00 : f32
    %480 = vector.broadcast %cst_126 : f32 to vector<8x32xf32>
    %481 = arith.addf %480, %479 : vector<8x32xf32>
    %482 = arith.divf %480, %481 : vector<8x32xf32>
    %483 = vector.extract_strided_slice %465 {offsets = [0, 64], sizes = [8, 32], strides = [1, 1]} : vector<8x96xf32> to vector<8x32xf32>
    %484 = vector.extract_strided_slice %466 {offsets = [0, 64], sizes = [8, 32], strides = [1, 1]} : vector<8x96xf32> to vector<8x32xf32>
    %485 = arith.addf %484, %9 : vector<8x32xf32>
    %486 = arith.mulf %474, %485 : vector<8x32xf32>
    %487 = arith.addf %483, %486 : vector<8x32xf32>
    %488 = math.tanh %487 : vector<8x32xf32>
    %cst_127 = arith.constant 1.000000e+00 : f32
    %489 = vector.broadcast %cst_127 : f32 to vector<8x32xf32>
    %490 = arith.subf %489, %482 : vector<8x32xf32>
    %491 = arith.mulf %490, %488 : vector<8x32xf32>
    %492 = arith.mulf %482, %430 : vector<8x32xf32>
    %493 = arith.addf %491, %492 : vector<8x32xf32>
    %cst_128 = arith.constant dense<0.000000e+00> : vector<8x96xf32>
    %494 = tpu.matmul %493, %1, %cst_128 {dimension_numbers = #tpu.dot_dimension_numbers<[1], [0], [0], [1], [0, 0, 1, 1], [], []>} : vector<8x32xf32>, vector<32x96xf32>, vector<8x96xf32> -> vector<8x96xf32>
    %495 = arith.addf %494, %6 : vector<8x96xf32>
    %cst_129 = arith.constant dense<0.000000e+00> : vector<8x96xf32>
    %496 = tpu.matmul %460, %3, %cst_129 {dimension_numbers = #tpu.dot_dimension_numbers<[1], [0], [0], [1], [0, 0, 1, 1], [], []>} : vector<8x32xf32>, vector<32x96xf32>, vector<8x96xf32> -> vector<8x96xf32>
    %497 = vector.extract_strided_slice %495 {offsets = [0, 0], sizes = [8, 32], strides = [1, 1]} : vector<8x96xf32> to vector<8x32xf32>
    %498 = vector.extract_strided_slice %496 {offsets = [0, 0], sizes = [8, 32], strides = [1, 1]} : vector<8x96xf32> to vector<8x32xf32>
    %499 = arith.addf %497, %498 : vector<8x32xf32>
    %500 = arith.negf %499 : vector<8x32xf32>
    %501 = math.exp %500 : vector<8x32xf32>
    %cst_130 = arith.constant 1.000000e+00 : f32
    %502 = vector.broadcast %cst_130 : f32 to vector<8x32xf32>
    %503 = arith.addf %502, %501 : vector<8x32xf32>
    %504 = arith.divf %502, %503 : vector<8x32xf32>
    %505 = vector.extract_strided_slice %495 {offsets = [0, 32], sizes = [8, 32], strides = [1, 1]} : vector<8x96xf32> to vector<8x32xf32>
    %506 = vector.extract_strided_slice %496 {offsets = [0, 32], sizes = [8, 32], strides = [1, 1]} : vector<8x96xf32> to vector<8x32xf32>
    %507 = arith.addf %505, %506 : vector<8x32xf32>
    %508 = arith.negf %507 : vector<8x32xf32>
    %509 = math.exp %508 : vector<8x32xf32>
    %cst_131 = arith.constant 1.000000e+00 : f32
    %510 = vector.broadcast %cst_131 : f32 to vector<8x32xf32>
    %511 = arith.addf %510, %509 : vector<8x32xf32>
    %512 = arith.divf %510, %511 : vector<8x32xf32>
    %513 = vector.extract_strided_slice %495 {offsets = [0, 64], sizes = [8, 32], strides = [1, 1]} : vector<8x96xf32> to vector<8x32xf32>
    %514 = vector.extract_strided_slice %496 {offsets = [0, 64], sizes = [8, 32], strides = [1, 1]} : vector<8x96xf32> to vector<8x32xf32>
    %515 = arith.addf %514, %12 : vector<8x32xf32>
    %516 = arith.mulf %504, %515 : vector<8x32xf32>
    %517 = arith.addf %513, %516 : vector<8x32xf32>
    %518 = math.tanh %517 : vector<8x32xf32>
    %cst_132 = arith.constant 1.000000e+00 : f32
    %519 = vector.broadcast %cst_132 : f32 to vector<8x32xf32>
    %520 = arith.subf %519, %512 : vector<8x32xf32>
    %521 = arith.mulf %520, %518 : vector<8x32xf32>
    %522 = arith.mulf %512, %460 : vector<8x32xf32>
    %523 = arith.addf %521, %522 : vector<8x32xf32>
    %c0_133 = arith.constant 0 : index
    %c7_134 = arith.constant 7 : index
    %c0_135 = arith.constant 0 : index
    %524 = vector.load %arg13[%c0_133, %c7_134, %c0_135] : memref<8x8x32xf32, #tpu.memory_space<vmem>>, vector<8x1x32xf32>
    %525 = vector.shape_cast %524 : vector<8x1x32xf32> to vector<8x32xf32>
    %526 = vector.shape_cast %523 : vector<8x32xf32> to vector<8x1x32xf32>
    tpu.vector_store %arg13[%c0_133, %c7_134, %c0_135], %526 {strides = array<i32>} : memref<8x8x32xf32, #tpu.memory_space<vmem>>, vector<8x1x32xf32>,
    %c0_136 = arith.constant 0 : index
    %c0_137 = arith.constant 0 : index
    %c0_138 = arith.constant 0 : index
    %527 = vector.load %arg13[%c0_136, %c0_137, %c0_138] : memref<8x8x32xf32, #tpu.memory_space<vmem>>, vector<8x8x32xf32>
    %528 = vector.shape_cast %527 : vector<8x8x32xf32> to vector<64x32xf32>
    %c0_139 = arith.constant 0 : index
    %c0_140 = arith.constant 0 : index
    %529 = vector.load %arg9[%c0_139, %c0_140] : memref<32x32xf32, #tpu.memory_space<vmem>>, vector<32x32xf32>
    %cst_141 = arith.constant dense<0.000000e+00> : vector<64x32xf32>
    %530 = tpu.matmul %528, %529, %cst_141 {dimension_numbers = #tpu.dot_dimension_numbers<[1], [0], [0], [1], [0, 0, 1, 1], [], []>} : vector<64x32xf32>, vector<32x32xf32>, vector<64x32xf32> -> vector<64x32xf32>
    %c0_142 = arith.constant 0 : index
    %c0_143 = arith.constant 0 : index
    %531 = vector.load %arg10[%c0_142, %c0_143] : memref<1x32xf32, #tpu.memory_space<vmem>>, vector<1x32xf32>
    %532 = vector.broadcast %531 : vector<1x32xf32> to vector<64x32xf32>
    %533 = arith.addf %530, %532 : vector<64x32xf32>
    %534 = arith.negf %533 : vector<64x32xf32>
    %535 = math.exp %534 : vector<64x32xf32>
    %cst_144 = arith.constant 1.000000e+00 : f32
    %536 = vector.broadcast %cst_144 : f32 to vector<64x32xf32>
    %537 = arith.addf %536, %535 : vector<64x32xf32>
    %538 = arith.divf %536, %537 : vector<64x32xf32>
    %539 = vector.shape_cast %538 : vector<64x32xf32> to vector<8x8x32xf32>
    %c0_145 = arith.constant 0 : index
    %c0_146 = arith.constant 0 : index
    %c0_147 = arith.constant 0 : index
    %540 = vector.load %arg11[%c0_145, %c0_146, %c0_147] : memref<8x8x32xf32, #tpu.memory_space<vmem>>, vector<8x8x32xf32>
    tpu.vector_store %arg11[%c0_145, %c0_146, %c0_147], %539 {strides = array<i32>} : memref<8x8x32xf32, #tpu.memory_space<vmem>>, vector<8x8x32xf32>,
    return
  }
}

</mosaic_0001>

<llo_original>
// kernel: discriminator_forward.1
$region0: #{discriminator_forward.1}
  #allocation0 [shape = 'u32[]', space=smem, size = 0x4, offset = 0x4, fixed_abs, tag = 'smem constant byte address 0x4 - core index']
  #allocation1 [shape = 'u32[144,128]{1,0:T(1,128)}', space=vmem, size = 0x12000, scoped, tag = 'internal scratch']
  #allocation2 [shape = 'f32[8,8,96]{2,1,0:T(8,128)}', space=vmem, size = 0x8000, scoped, tag = 'scratch operand']
  #allocation3 [shape = 'f32[8,8,32]{2,1,0:T(8,128)}', space=vmem, size = 0x8000, scoped, tag = 'scratch operand']
  %s0 = inlined_call_operand.hbm [shape: f32[8,8,32], index: 0, kind: input, shape index: {}]
  %s1 = inlined_call_operand.hbm [shape: f32[32,96], index: 1, kind: input, shape index: {}]
  %s2 = inlined_call_operand.vmem [shape: f32[1,96], index: 2, kind: input, shape index: {}]
  %s3 = inlined_call_operand.hbm [shape: f32[32,96], index: 3, kind: input, shape index: {}]
  %s4 = inlined_call_operand.vmem [shape: f32[1,32], index: 4, kind: input, shape index: {}]
  %s5 = inlined_call_operand.hbm [shape: f32[32,96], index: 5, kind: input, shape index: {}]
  %s6 = inlined_call_operand.vmem [shape: f32[1,96], index: 6, kind: input, shape index: {}]
  %s7 = inlined_call_operand.hbm [shape: f32[32,96], index: 7, kind: input, shape index: {}]
  %s8 = inlined_call_operand.vmem [shape: f32[1,32], index: 8, kind: input, shape index: {}]
  %s9 = inlined_call_operand.hbm [shape: f32[32,32], index: 9, kind: input, shape index: {}]
  %s10 = inlined_call_operand.hbm [shape: f32[1,32], index: 10, kind: input, shape index: {}]
  %s11 = inlined_call_operand.hbm [shape: f32[8,8,32], index: 11, kind: output, shape index: {}]
  %s12 = sld [smem:[#allocation0]]
  $region82: #{discriminator_forward.1} parent=0
    _
  %s14 = ssub.s32 1, %s12
  %s15 = scalar_select 0, %s14, %s12
  $region1: #{discriminator_forward.1} parent=0
    #allocation4 [shape = 'u8[32768]{0}', space=vmem, size = 0x8000, scoped, tag = 'input window, operand 0, single buffered']
    #allocation5 [shape = 's32[1]{0}', space=sflag, size = 0x4, scoped, tag = 'scoped memory for discriminator_forward.1']
    #allocation6 [shape = 's32[1]{0}', space=sflag, size = 0x4, scoped, tag = 'scoped memory for discriminator_forward.1']
    #allocation7 [shape = 'u8[16384]{0}', space=vmem, size = 0x4000, scoped, tag = 'input window, operand 1, single buffered']
    #allocation8 [shape = 's32[1]{0}', space=sflag, size = 0x4, scoped, tag = 'scoped memory for discriminator_forward.1']
    #allocation9 [shape = 'u8[16384]{0}', space=vmem, size = 0x4000, scoped, tag = 'input window, operand 3, single buffered']
    #allocation10 [shape = 'u8[16384]{0}', space=vmem, size = 0x4000, scoped, tag = 'input window, operand 5, single buffered']
    #allocation11 [shape = 's32[1]{0}', space=sflag, size = 0x4, scoped, tag = 'scoped memory for discriminator_forward.1']
    #allocation12 [shape = 'u8[16384]{0}', space=vmem, size = 0x4000, scoped, tag = 'input window, operand 7, single buffered']
    #allocation13 [shape = 'u8[16384]{0}', space=vmem, size = 0x4000, scoped, tag = 'input window, operand 9, single buffered']
    #allocation14 [shape = 's32[1]{0}', space=sflag, size = 0x4, scoped, tag = 'scoped memory for discriminator_forward.1']
    #allocation15 [shape = 'u8[512]{0}', space=vmem, size = 0x400, scoped, tag = 'input window, operand 10, single buffered']
    #allocation16 [shape = 'u8[32768]{0}', space=vmem, size = 0x8000, scoped, tag = 'output window, operand 0, single buffered']
    %16 = vsyncpa [#allocation5], 0
    %17 = vsyncpa [#allocation8], 0
    %18 = vsyncpa [#allocation11], 0
    %19 = vsyncpa [#allocation14], 0
    %20 = vsyncpa [#allocation6], 0
    // Predicated region
    $region2: #{discriminator_forward.1} parent=1 // pred_check
      _
    $region3: #{discriminator_forward.1} parent=1 // pred_check_branch
      %22 = sbr.rel (0) target = $region5
    $region4: #{discriminator_forward.1} parent=1 // pred_region
      %s24 = ssub.s32 1024, 1024
      %25 = vsyncadd [#allocation5], %s24
      %s26 = sshll.u32 [#allocation4], 4
      %s27 = int_to_ptr.vmem [resolvable:$true] %s26
      %32 = dma.hbm_to_vmem [thread:$0]  %s0, 1024, %s27, [#allocation5], 128, 128, 8
    $region5: #{discriminator_forward.1} parent=1 // pred_fallthru
      _
    // Predicated region
    $region6: #{discriminator_forward.1} parent=1 // pred_check
      _
    $region7: #{discriminator_forward.1} parent=1 // pred_check_branch
      %34 = sbr.rel (0) target = $region9
    $region8: #{discriminator_forward.1} parent=1 // pred_region
      %s36 = ssub.s32 512, 512
      %37 = vsyncadd [#allocation8], %s36
      %s38 = sshll.u32 [#allocation7], 4
      %s39 = int_to_ptr.vmem [resolvable:$true] %s38
      %44 = dma.hbm_to_vmem [thread:$0]  %s1, 512, %s39, [#allocation8], 128, 128, 8
    $region9: #{discriminator_forward.1} parent=1 // pred_fallthru
      _
    // Predicated region
    $region10: #{discriminator_forward.1} parent=1 // pred_check
      _
    $region11: #{discriminator_forward.1} parent=1 // pred_check_branch
      %46 = sbr.rel (0) target = $region13
    $region12: #{discriminator_forward.1} parent=1 // pred_region
      _
    $region13: #{discriminator_forward.1} parent=1 // pred_fallthru
      _
    // Predicated region
    $region14: #{discriminator_forward.1} parent=1 // pred_check
      _
    $region15: #{discriminator_forward.1} parent=1 // pred_check_branch
      %48 = sbr.rel (0) target = $region17
    $region16: #{discriminator_forward.1} parent=1 // pred_region
      %s50 = ssub.s32 512, 512
      %51 = vsyncadd [#allocation8], %s50
      %s52 = sshll.u32 [#allocation9], 4
      %s53 = int_to_ptr.vmem [resolvable:$true] %s52
      %58 = dma.hbm_to_vmem [thread:$0]  %s3, 512, %s53, [#allocation8], 128, 128, 8
    $region17: #{discriminator_forward.1} parent=1 // pred_fallthru
      _
    // Predicated region
    $region18: #{discriminator_forward.1} parent=1 // pred_check
      _
    $region19: #{discriminator_forward.1} parent=1 // pred_check_branch
      %60 = sbr.rel (0) target = $region21
    $region20: #{discriminator_forward.1} parent=1 // pred_region
      _
    $region21: #{discriminator_forward.1} parent=1 // pred_fallthru
      _
    // Predicated region
    $region22: #{discriminator_forward.1} parent=1 // pred_check
      _
    $region23: #{discriminator_forward.1} parent=1 // pred_check_branch
      %62 = sbr.rel (0) target = $region25
    $region24: #{discriminator_forward.1} parent=1 // pred_region
      %s64 = ssub.s32 512, 512
      %65 = vsyncadd [#allocation11], %s64
      %s66 = sshll.u32 [#allocation10], 4
      %s67 = int_to_ptr.vmem [resolvable:$true] %s66
      %72 = dma.hbm_to_vmem [thread:$0]  %s5, 512, %s67, [#allocation11], 128, 128, 8
    $region25: #{discriminator_forward.1} parent=1 // pred_fallthru
      _
    // Predicated region
    $region26: #{discriminator_forward.1} parent=1 // pred_check
      _
    $region27: #{discriminator_forward.1} parent=1 // pred_check_branch
      %74 = sbr.rel (0) target = $region29
    $region28: #{discriminator_forward.1} parent=1 // pred_region
      _
    $region29: #{discriminator_forward.1} parent=1 // pred_fallthru
      _
    // Predicated region
    $region30: #{discriminator_forward.1} parent=1 // pred_check
      _
    $region31: #{discriminator_forward.1} parent=1 // pred_check_branch
      %76 = sbr.rel (0) target = $region33
    $region32: #{discriminator_forward.1} parent=1 // pred_region
      %s78 = ssub.s32 512, 512
      %79 = vsyncadd [#allocation11], %s78
      %s80 = sshll.u32 [#allocation12], 4
      %s81 = int_to_ptr.vmem [resolvable:$true] %s80
      %86 = dma.hbm_to_vmem [thread:$0]  %s7, 512, %s81, [#allocation11], 128, 128, 8
    $region33: #{discriminator_forward.1} parent=1 // pred_fallthru
      _
    // Predicated region
    $region34: #{discriminator_forward.1} parent=1 // pred_check
      _
    $region35: #{discriminator_forward.1} parent=1 // pred_check_branch
      %88 = sbr.rel (0) target = $region37
    $region36: #{discriminator_forward.1} parent=1 // pred_region
      _
    $region37: #{discriminator_forward.1} parent=1 // pred_fallthru
      _
    // Predicated region
    $region38: #{discriminator_forward.1} parent=1 // pred_check
      _
    $region39: #{discriminator_forward.1} parent=1 // pred_check_branch
      %90 = sbr.rel (0) target = $region41
    $region40: #{discriminator_forward.1} parent=1 // pred_region
      %s92 = ssub.s32 512, 512
      %93 = vsyncadd [#allocation14], %s92
      %s94 = sshll.u32 [#allocation13], 4
      %s95 = int_to_ptr.vmem [resolvable:$true] %s94
      %100 = dma.hbm_to_vmem [thread:$0]  %s9, 512, %s95, [#allocation14], 128, 128, 8
    $region41: #{discriminator_forward.1} parent=1 // pred_fallthru
      _
    // Predicated region
    $region42: #{discriminator_forward.1} parent=1 // pred_check
      _
    $region43: #{discriminator_forward.1} parent=1 // pred_check_branch
      %102 = sbr.rel (0) target = $region45
    $region44: #{discriminator_forward.1} parent=1 // pred_region
      %s104 = ssub.s32 16, 16
      %105 = vsyncadd [#allocation14], %s104
      %s107 = sshll.u32 [#allocation15], 4
      %s108 = int_to_ptr.vmem [resolvable:$true] %s107
      %110 = dma.hbm_to_vmem [thread:$0]  %s10, 16, %s108, [#allocation14]
    $region45: #{discriminator_forward.1} parent=1 // pred_fallthru
      _
    // Predicated region
    $region46: #{discriminator_forward.1} parent=1 // pred_check
      _
    $region47: #{discriminator_forward.1} parent=1 // pred_check_branch
      %112 = sbr.rel (0) target = $region49
    $region48: #{discriminator_forward.1} parent=1 // pred_region
      %113 = dma.done [#allocation5], 1024
    $region49: #{discriminator_forward.1} parent=1 // pred_fallthru
      _
    // Predicated region
    $region50: #{discriminator_forward.1} parent=1 // pred_check
      _
    $region51: #{discriminator_forward.1} parent=1 // pred_check_branch
      %115 = sbr.rel (0) target = $region53
    $region52: #{discriminator_forward.1} parent=1 // pred_region
      %116 = dma.done [#allocation8], 512
    $region53: #{discriminator_forward.1} parent=1 // pred_fallthru
      _
    // Predicated region
    $region54: #{discriminator_forward.1} parent=1 // pred_check
      _
    $region55: #{discriminator_forward.1} parent=1 // pred_check_branch
      %118 = sbr.rel (0) target = $region57
    $region56: #{discriminator_forward.1} parent=1 // pred_region
      %119 = dma.done [#allocation8], 512
    $region57: #{discriminator_forward.1} parent=1 // pred_fallthru
      _
    // Predicated region
    $region58: #{discriminator_forward.1} parent=1 // pred_check
      _
    $region59: #{discriminator_forward.1} parent=1 // pred_check_branch
      %121 = sbr.rel (0) target = $region61
    $region60: #{discriminator_forward.1} parent=1 // pred_region
      %122 = dma.done [#allocation11], 512
    $region61: #{discriminator_forward.1} parent=1 // pred_fallthru
      _
    // Predicated region
    $region62: #{discriminator_forward.1} parent=1 // pred_check
      _
    $region63: #{discriminator_forward.1} parent=1 // pred_check_branch
      %124 = sbr.rel (0) target = $region65
    $region64: #{discriminator_forward.1} parent=1 // pred_region
      %125 = dma.done [#allocation11], 512
    $region65: #{discriminator_forward.1} parent=1 // pred_fallthru
      _
    // Predicated region
    $region66: #{discriminator_forward.1} parent=1 // pred_check
      _
    $region67: #{discriminator_forward.1} parent=1 // pred_check_branch
      %127 = sbr.rel (0) target = $region69
    $region68: #{discriminator_forward.1} parent=1 // pred_region
      %128 = dma.done [#allocation14], 512
    $region69: #{discriminator_forward.1} parent=1 // pred_fallthru
      _
    // Predicated region
    $region70: #{discriminator_forward.1} parent=1 // pred_check
      _
    $region71: #{discriminator_forward.1} parent=1 // pred_check_branch
      %130 = sbr.rel (0) target = $region73
    $region72: #{discriminator_forward.1} parent=1 // pred_region
      %131 = dma.done [#allocation14], 16
    $region73: #{discriminator_forward.1} parent=1 // pred_fallthru
      _
    %v132 = vld [vmem:[#allocation7] sm:$0xff]
    %v133 = vld [vmem:[#allocation7 + $0x8] sm:$0xff]
    %v134 = vld [vmem:[#allocation7 + $0x10] sm:$0xff]
    %v135 = vld [vmem:[#allocation7 + $0x18] sm:$0xff]
    %v136 = vld [vmem:[#allocation10] sm:$0xff]
    %v137 = vld [vmem:[#allocation10 + $0x8] sm:$0xff]
    %v138 = vld [vmem:[#allocation10 + $0x10] sm:$0xff]
    %v139 = vld [vmem:[#allocation10 + $0x18] sm:$0xff]
    %v140 = vld [vmem:[#allocation9] sm:$0xff]
    %v141 = vld [vmem:[#allocation9 + $0x8] sm:$0xff]
    %v142 = vld [vmem:[#allocation9 + $0x10] sm:$0xff]
    %v143 = vld [vmem:[#allocation9 + $0x18] sm:$0xff]
    %v144 = vld [vmem:[#allocation12] sm:$0xff]
    %v145 = vld [vmem:[#allocation12 + $0x8] sm:$0xff]
    %v146 = vld [vmem:[#allocation12 + $0x10] sm:$0xff]
    %v147 = vld [vmem:[#allocation12 + $0x18] sm:$0xff]
    %v148 = vld [vmem:[%s6] sm:$0x1]
    %v150 = vlaneseq
    %v151 = vshrl.u32 %v150, 7
    %v152 = vsub.s32 0, %v151
    %v153 = vrot.slane %v148, %v152
    %v155 = vld [vmem:[%s4] sm:$0x1]
    %v157 = vlaneseq
    %v158 = vshrl.u32 %v157, 7
    %v159 = vsub.s32 0, %v158
    %v160 = vrot.slane %v155, %v159
    %v161 = vld [vmem:[%s8] sm:$0x1]
    %v163 = vlaneseq
    %v164 = vshrl.u32 %v163, 7
    %v165 = vsub.s32 0, %v164
    %v166 = vrot.slane %v161, %v165
    %v167 = vld [vmem:[#allocation4] sm:$0xff]
    %v168 = vld [vmem:[#allocation4 + $0x8] sm:$0xff]
    %v169 = vld [vmem:[#allocation4 + $0x10] sm:$0xff]
    %v170 = vld [vmem:[#allocation4 + $0x18] sm:$0xff]
    %v171 = vld [vmem:[#allocation4 + $0x20] sm:$0xff]
    %v172 = vld [vmem:[#allocation4 + $0x28] sm:$0xff]
    %v173 = vld [vmem:[#allocation4 + $0x30] sm:$0xff]
    %v174 = vld [vmem:[#allocation4 + $0x38] sm:$0xff]
    %v175 = vld [vmem:[%s2] sm:$0x1]
    %v177 = vlaneseq
    %v178 = vshrl.u32 %v177, 7
    %v179 = vsub.s32 0, %v178
    %v180 = vrot.slane %v175, %v179
    %vm182 = vcmask 261120
    %v184 = vsel %vm182, %v167, 0
    %v187 = vsel %vm182, %v168, 0
    %v190 = vsel %vm182, %v169, 0
    %v193 = vsel %vm182, %v170, 0
    %v196 = vsel %vm182, %v171, 0
    %v199 = vsel %vm182, %v172, 0
    %v202 = vsel %vm182, %v173, 0
    %v205 = vsel %vm182, %v174, 0
    %207 = vmatprep.subr.mxu0 0.0
    %208 = vmatpush1.msra.mxu0 0.0
    %209 = vmatprep.subr.mxu0 0.0
    %210 = vmatpush1.msra.mxu0 0.0
    %211 = vmatprep.subr.mxu0 0.0
    %212 = vmatpush1.msra.mxu0 0.0
    %213 = vmatprep.subr.mxu0 0.0
    %214 = vmatpush1.msra.mxu0 0.0
    %215 = vmatprep.subr.mxu0 0.0
    %216 = vmatpush1.msra.mxu0 0.0
    %217 = vmatprep.subr.mxu0 0.0
    %218 = vmatpush1.msra.mxu0 0.0
    %219 = vmatprep.subr.mxu0 0.0
    %220 = vmatpush1.msra.mxu0 0.0
    %221 = vmatprep.subr.mxu0 0.0
    %222 = vmatpush1.msra.mxu0 0.0
    %223 = vmatprep.subr.mxu0 0.0
    %224 = vmatpush1.msra.mxu0 0.0
    %225 = vmatprep.subr.mxu0 0.0
    %226 = vmatpush1.msra.mxu0 0.0
    %227 = vmatprep.subr.mxu0 0.0
    %228 = vmatpush1.msra.mxu0 0.0
    %229 = vmatprep.subr.mxu0 0.0
    %230 = vmatpush1.msra.mxu0 0.0
    %231 = vmatprep.subr.mxu0 0.0
    %232 = vmatpush1.msra.mxu0 %v135
    %233 = vmatprep.subr.mxu0 0.0
    %234 = vmatpush1.msra.mxu0 %v134
    %235 = vmatprep.subr.mxu0 0.0
    %236 = vmatpush1.msra.mxu0 %v133
    %237 = vmatprep.subr.mxu0 0.0
    %238 = vmatpush1.msra.mxu0 %v132
    %239 = vmatprep.subr.mxu0 0.0
    %240 = vmatpush2.msra.mxu0 0.0
    %241 = vmatprep.subr.mxu0 0.0
    %242 = vmatpush2.msra.mxu0 0.0
    %243 = vmatprep.subr.mxu0 0.0
    %244 = vmatpush2.msra.mxu0 0.0
    %245 = vmatprep.subr.mxu0 0.0
    %246 = vmatpush2.msra.mxu0 0.0
    %247 = vmatprep.subr.mxu0 0.0
    %248 = vmatpush2.msra.mxu0 0.0
    %249 = vmatprep.subr.mxu0 0.0
    %250 = vmatpush2.msra.mxu0 0.0
    %251 = vmatprep.subr.mxu0 0.0
    %252 = vmatpush2.msra.mxu0 0.0
    %253 = vmatprep.subr.mxu0 0.0
    %254 = vmatpush2.msra.mxu0 0.0
    %255 = vmatprep.subr.mxu0 0.0
    %256 = vmatpush2.msra.mxu0 0.0
    %257 = vmatprep.subr.mxu0 0.0
    %258 = vmatpush2.msra.mxu0 0.0
    %259 = vmatprep.subr.mxu0 0.0
    %260 = vmatpush2.msra.mxu0 0.0
    %261 = vmatprep.subr.mxu0 0.0
    %262 = vmatpush2.msra.mxu0 0.0
    %263 = vmatprep.subr.mxu0 0.0
    %264 = vmatpush2.msra.mxu0 0.0
    %265 = vmatprep.subr.mxu0 0.0
    %266 = vmatpush2.msra.mxu0 0.0
    %267 = vmatprep.subr.mxu0 0.0
    %268 = vmatpush2.msra.mxu0 0.0
    %269 = vmatprep.subr.mxu0 0.0
    %270 = vmatpush2.msra.mxu0 0.0
    %271 = vmatprep.mubr.f32.mxu0 0.0
    %272 = vmatmul.mubr.f32.gmra.mxu0 %v184
    %v273 = vpop.f32.mrf.mxu0
    %v274 = vadd.f32 %v180, %v273
    %v275 = vpop.f32.mrf.mxu0
    %276 = vmatprep.mubr.f32.mxu0 0.0
    %277 = vmatmul.mubr.f32.gmra.mxu0 %v187
    %v278 = vpop.f32.mrf.mxu0
    %v279 = vadd.f32 %v180, %v278
    %v280 = vpop.f32.mrf.mxu0
    %281 = vmatprep.mubr.f32.mxu0 0.0
    %282 = vmatmul.mubr.f32.gmra.mxu0 %v190
    %v283 = vpop.f32.mrf.mxu0
    %v284 = vadd.f32 %v180, %v283
    %v285 = vpop.f32.mrf.mxu0
    %286 = vmatprep.mubr.f32.mxu0 0.0
    %287 = vmatmul.mubr.f32.gmra.mxu0 %v193
    %v288 = vpop.f32.mrf.mxu0
    %v289 = vadd.f32 %v180, %v288
    %v290 = vpop.f32.mrf.mxu0
    %291 = vmatprep.mubr.f32.mxu0 0.0
    %292 = vmatmul.mubr.f32.gmra.mxu0 %v196
    %v293 = vpop.f32.mrf.mxu0
    %v294 = vadd.f32 %v180, %v293
    %v295 = vpop.f32.mrf.mxu0
    %296 = vmatprep.mubr.f32.mxu0 0.0
    %297 = vmatmul.mubr.f32.gmra.mxu0 %v199
    %v298 = vpop.f32.mrf.mxu0
    %v299 = vadd.f32 %v180, %v298
    %v300 = vpop.f32.mrf.mxu0
    %301 = vmatprep.mubr.f32.mxu0 0.0
    %302 = vmatmul.mubr.f32.gmra.mxu0 %v202
    %v303 = vpop.f32.mrf.mxu0
    %v304 = vadd.f32 %v180, %v303
    %v305 = vpop.f32.mrf.mxu0
    %306 = vmatprep.mubr.f32.mxu0 0.0
    %307 = vmatmul.mubr.f32.gmra.mxu0 %v205
    %v308 = vpop.f32.mrf.mxu0
    %v309 = vadd.f32 %v180, %v308
    %v310 = vpop.f32.mrf.mxu0
    %311 = vdwg.mxu0
    %vm312 = vcmask 785408
    %313 = vst.msk [vmem:[#allocation2] sm:$0xff] %vm312, %v274
    %314 = vst.msk [vmem:[#allocation2 + $0x8] sm:$0xff] %vm312, %v279
    %315 = vst.msk [vmem:[#allocation2 + $0x10] sm:$0xff] %vm312, %v284
    %316 = vst.msk [vmem:[#allocation2 + $0x18] sm:$0xff] %vm312, %v289
    %317 = vst.msk [vmem:[#allocation2 + $0x20] sm:$0xff] %vm312, %v294
    %318 = vst.msk [vmem:[#allocation2 + $0x28] sm:$0xff] %vm312, %v299
    %319 = vst.msk [vmem:[#allocation2 + $0x30] sm:$0xff] %vm312, %v304
    %320 = vst.msk [vmem:[#allocation2 + $0x38] sm:$0xff] %vm312, %v309
    %v321 = vld [vmem:[#allocation2] sm:$0x1]
    %v322 = vld [vmem:[#allocation2 + $0x8] sm:$0x1]
    %v323 = vld [vmem:[#allocation2 + $0x10] sm:$0x1]
    %v324 = vld [vmem:[#allocation2 + $0x18] sm:$0x1]
    %v325 = vld [vmem:[#allocation2 + $0x20] sm:$0x1]
    %v326 = vld [vmem:[#allocation2 + $0x28] sm:$0x1]
    %v327 = vld [vmem:[#allocation2 + $0x30] sm:$0x1]
    %v328 = vld [vmem:[#allocation2 + $0x38] sm:$0x1]
    %v330 = vsel %vm182, 0.0, 0
    %332 = vmatprep.subr.mxu0 0.0
    %333 = vmatpush1.msra.mxu0 0.0
    %334 = vmatprep.subr.mxu0 0.0
    %335 = vmatpush1.msra.mxu0 0.0
    %336 = vmatprep.subr.mxu0 0.0
    %337 = vmatpush1.msra.mxu0 0.0
    %338 = vmatprep.subr.mxu0 0.0
    %339 = vmatpush1.msra.mxu0 0.0
    %340 = vmatprep.subr.mxu0 0.0
    %341 = vmatpush1.msra.mxu0 0.0
    %342 = vmatprep.subr.mxu0 0.0
    %343 = vmatpush1.msra.mxu0 0.0
    %344 = vmatprep.subr.mxu0 0.0
    %345 = vmatpush1.msra.mxu0 0.0
    %346 = vmatprep.subr.mxu0 0.0
    %347 = vmatpush1.msra.mxu0 0.0
    %348 = vmatprep.subr.mxu0 0.0
    %349 = vmatpush1.msra.mxu0 0.0
    %350 = vmatprep.subr.mxu0 0.0
    %351 = vmatpush1.msra.mxu0 0.0
    %352 = vmatprep.subr.mxu0 0.0
    %353 = vmatpush1.msra.mxu0 0.0
    %354 = vmatprep.subr.mxu0 0.0
    %355 = vmatpush1.msra.mxu0 0.0
    %356 = vmatprep.subr.mxu0 0.0
    %357 = vmatpush1.msra.mxu0 %v143
    %358 = vmatprep.subr.mxu0 0.0
    %359 = vmatpush1.msra.mxu0 %v142
    %360 = vmatprep.subr.mxu0 0.0
    %361 = vmatpush1.msra.mxu0 %v141
    %362 = vmatprep.subr.mxu0 0.0
    %363 = vmatpush1.msra.mxu0 %v140
    %364 = vmatprep.subr.mxu0 0.0
    %365 = vmatpush2.msra.mxu0 0.0
    %366 = vmatprep.subr.mxu0 0.0
    %367 = vmatpush2.msra.mxu0 0.0
    %368 = vmatprep.subr.mxu0 0.0
    %369 = vmatpush2.msra.mxu0 0.0
    %370 = vmatprep.subr.mxu0 0.0
    %371 = vmatpush2.msra.mxu0 0.0
    %372 = vmatprep.subr.mxu0 0.0
    %373 = vmatpush2.msra.mxu0 0.0
    %374 = vmatprep.subr.mxu0 0.0
    %375 = vmatpush2.msra.mxu0 0.0
    %376 = vmatprep.subr.mxu0 0.0
    %377 = vmatpush2.msra.mxu0 0.0
    %378 = vmatprep.subr.mxu0 0.0
    %379 = vmatpush2.msra.mxu0 0.0
    %380 = vmatprep.subr.mxu0 0.0
    %381 = vmatpush2.msra.mxu0 0.0
    %382 = vmatprep.subr.mxu0 0.0
    %383 = vmatpush2.msra.mxu0 0.0
    %384 = vmatprep.subr.mxu0 0.0
    %385 = vmatpush2.msra.mxu0 0.0
    %386 = vmatprep.subr.mxu0 0.0
    %387 = vmatpush2.msra.mxu0 0.0
    %388 = vmatprep.subr.mxu0 0.0
    %389 = vmatpush2.msra.mxu0 0.0
    %390 = vmatprep.subr.mxu0 0.0
    %391 = vmatpush2.msra.mxu0 0.0
    %392 = vmatprep.subr.mxu0 0.0
    %393 = vmatpush2.msra.mxu0 0.0
    %394 = vmatprep.subr.mxu0 0.0
    %395 = vmatpush2.msra.mxu0 0.0
    %396 = vmatprep.mubr.f32.mxu0 0.0
    %397 = vmatmul.mubr.f32.gmra.mxu0 %v330
    %v398 = vpop.f32.mrf.mxu0
    %v399 = vadd.f32 0.0, %v398
    %v400 = vpop.f32.mrf.mxu0
    %401 = vdwg.mxu0
    %v403 = vrot.slane %v399, 1
    %v404 = vrot.slane %v399, 2
    %v405 = vrot.slane %v399, 3
    %v406 = vrot.slane %v399, 4
    %v407 = vrot.slane %v399, 5
    %v408 = vrot.slane %v399, 6
    %v409 = vrot.slane %v399, 7
    %v418 = vadd.f32 %v321, %v399
    %v419 = vadd.f32 %v322, %v403
    %v420 = vadd.f32 %v323, %v404
    %v421 = vadd.f32 %v324, %v405
    %v422 = vadd.f32 %v325, %v406
    %v423 = vadd.f32 %v326, %v407
    %v424 = vadd.f32 %v327, %v408
    %v425 = vadd.f32 %v328, %v409
    %v426 = vxor.u32 %v418, 2147483648
    %v427 = vxor.u32 %v419, 2147483648
    %v428 = vxor.u32 %v420, 2147483648
    %v429 = vxor.u32 %v421, 2147483648
    %v430 = vxor.u32 %v422, 2147483648
    %v431 = vxor.u32 %v423, 2147483648
    %v432 = vxor.u32 %v424, 2147483648
    %v433 = vxor.u32 %v425, 2147483648
    %v434 = vmul.f32 %v426, 1.442695
    %v435 = vpow.pop %v434
    %v436 = vmul.f32 %v427, 1.442695
    %v437 = vpow.pop %v436
    %v438 = vmul.f32 %v428, 1.442695
    %v439 = vpow.pop %v438
    %v440 = vmul.f32 %v429, 1.442695
    %v441 = vpow.pop %v440
    %v442 = vmul.f32 %v430, 1.442695
    %v443 = vpow.pop %v442
    %v444 = vmul.f32 %v431, 1.442695
    %v445 = vpow.pop %v444
    %v446 = vmul.f32 %v432, 1.442695
    %v447 = vpow.pop %v446
    %v448 = vmul.f32 %v433, 1.442695
    %v449 = vpow.pop %v448
    %v450 = vadd.f32 %v435, 1.0
    %v451 = vadd.f32 %v437, 1.0
    %v452 = vadd.f32 %v439, 1.0
    %v453 = vadd.f32 %v441, 1.0
    %v454 = vadd.f32 %v443, 1.0
    %v455 = vadd.f32 %v445, 1.0
    %v456 = vadd.f32 %v447, 1.0
    %v457 = vadd.f32 %v449, 1.0
    %v458 = vrcp.pop %v450
    %v459 = vmul.f32 1.0, %v458
    %v460 = vrcp.pop %v451
    %v461 = vmul.f32 1.0, %v460
    %v462 = vrcp.pop %v452
    %v463 = vmul.f32 1.0, %v462
    %v464 = vrcp.pop %v453
    %v465 = vmul.f32 1.0, %v464
    %v466 = vrcp.pop %v454
    %v467 = vmul.f32 1.0, %v466
    %v468 = vrcp.pop %v455
    %v469 = vmul.f32 1.0, %v468
    %v470 = vrcp.pop %v456
    %v471 = vmul.f32 1.0, %v470
    %v472 = vrcp.pop %v457
    %v473 = vmul.f32 1.0, %v472
    %474 = vrot.lane.b32.xlu0 %v160, 64
    %v475 = vpop.permute.xlu0 %474
    %v477 = vadd.f32 %v399, %v475
    %v479 = vrot.slane %v477, 1
    %v480 = vrot.slane %v477, 2
    %v481 = vrot.slane %v477, 3
    %v482 = vrot.slane %v477, 4
    %v483 = vrot.slane %v477, 5
    %v484 = vrot.slane %v477, 6
    %v485 = vrot.slane %v477, 7
    %486 = vrot.lane.b32.xlu0 %v477, 64
    %v487 = vpop.permute.xlu0 %486
    %488 = vrot.lane.b32.xlu0 %v479, 64
    %v489 = vpop.permute.xlu0 %488
    %490 = vrot.lane.b32.xlu0 %v480, 64
    %v491 = vpop.permute.xlu0 %490
    %492 = vrot.lane.b32.xlu0 %v481, 64
    %v493 = vpop.permute.xlu0 %492
    %494 = vrot.lane.b32.xlu0 %v482, 64
    %v495 = vpop.permute.xlu0 %494
    %496 = vrot.lane.b32.xlu0 %v483, 64
    %v497 = vpop.permute.xlu0 %496
    %498 = vrot.lane.b32.xlu0 %v484, 64
    %v499 = vpop.permute.xlu0 %498
    %500 = vrot.lane.b32.xlu0 %v485, 64
    %v501 = vpop.permute.xlu0 %500
    %v510 = vmul.f32 %v459, %v487
    %v511 = vmul.f32 %v461, %v489
    %v512 = vmul.f32 %v463, %v491
    %v513 = vmul.f32 %v465, %v493
    %v514 = vmul.f32 %v467, %v495
    %v515 = vmul.f32 %v469, %v497
    %v516 = vmul.f32 %v471, %v499
    %v517 = vmul.f32 %v473, %v501
    %526 = vrot.lane.b32.xlu0 %v510, 64
    %v527 = vpop.permute.xlu0 %526
    %528 = vrot.lane.b32.xlu0 %v511, 64
    %v529 = vpop.permute.xlu0 %528
    %530 = vrot.lane.b32.xlu0 %v512, 64
    %v531 = vpop.permute.xlu0 %530
    %532 = vrot.lane.b32.xlu0 %v513, 64
    %v533 = vpop.permute.xlu0 %532
    %534 = vrot.lane.b32.xlu0 %v514, 64
    %v535 = vpop.permute.xlu0 %534
    %536 = vrot.lane.b32.xlu0 %v515, 64
    %v537 = vpop.permute.xlu0 %536
    %538 = vrot.lane.b32.xlu0 %v516, 64
    %v539 = vpop.permute.xlu0 %538
    %540 = vrot.lane.b32.xlu0 %v517, 64
    %v541 = vpop.permute.xlu0 %540
    %v550 = vadd.f32 %v321, %v527
    %v551 = vadd.f32 %v322, %v529
    %v552 = vadd.f32 %v323, %v531
    %v553 = vadd.f32 %v324, %v533
    %v554 = vadd.f32 %v325, %v535
    %v555 = vadd.f32 %v326, %v537
    %v556 = vadd.f32 %v327, %v539
    %v557 = vadd.f32 %v328, %v541
    %v558 = vtanh.pop %v550
    %v559 = vtanh.pop %v551
    %v560 = vtanh.pop %v552
    %v561 = vtanh.pop %v553
    %v562 = vtanh.pop %v554
    %v563 = vtanh.pop %v555
    %v564 = vtanh.pop %v556
    %v565 = vtanh.pop %v557
    %v566 = vsub.f32 1.0, %v459
    %v567 = vsub.f32 1.0, %v461
    %v568 = vsub.f32 1.0, %v463
    %v569 = vsub.f32 1.0, %v465
    %v570 = vsub.f32 1.0, %v467
    %v571 = vsub.f32 1.0, %v469
    %v572 = vsub.f32 1.0, %v471
    %v573 = vsub.f32 1.0, %v473
    %582 = vrot.lane.b32.xlu0 %v558, 96
    %v583 = vpop.permute.xlu0 %582
    %584 = vrot.lane.b32.xlu0 %v559, 96
    %v585 = vpop.permute.xlu0 %584
    %586 = vrot.lane.b32.xlu0 %v560, 96
    %v587 = vpop.permute.xlu0 %586
    %588 = vrot.lane.b32.xlu0 %v561, 96
    %v589 = vpop.permute.xlu0 %588
    %590 = vrot.lane.b32.xlu0 %v562, 96
    %v591 = vpop.permute.xlu0 %590
    %592 = vrot.lane.b32.xlu0 %v563, 96
    %v593 = vpop.permute.xlu0 %592
    %594 = vrot.lane.b32.xlu0 %v564, 96
    %v595 = vpop.permute.xlu0 %594
    %596 = vrot.lane.b32.xlu0 %v565, 96
    %v597 = vpop.permute.xlu0 %596
    %v606 = vmul.f32 %v566, %v583
    %v607 = vmul.f32 %v567, %v585
    %v608 = vmul.f32 %v568, %v587
    %v609 = vmul.f32 %v569, %v589
    %v610 = vmul.f32 %v570, %v591
    %v611 = vmul.f32 %v571, %v593
    %v612 = vmul.f32 %v572, %v595
    %v613 = vmul.f32 %v573, %v597
    %v614 = vmul.f32 %v459, 0.0
    %v615 = vmul.f32 %v461, 0.0
    %v616 = vmul.f32 %v463, 0.0
    %v617 = vmul.f32 %v465, 0.0
    %v618 = vmul.f32 %v467, 0.0
    %v619 = vmul.f32 %v469, 0.0
    %v620 = vmul.f32 %v471, 0.0
    %v621 = vmul.f32 %v473, 0.0
    %v622 = vadd.f32 %v606, %v614
    %v623 = vadd.f32 %v607, %v615
    %v624 = vadd.f32 %v608, %v616
    %v625 = vadd.f32 %v609, %v617
    %v626 = vadd.f32 %v610, %v618
    %v627 = vadd.f32 %v611, %v619
    %v628 = vadd.f32 %v612, %v620
    %v629 = vadd.f32 %v613, %v621
    %v638 = vrot.slane %v623, 7
    %vm639 = vcmask 1041409
    %v640 = vsel %vm639, %v638, %v622
    %v641 = vrot.slane %v624, 6
    %vm642 = vcmask 1042434
    %v643 = vsel %vm642, %v641, %v640
    %v644 = vrot.slane %v625, 5
    %vm645 = vcmask 1043459
    %v646 = vsel %vm645, %v644, %v643
    %v647 = vrot.slane %v626, 4
    %vm648 = vcmask 1044484
    %v649 = vsel %vm648, %v647, %v646
    %v650 = vrot.slane %v627, 3
    %vm651 = vcmask 1045509
    %v652 = vsel %vm651, %v650, %v649
    %v653 = vrot.slane %v628, 2
    %vm654 = vcmask 1046534
    %v655 = vsel %vm654, %v653, %v652
    %v656 = vrot.slane %v629, 1
    %vm657 = vcmask 1047559
    %v658 = vsel %vm657, %v656, %v655
    %659 = vrot.lane.b32.xlu0 %v658, 96
    %v660 = vpop.permute.xlu0 %659
    %v661 = vsel %vm182, %v660, 0
    %663 = vmatprep.subr.mxu0 0.0
    %664 = vmatpush1.msra.mxu0 0.0
    %665 = vmatprep.subr.mxu0 0.0
    %666 = vmatpush1.msra.mxu0 0.0
    %667 = vmatprep.subr.mxu0 0.0
    %668 = vmatpush1.msra.mxu0 0.0
    %669 = vmatprep.subr.mxu0 0.0
    %670 = vmatpush1.msra.mxu0 0.0
    %671 = vmatprep.subr.mxu0 0.0
    %672 = vmatpush1.msra.mxu0 0.0
    %673 = vmatprep.subr.mxu0 0.0
    %674 = vmatpush1.msra.mxu0 0.0
    %675 = vmatprep.subr.mxu0 0.0
    %676 = vmatpush1.msra.mxu0 0.0
    %677 = vmatprep.subr.mxu0 0.0
    %678 = vmatpush1.msra.mxu0 0.0
    %679 = vmatprep.subr.mxu0 0.0
    %680 = vmatpush1.msra.mxu0 0.0
    %681 = vmatprep.subr.mxu0 0.0
    %682 = vmatpush1.msra.mxu0 0.0
    %683 = vmatprep.subr.mxu0 0.0
    %684 = vmatpush1.msra.mxu0 0.0
    %685 = vmatprep.subr.mxu0 0.0
    %686 = vmatpush1.msra.mxu0 0.0
    %687 = vmatprep.subr.mxu0 0.0
    %688 = vmatpush1.msra.mxu0 %v139
    %689 = vmatprep.subr.mxu0 0.0
    %690 = vmatpush1.msra.mxu0 %v138
    %691 = vmatprep.subr.mxu0 0.0
    %692 = vmatpush1.msra.mxu0 %v137
    %693 = vmatprep.subr.mxu0 0.0
    %694 = vmatpush1.msra.mxu0 %v136
    %695 = vmatprep.subr.mxu0 0.0
    %696 = vmatpush2.msra.mxu0 0.0
    %697 = vmatprep.subr.mxu0 0.0
    %698 = vmatpush2.msra.mxu0 0.0
    %699 = vmatprep.subr.mxu0 0.0
    %700 = vmatpush2.msra.mxu0 0.0
    %701 = vmatprep.subr.mxu0 0.0
    %702 = vmatpush2.msra.mxu0 0.0
    %703 = vmatprep.subr.mxu0 0.0
    %704 = vmatpush2.msra.mxu0 0.0
    %705 = vmatprep.subr.mxu0 0.0
    %706 = vmatpush2.msra.mxu0 0.0
    %707 = vmatprep.subr.mxu0 0.0
    %708 = vmatpush2.msra.mxu0 0.0
    %709 = vmatprep.subr.mxu0 0.0
    %710 = vmatpush2.msra.mxu0 0.0
    %711 = vmatprep.subr.mxu0 0.0
    %712 = vmatpush2.msra.mxu0 0.0
    %713 = vmatprep.subr.mxu0 0.0
    %714 = vmatpush2.msra.mxu0 0.0
    %715 = vmatprep.subr.mxu0 0.0
    %716 = vmatpush2.msra.mxu0 0.0
    %717 = vmatprep.subr.mxu0 0.0
    %718 = vmatpush2.msra.mxu0 0.0
    %719 = vmatprep.subr.mxu0 0.0
    %720 = vmatpush2.msra.mxu0 0.0
    %721 = vmatprep.subr.mxu0 0.0
    %722 = vmatpush2.msra.mxu0 0.0
    %723 = vmatprep.subr.mxu0 0.0
    %724 = vmatpush2.msra.mxu0 0.0
    %725 = vmatprep.subr.mxu0 0.0
    %726 = vmatpush2.msra.mxu0 0.0
    %727 = vmatprep.mubr.f32.mxu0 0.0
    %728 = vmatmul.mubr.f32.gmra.mxu0 %v661
    %v729 = vpop.f32.mrf.mxu0
    %v730 = vadd.f32 %v153, %v729
    %v731 = vpop.f32.mrf.mxu0
    %732 = vdwg.mxu0
    %733 = vmatprep.subr.mxu0 0.0
    %734 = vmatpush1.msra.mxu0 0.0
    %735 = vmatprep.subr.mxu0 0.0
    %736 = vmatpush1.msra.mxu0 0.0
    %737 = vmatprep.subr.mxu0 0.0
    %738 = vmatpush1.msra.mxu0 0.0
    %739 = vmatprep.subr.mxu0 0.0
    %740 = vmatpush1.msra.mxu0 0.0
    %741 = vmatprep.subr.mxu0 0.0
    %742 = vmatpush1.msra.mxu0 0.0
    %743 = vmatprep.subr.mxu0 0.0
    %744 = vmatpush1.msra.mxu0 0.0
    %745 = vmatprep.subr.mxu0 0.0
    %746 = vmatpush1.msra.mxu0 0.0
    %747 = vmatprep.subr.mxu0 0.0
    %748 = vmatpush1.msra.mxu0 0.0
    %749 = vmatprep.subr.mxu0 0.0
    %750 = vmatpush1.msra.mxu0 0.0
    %751 = vmatprep.subr.mxu0 0.0
    %752 = vmatpush1.msra.mxu0 0.0
    %753 = vmatprep.subr.mxu0 0.0
    %754 = vmatpush1.msra.mxu0 0.0
    %755 = vmatprep.subr.mxu0 0.0
    %756 = vmatpush1.msra.mxu0 0.0
    %757 = vmatprep.subr.mxu0 0.0
    %758 = vmatpush1.msra.mxu0 %v147
    %759 = vmatprep.subr.mxu0 0.0
    %760 = vmatpush1.msra.mxu0 %v146
    %761 = vmatprep.subr.mxu0 0.0
    %762 = vmatpush1.msra.mxu0 %v145
    %763 = vmatprep.subr.mxu0 0.0
    %764 = vmatpush1.msra.mxu0 %v144
    %765 = vmatprep.subr.mxu0 0.0
    %766 = vmatpush2.msra.mxu0 0.0
    %767 = vmatprep.subr.mxu0 0.0
    %768 = vmatpush2.msra.mxu0 0.0
    %769 = vmatprep.subr.mxu0 0.0
    %770 = vmatpush2.msra.mxu0 0.0
    %771 = vmatprep.subr.mxu0 0.0
    %772 = vmatpush2.msra.mxu0 0.0
    %773 = vmatprep.subr.mxu0 0.0
    %774 = vmatpush2.msra.mxu0 0.0
    %775 = vmatprep.subr.mxu0 0.0
    %776 = vmatpush2.msra.mxu0 0.0
    %777 = vmatprep.subr.mxu0 0.0
    %778 = vmatpush2.msra.mxu0 0.0
    %779 = vmatprep.subr.mxu0 0.0
    %780 = vmatpush2.msra.mxu0 0.0
    %781 = vmatprep.subr.mxu0 0.0
    %782 = vmatpush2.msra.mxu0 0.0
    %783 = vmatprep.subr.mxu0 0.0
    %784 = vmatpush2.msra.mxu0 0.0
    %785 = vmatprep.subr.mxu0 0.0
    %786 = vmatpush2.msra.mxu0 0.0
    %787 = vmatprep.subr.mxu0 0.0
    %788 = vmatpush2.msra.mxu0 0.0
    %789 = vmatprep.subr.mxu0 0.0
    %790 = vmatpush2.msra.mxu0 0.0
    %791 = vmatprep.subr.mxu0 0.0
    %792 = vmatpush2.msra.mxu0 0.0
    %793 = vmatprep.subr.mxu0 0.0
    %794 = vmatpush2.msra.mxu0 0.0
    %795 = vmatprep.subr.mxu0 0.0
    %796 = vmatpush2.msra.mxu0 0.0
    %797 = vmatprep.mubr.f32.mxu0 0.0
    %798 = vmatmul.mubr.f32.gmra.mxu0 %v330
    %v799 = vpop.f32.mrf.mxu0
    %v800 = vadd.f32 0.0, %v799
    %v801 = vpop.f32.mrf.mxu0
    %802 = vdwg.mxu0
    %v803 = vadd.f32 %v730, %v800
    %v804 = vxor.u32 %v803, 2147483648
    %v805 = vmul.f32 %v804, 1.442695
    %v806 = vpow.pop %v805
    %v807 = vadd.f32 %v806, 1.0
    %v808 = vrcp.pop %v807
    %v809 = vmul.f32 1.0, %v808
    %810 = vrot.lane.b32.xlu0 %v166, 64
    %v811 = vpop.permute.xlu0 %810
    %v813 = vadd.f32 %v800, %v811
    %815 = vrot.lane.b32.xlu0 %v813, 64
    %v816 = vpop.permute.xlu0 %815
    %v818 = vmul.f32 %v809, %v816
    %820 = vrot.lane.b32.xlu0 %v818, 64
    %v821 = vpop.permute.xlu0 %820
    %v823 = vadd.f32 %v730, %v821
    %v824 = vtanh.pop %v823
    %v825 = vsub.f32 1.0, %v809
    %827 = vrot.lane.b32.xlu0 %v824, 96
    %v828 = vpop.permute.xlu0 %827
    %v830 = vmul.f32 %v825, %v828
    %v831 = vmul.f32 %v809, 0.0
    %v832 = vadd.f32 %v830, %v831
    %v834 = vcombine.high %v832, %v832
    %v836 = vunpack.c.l.s4 1966171168
    %v837 = vunpack.c.0.s8 %v836
    %v838 = vlaneseq
    %v839 = vshrl.u32 %v838, 7
    %v840 = vsub.s32 %v837, %v839
    %v841 = vrot.slane %v832, %v840
    %v843 = vunpack.c.l.s4 1966171168
    %v844 = vunpack.c.0.s8 %v843
    %v845 = vlaneseq
    %v846 = vshrl.u32 %v845, 7
    %v847 = vsub.s32 %v844, %v846
    %v848 = vrot.slane %v834, %v847
    %v849 = vcombine.high %v841, %v841
    %v850 = vcombine.high %v848, %v848
    %v852 = vunpack.c.l.s4 1966171168
    %v853 = vunpack.c.0.s8 %v852
    %v854 = vlaneseq
    %v855 = vshrl.u32 %v854, 7
    %v856 = vsub.s32 %v853, %v855
    %v857 = vrot.slane %v841, %v856
    %v859 = vunpack.c.l.s4 1966171168
    %v860 = vunpack.c.0.s8 %v859
    %v861 = vlaneseq
    %v862 = vshrl.u32 %v861, 7
    %v863 = vsub.s32 %v860, %v862
    %v864 = vrot.slane %v848, %v863
    %v866 = vunpack.c.l.s4 1966171168
    %v867 = vunpack.c.0.s8 %v866
    %v868 = vlaneseq
    %v869 = vshrl.u32 %v868, 7
    %v870 = vsub.s32 %v867, %v869
    %v871 = vrot.slane %v849, %v870
    %v873 = vunpack.c.l.s4 1966171168
    %v874 = vunpack.c.0.s8 %v873
    %v875 = vlaneseq
    %v876 = vshrl.u32 %v875, 7
    %v877 = vsub.s32 %v874, %v876
    %v878 = vrot.slane %v850, %v877
    %v879 = vcombine.high %v857, %v857
    %v880 = vcombine.high %v864, %v864
    %v881 = vcombine.high %v871, %v871
    %v882 = vcombine.high %v878, %v878
    %v883 = vlaneseq
    %v884 = vshrl.u32 %v883, 7
    %v885 = vsub.s32 0, %v884
    %v886 = vrot.slane %v857, %v885
    %v887 = vlaneseq
    %v888 = vshrl.u32 %v887, 7
    %v889 = vsub.s32 0, %v888
    %v890 = vrot.slane %v871, %v889
    %v891 = vlaneseq
    %v892 = vshrl.u32 %v891, 7
    %v893 = vsub.s32 0, %v892
    %v894 = vrot.slane %v879, %v893
    %v895 = vlaneseq
    %v896 = vshrl.u32 %v895, 7
    %v897 = vsub.s32 0, %v896
    %v898 = vrot.slane %v881, %v897
    %v899 = vlaneseq
    %v900 = vshrl.u32 %v899, 7
    %v901 = vsub.s32 0, %v900
    %v902 = vrot.slane %v864, %v901
    %v903 = vlaneseq
    %v904 = vshrl.u32 %v903, 7
    %v905 = vsub.s32 0, %v904
    %v906 = vrot.slane %v878, %v905
    %v907 = vlaneseq
    %v908 = vshrl.u32 %v907, 7
    %v909 = vsub.s32 0, %v908
    %v910 = vrot.slane %v880, %v909
    %v911 = vlaneseq
    %v912 = vshrl.u32 %v911, 7
    %v913 = vsub.s32 0, %v912
    %v914 = vrot.slane %v882, %v913
    %915 = vrot.lane.b32.xlu0 %v886, 96
    %v916 = vpop.permute.xlu0 %915
    %917 = vrot.lane.b32.xlu0 %v890, 96
    %v918 = vpop.permute.xlu0 %917
    %919 = vrot.lane.b32.xlu0 %v894, 96
    %v920 = vpop.permute.xlu0 %919
    %921 = vrot.lane.b32.xlu0 %v898, 96
    %v922 = vpop.permute.xlu0 %921
    %923 = vrot.lane.b32.xlu0 %v902, 96
    %v924 = vpop.permute.xlu0 %923
    %925 = vrot.lane.b32.xlu0 %v906, 96
    %v926 = vpop.permute.xlu0 %925
    %927 = vrot.lane.b32.xlu0 %v910, 96
    %v928 = vpop.permute.xlu0 %927
    %929 = vrot.lane.b32.xlu0 %v914, 96
    %v930 = vpop.permute.xlu0 %929
    %vm939 = vcmask 253952
    %940 = vst.msk [vmem:[#allocation3] sm:$0x1] %vm939, %v916
    %941 = vst.msk [vmem:[#allocation3 + $0x8] sm:$0x1] %vm939, %v918
    %942 = vst.msk [vmem:[#allocation3 + $0x10] sm:$0x1] %vm939, %v920
    %943 = vst.msk [vmem:[#allocation3 + $0x18] sm:$0x1] %vm939, %v922
    %944 = vst.msk [vmem:[#allocation3 + $0x20] sm:$0x1] %vm939, %v924
    %945 = vst.msk [vmem:[#allocation3 + $0x28] sm:$0x1] %vm939, %v926
    %946 = vst.msk [vmem:[#allocation3 + $0x30] sm:$0x1] %vm939, %v928
    %947 = vst.msk [vmem:[#allocation3 + $0x38] sm:$0x1] %vm939, %v930
    %v948 = vld [vmem:[#allocation2 + $0x1] sm:$0x1]
    %v949 = vld [vmem:[#allocation2 + $0x9] sm:$0x1]
    %v950 = vld [vmem:[#allocation2 + $0x11] sm:$0x1]
    %v951 = vld [vmem:[#allocation2 + $0x19] sm:$0x1]
    %v952 = vld [vmem:[#allocation2 + $0x21] sm:$0x1]
    %v953 = vld [vmem:[#allocation2 + $0x29] sm:$0x1]
    %v954 = vld [vmem:[#allocation2 + $0x31] sm:$0x1]
    %v955 = vld [vmem:[#allocation2 + $0x39] sm:$0x1]
    %956 = vmatprep.subr.mxu0 0.0
    %957 = vmatpush1.msra.mxu0 0.0
    %958 = vmatprep.subr.mxu0 0.0
    %959 = vmatpush1.msra.mxu0 0.0
    %960 = vmatprep.subr.mxu0 0.0
    %961 = vmatpush1.msra.mxu0 0.0
    %962 = vmatprep.subr.mxu0 0.0
    %963 = vmatpush1.msra.mxu0 0.0
    %964 = vmatprep.subr.mxu0 0.0
    %965 = vmatpush1.msra.mxu0 0.0
    %966 = vmatprep.subr.mxu0 0.0
    %967 = vmatpush1.msra.mxu0 0.0
    %968 = vmatprep.subr.mxu0 0.0
    %969 = vmatpush1.msra.mxu0 0.0
    %970 = vmatprep.subr.mxu0 0.0
    %971 = vmatpush1.msra.mxu0 0.0
    %972 = vmatprep.subr.mxu0 0.0
    %973 = vmatpush1.msra.mxu0 0.0
    %974 = vmatprep.subr.mxu0 0.0
    %975 = vmatpush1.msra.mxu0 0.0
    %976 = vmatprep.subr.mxu0 0.0
    %977 = vmatpush1.msra.mxu0 0.0
    %978 = vmatprep.subr.mxu0 0.0
    %979 = vmatpush1.msra.mxu0 0.0
    %980 = vmatprep.subr.mxu0 0.0
    %981 = vmatpush1.msra.mxu0 %v143
    %982 = vmatprep.subr.mxu0 0.0
    %983 = vmatpush1.msra.mxu0 %v142
    %984 = vmatprep.subr.mxu0 0.0
    %985 = vmatpush1.msra.mxu0 %v141
    %986 = vmatprep.subr.mxu0 0.0
    %987 = vmatpush1.msra.mxu0 %v140
    %988 = vmatprep.subr.mxu0 0.0
    %989 = vmatpush2.msra.mxu0 0.0
    %990 = vmatprep.subr.mxu0 0.0
    %991 = vmatpush2.msra.mxu0 0.0
    %992 = vmatprep.subr.mxu0 0.0
    %993 = vmatpush2.msra.mxu0 0.0
    %994 = vmatprep.subr.mxu0 0.0
    %995 = vmatpush2.msra.mxu0 0.0
    %996 = vmatprep.subr.mxu0 0.0
    %997 = vmatpush2.msra.mxu0 0.0
    %998 = vmatprep.subr.mxu0 0.0
    %999 = vmatpush2.msra.mxu0 0.0
    %1000 = vmatprep.subr.mxu0 0.0
    %1001 = vmatpush2.msra.mxu0 0.0
    %1002 = vmatprep.subr.mxu0 0.0
    %1003 = vmatpush2.msra.mxu0 0.0
    %1004 = vmatprep.subr.mxu0 0.0
    %1005 = vmatpush2.msra.mxu0 0.0
    %1006 = vmatprep.subr.mxu0 0.0
    %1007 = vmatpush2.msra.mxu0 0.0
    %1008 = vmatprep.subr.mxu0 0.0
    %1009 = vmatpush2.msra.mxu0 0.0
    %1010 = vmatprep.subr.mxu0 0.0
    %1011 = vmatpush2.msra.mxu0 0.0
    %1012 = vmatprep.subr.mxu0 0.0
    %1013 = vmatpush2.msra.mxu0 0.0
    %1014 = vmatprep.subr.mxu0 0.0
    %1015 = vmatpush2.msra.mxu0 0.0
    %1016 = vmatprep.subr.mxu0 0.0
    %1017 = vmatpush2.msra.mxu0 0.0
    %1018 = vmatprep.subr.mxu0 0.0
    %1019 = vmatpush2.msra.mxu0 0.0
    %1020 = vmatprep.mubr.f32.mxu0 0.0
    %1021 = vmatmul.mubr.f32.gmra.mxu0 %v661
    %v1022 = vpop.f32.mrf.mxu0
    %v1023 = vadd.f32 0.0, %v1022
    %v1024 = vpop.f32.mrf.mxu0
    %1025 = vdwg.mxu0
    %v1027 = vrot.slane %v1023, 1
    %v1028 = vrot.slane %v1023, 2
    %v1029 = vrot.slane %v1023, 3
    %v1030 = vrot.slane %v1023, 4
    %v1031 = vrot.slane %v1023, 5
    %v1032 = vrot.slane %v1023, 6
    %v1033 = vrot.slane %v1023, 7
    %v1042 = vadd.f32 %v948, %v1023
    %v1043 = vadd.f32 %v949, %v1027
    %v1044 = vadd.f32 %v950, %v1028
    %v1045 = vadd.f32 %v951, %v1029
    %v1046 = vadd.f32 %v952, %v1030
    %v1047 = vadd.f32 %v953, %v1031
    %v1048 = vadd.f32 %v954, %v1032
    %v1049 = vadd.f32 %v955, %v1033
    %v1050 = vxor.u32 %v1042, 2147483648
    %v1051 = vxor.u32 %v1043, 2147483648
    %v1052 = vxor.u32 %v1044, 2147483648
    %v1053 = vxor.u32 %v1045, 2147483648
    %v1054 = vxor.u32 %v1046, 2147483648
    %v1055 = vxor.u32 %v1047, 2147483648
    %v1056 = vxor.u32 %v1048, 2147483648
    %v1057 = vxor.u32 %v1049, 2147483648
    %v1058 = vmul.f32 %v1050, 1.442695
    %v1059 = vpow.pop %v1058
    %v1060 = vmul.f32 %v1051, 1.442695
    %v1061 = vpow.pop %v1060
    %v1062 = vmul.f32 %v1052, 1.442695
    %v1063 = vpow.pop %v1062
    %v1064 = vmul.f32 %v1053, 1.442695
    %v1065 = vpow.pop %v1064
    %v1066 = vmul.f32 %v1054, 1.442695
    %v1067 = vpow.pop %v1066
    %v1068 = vmul.f32 %v1055, 1.442695
    %v1069 = vpow.pop %v1068
    %v1070 = vmul.f32 %v1056, 1.442695
    %v1071 = vpow.pop %v1070
    %v1072 = vmul.f32 %v1057, 1.442695
    %v1073 = vpow.pop %v1072
    %v1074 = vadd.f32 %v1059, 1.0
    %v1075 = vadd.f32 %v1061, 1.0
    %v1076 = vadd.f32 %v1063, 1.0
    %v1077 = vadd.f32 %v1065, 1.0
    %v1078 = vadd.f32 %v1067, 1.0
    %v1079 = vadd.f32 %v1069, 1.0
    %v1080 = vadd.f32 %v1071, 1.0
    %v1081 = vadd.f32 %v1073, 1.0
    %v1082 = vrcp.pop %v1074
    %v1083 = vmul.f32 1.0, %v1082
    %v1084 = vrcp.pop %v1075
    %v1085 = vmul.f32 1.0, %v1084
    %v1086 = vrcp.pop %v1076
    %v1087 = vmul.f32 1.0, %v1086
    %v1088 = vrcp.pop %v1077
    %v1089 = vmul.f32 1.0, %v1088
    %v1090 = vrcp.pop %v1078
    %v1091 = vmul.f32 1.0, %v1090
    %v1092 = vrcp.pop %v1079
    %v1093 = vmul.f32 1.0, %v1092
    %v1094 = vrcp.pop %v1080
    %v1095 = vmul.f32 1.0, %v1094
    %v1096 = vrcp.pop %v1081
    %v1097 = vmul.f32 1.0, %v1096
    %v1098 = vadd.f32 %v1023, %v475
    %v1100 = vrot.slane %v1098, 1
    %v1101 = vrot.slane %v1098, 2
    %v1102 = vrot.slane %v1098, 3
    %v1103 = vrot.slane %v1098, 4
    %v1104 = vrot.slane %v1098, 5
    %v1105 = vrot.slane %v1098, 6
    %v1106 = vrot.slane %v1098, 7
    %1107 = vrot.lane.b32.xlu0 %v1098, 64
    %v1108 = vpop.permute.xlu0 %1107
    %1109 = vrot.lane.b32.xlu0 %v1100, 64
    %v1110 = vpop.permute.xlu0 %1109
    %1111 = vrot.lane.b32.xlu0 %v1101, 64
    %v1112 = vpop.permute.xlu0 %1111
    %1113 = vrot.lane.b32.xlu0 %v1102, 64
    %v1114 = vpop.permute.xlu0 %1113
    %1115 = vrot.lane.b32.xlu0 %v1103, 64
    %v1116 = vpop.permute.xlu0 %1115
    %1117 = vrot.lane.b32.xlu0 %v1104, 64
    %v1118 = vpop.permute.xlu0 %1117
    %1119 = vrot.lane.b32.xlu0 %v1105, 64
    %v1120 = vpop.permute.xlu0 %1119
    %1121 = vrot.lane.b32.xlu0 %v1106, 64
    %v1122 = vpop.permute.xlu0 %1121
    %v1131 = vmul.f32 %v1083, %v1108
    %v1132 = vmul.f32 %v1085, %v1110
    %v1133 = vmul.f32 %v1087, %v1112
    %v1134 = vmul.f32 %v1089, %v1114
    %v1135 = vmul.f32 %v1091, %v1116
    %v1136 = vmul.f32 %v1093, %v1118
    %v1137 = vmul.f32 %v1095, %v1120
    %v1138 = vmul.f32 %v1097, %v1122
    %1147 = vrot.lane.b32.xlu0 %v1131, 64
    %v1148 = vpop.permute.xlu0 %1147
    %1149 = vrot.lane.b32.xlu0 %v1132, 64
    %v1150 = vpop.permute.xlu0 %1149
    %1151 = vrot.lane.b32.xlu0 %v1133, 64
    %v1152 = vpop.permute.xlu0 %1151
    %1153 = vrot.lane.b32.xlu0 %v1134, 64
    %v1154 = vpop.permute.xlu0 %1153
    %1155 = vrot.lane.b32.xlu0 %v1135, 64
    %v1156 = vpop.permute.xlu0 %1155
    %1157 = vrot.lane.b32.xlu0 %v1136, 64
    %v1158 = vpop.permute.xlu0 %1157
    %1159 = vrot.lane.b32.xlu0 %v1137, 64
    %v1160 = vpop.permute.xlu0 %1159
    %1161 = vrot.lane.b32.xlu0 %v1138, 64
    %v1162 = vpop.permute.xlu0 %1161
    %v1171 = vadd.f32 %v948, %v1148
    %v1172 = vadd.f32 %v949, %v1150
    %v1173 = vadd.f32 %v950, %v1152
    %v1174 = vadd.f32 %v951, %v1154
    %v1175 = vadd.f32 %v952, %v1156
    %v1176 = vadd.f32 %v953, %v1158
    %v1177 = vadd.f32 %v954, %v1160
    %v1178 = vadd.f32 %v955, %v1162
    %v1179 = vtanh.pop %v1171
    %v1180 = vtanh.pop %v1172
    %v1181 = vtanh.pop %v1173
    %v1182 = vtanh.pop %v1174
    %v1183 = vtanh.pop %v1175
    %v1184 = vtanh.pop %v1176
    %v1185 = vtanh.pop %v1177
    %v1186 = vtanh.pop %v1178
    %v1187 = vsub.f32 1.0, %v1083
    %v1188 = vsub.f32 1.0, %v1085
    %v1189 = vsub.f32 1.0, %v1087
    %v1190 = vsub.f32 1.0, %v1089
    %v1191 = vsub.f32 1.0, %v1091
    %v1192 = vsub.f32 1.0, %v1093
    %v1193 = vsub.f32 1.0, %v1095
    %v1194 = vsub.f32 1.0, %v1097
    %1203 = vrot.lane.b32.xlu0 %v1179, 96
    %v1204 = vpop.permute.xlu0 %1203
    %1205 = vrot.lane.b32.xlu0 %v1180, 96
    %v1206 = vpop.permute.xlu0 %1205
    %1207 = vrot.lane.b32.xlu0 %v1181, 96
    %v1208 = vpop.permute.xlu0 %1207
    %1209 = vrot.lane.b32.xlu0 %v1182, 96
    %v1210 = vpop.permute.xlu0 %1209
    %1211 = vrot.lane.b32.xlu0 %v1183, 96
    %v1212 = vpop.permute.xlu0 %1211
    %1213 = vrot.lane.b32.xlu0 %v1184, 96
    %v1214 = vpop.permute.xlu0 %1213
    %1215 = vrot.lane.b32.xlu0 %v1185, 96
    %v1216 = vpop.permute.xlu0 %1215
    %1217 = vrot.lane.b32.xlu0 %v1186, 96
    %v1218 = vpop.permute.xlu0 %1217
    %v1227 = vmul.f32 %v1187, %v1204
    %v1228 = vmul.f32 %v1188, %v1206
    %v1229 = vmul.f32 %v1189, %v1208
    %v1230 = vmul.f32 %v1190, %v1210
    %v1231 = vmul.f32 %v1191, %v1212
    %v1232 = vmul.f32 %v1192, %v1214
    %v1233 = vmul.f32 %v1193, %v1216
    %v1234 = vmul.f32 %v1194, %v1218
    %v1235 = vmul.f32 %v1083, %v622
    %v1236 = vmul.f32 %v1085, %v623
    %v1237 = vmul.f32 %v1087, %v624
    %v1238 = vmul.f32 %v1089, %v625
    %v1239 = vmul.f32 %v1091, %v626
    %v1240 = vmul.f32 %v1093, %v627
    %v1241 = vmul.f32 %v1095, %v628
    %v1242 = vmul.f32 %v1097, %v629
    %v1243 = vadd.f32 %v1227, %v1235
    %v1244 = vadd.f32 %v1228, %v1236
    %v1245 = vadd.f32 %v1229, %v1237
    %v1246 = vadd.f32 %v1230, %v1238
    %v1247 = vadd.f32 %v1231, %v1239
    %v1248 = vadd.f32 %v1232, %v1240
    %v1249 = vadd.f32 %v1233, %v1241
    %v1250 = vadd.f32 %v1234, %v1242
    %v1259 = vrot.slane %v1244, 7
    %v1260 = vsel %vm639, %v1259, %v1243
    %v1261 = vrot.slane %v1245, 6
    %v1262 = vsel %vm642, %v1261, %v1260
    %v1263 = vrot.slane %v1246, 5
    %v1264 = vsel %vm645, %v1263, %v1262
    %v1265 = vrot.slane %v1247, 4
    %v1266 = vsel %vm648, %v1265, %v1264
    %v1267 = vrot.slane %v1248, 3
    %v1268 = vsel %vm651, %v1267, %v1266
    %v1269 = vrot.slane %v1249, 2
    %v1270 = vsel %vm654, %v1269, %v1268
    %v1271 = vrot.slane %v1250, 1
    %v1272 = vsel %vm657, %v1271, %v1270
    %1273 = vrot.lane.b32.xlu0 %v1272, 96
    %v1274 = vpop.permute.xlu0 %1273
    %v1275 = vsel %vm182, %v1274, 0
    %1277 = vmatprep.subr.mxu0 0.0
    %1278 = vmatpush1.msra.mxu0 0.0
    %1279 = vmatprep.subr.mxu0 0.0
    %1280 = vmatpush1.msra.mxu0 0.0
    %1281 = vmatprep.subr.mxu0 0.0
    %1282 = vmatpush1.msra.mxu0 0.0
    %1283 = vmatprep.subr.mxu0 0.0
    %1284 = vmatpush1.msra.mxu0 0.0
    %1285 = vmatprep.subr.mxu0 0.0
    %1286 = vmatpush1.msra.mxu0 0.0
    %1287 = vmatprep.subr.mxu0 0.0
    %1288 = vmatpush1.msra.mxu0 0.0
    %1289 = vmatprep.subr.mxu0 0.0
    %1290 = vmatpush1.msra.mxu0 0.0
    %1291 = vmatprep.subr.mxu0 0.0
    %1292 = vmatpush1.msra.mxu0 0.0
    %1293 = vmatprep.subr.mxu0 0.0
    %1294 = vmatpush1.msra.mxu0 0.0
    %1295 = vmatprep.subr.mxu0 0.0
    %1296 = vmatpush1.msra.mxu0 0.0
    %1297 = vmatprep.subr.mxu0 0.0
    %1298 = vmatpush1.msra.mxu0 0.0
    %1299 = vmatprep.subr.mxu0 0.0
    %1300 = vmatpush1.msra.mxu0 0.0
    %1301 = vmatprep.subr.mxu0 0.0
    %1302 = vmatpush1.msra.mxu0 %v139
    %1303 = vmatprep.subr.mxu0 0.0
    %1304 = vmatpush1.msra.mxu0 %v138
    %1305 = vmatprep.subr.mxu0 0.0
    %1306 = vmatpush1.msra.mxu0 %v137
    %1307 = vmatprep.subr.mxu0 0.0
    %1308 = vmatpush1.msra.mxu0 %v136
    %1309 = vmatprep.subr.mxu0 0.0
    %1310 = vmatpush2.msra.mxu0 0.0
    %1311 = vmatprep.subr.mxu0 0.0
    %1312 = vmatpush2.msra.mxu0 0.0
    %1313 = vmatprep.subr.mxu0 0.0
    %1314 = vmatpush2.msra.mxu0 0.0
    %1315 = vmatprep.subr.mxu0 0.0
    %1316 = vmatpush2.msra.mxu0 0.0
    %1317 = vmatprep.subr.mxu0 0.0
    %1318 = vmatpush2.msra.mxu0 0.0
    %1319 = vmatprep.subr.mxu0 0.0
    %1320 = vmatpush2.msra.mxu0 0.0
    %1321 = vmatprep.subr.mxu0 0.0
    %1322 = vmatpush2.msra.mxu0 0.0
    %1323 = vmatprep.subr.mxu0 0.0
    %1324 = vmatpush2.msra.mxu0 0.0
    %1325 = vmatprep.subr.mxu0 0.0
    %1326 = vmatpush2.msra.mxu0 0.0
    %1327 = vmatprep.subr.mxu0 0.0
    %1328 = vmatpush2.msra.mxu0 0.0
    %1329 = vmatprep.subr.mxu0 0.0
    %1330 = vmatpush2.msra.mxu0 0.0
    %1331 = vmatprep.subr.mxu0 0.0
    %1332 = vmatpush2.msra.mxu0 0.0
    %1333 = vmatprep.subr.mxu0 0.0
    %1334 = vmatpush2.msra.mxu0 0.0
    %1335 = vmatprep.subr.mxu0 0.0
    %1336 = vmatpush2.msra.mxu0 0.0
    %1337 = vmatprep.subr.mxu0 0.0
    %1338 = vmatpush2.msra.mxu0 0.0
    %1339 = vmatprep.subr.mxu0 0.0
    %1340 = vmatpush2.msra.mxu0 0.0
    %1341 = vmatprep.mubr.f32.mxu0 0.0
    %1342 = vmatmul.mubr.f32.gmra.mxu0 %v1275
    %v1343 = vpop.f32.mrf.mxu0
    %v1344 = vadd.f32 %v153, %v1343
    %v1345 = vpop.f32.mrf.mxu0
    %1346 = vdwg.mxu0
    %1347 = vrot.lane.b32.xlu0 %v832, 96
    %v1348 = vpop.permute.xlu0 %1347
    %v1349 = vsel %vm182, %v1348, 0
    %1351 = vmatprep.subr.mxu0 0.0
    %1352 = vmatpush1.msra.mxu0 0.0
    %1353 = vmatprep.subr.mxu0 0.0
    %1354 = vmatpush1.msra.mxu0 0.0
    %1355 = vmatprep.subr.mxu0 0.0
    %1356 = vmatpush1.msra.mxu0 0.0
    %1357 = vmatprep.subr.mxu0 0.0
    %1358 = vmatpush1.msra.mxu0 0.0
    %1359 = vmatprep.subr.mxu0 0.0
    %1360 = vmatpush1.msra.mxu0 0.0
    %1361 = vmatprep.subr.mxu0 0.0
    %1362 = vmatpush1.msra.mxu0 0.0
    %1363 = vmatprep.subr.mxu0 0.0
    %1364 = vmatpush1.msra.mxu0 0.0
    %1365 = vmatprep.subr.mxu0 0.0
    %1366 = vmatpush1.msra.mxu0 0.0
    %1367 = vmatprep.subr.mxu0 0.0
    %1368 = vmatpush1.msra.mxu0 0.0
    %1369 = vmatprep.subr.mxu0 0.0
    %1370 = vmatpush1.msra.mxu0 0.0
    %1371 = vmatprep.subr.mxu0 0.0
    %1372 = vmatpush1.msra.mxu0 0.0
    %1373 = vmatprep.subr.mxu0 0.0
    %1374 = vmatpush1.msra.mxu0 0.0
    %1375 = vmatprep.subr.mxu0 0.0
    %1376 = vmatpush1.msra.mxu0 %v147
    %1377 = vmatprep.subr.mxu0 0.0
    %1378 = vmatpush1.msra.mxu0 %v146
    %1379 = vmatprep.subr.mxu0 0.0
    %1380 = vmatpush1.msra.mxu0 %v145
    %1381 = vmatprep.subr.mxu0 0.0
    %1382 = vmatpush1.msra.mxu0 %v144
    %1383 = vmatprep.subr.mxu0 0.0
    %1384 = vmatpush2.msra.mxu0 0.0
    %1385 = vmatprep.subr.mxu0 0.0
    %1386 = vmatpush2.msra.mxu0 0.0
    %1387 = vmatprep.subr.mxu0 0.0
    %1388 = vmatpush2.msra.mxu0 0.0
    %1389 = vmatprep.subr.mxu0 0.0
    %1390 = vmatpush2.msra.mxu0 0.0
    %1391 = vmatprep.subr.mxu0 0.0
    %1392 = vmatpush2.msra.mxu0 0.0
    %1393 = vmatprep.subr.mxu0 0.0
    %1394 = vmatpush2.msra.mxu0 0.0
    %1395 = vmatprep.subr.mxu0 0.0
    %1396 = vmatpush2.msra.mxu0 0.0
    %1397 = vmatprep.subr.mxu0 0.0
    %1398 = vmatpush2.msra.mxu0 0.0
    %1399 = vmatprep.subr.mxu0 0.0
    %1400 = vmatpush2.msra.mxu0 0.0
    %1401 = vmatprep.subr.mxu0 0.0
    %1402 = vmatpush2.msra.mxu0 0.0
    %1403 = vmatprep.subr.mxu0 0.0
    %1404 = vmatpush2.msra.mxu0 0.0
    %1405 = vmatprep.subr.mxu0 0.0
    %1406 = vmatpush2.msra.mxu0 0.0
    %1407 = vmatprep.subr.mxu0 0.0
    %1408 = vmatpush2.msra.mxu0 0.0
    %1409 = vmatprep.subr.mxu0 0.0
    %1410 = vmatpush2.msra.mxu0 0.0
    %1411 = vmatprep.subr.mxu0 0.0
    %1412 = vmatpush2.msra.mxu0 0.0
    %1413 = vmatprep.subr.mxu0 0.0
    %1414 = vmatpush2.msra.mxu0 0.0
    %1415 = vmatprep.mubr.f32.mxu0 0.0
    %1416 = vmatmul.mubr.f32.gmra.mxu0 %v1349
    %v1417 = vpop.f32.mrf.mxu0
    %v1418 = vadd.f32 0.0, %v1417
    %v1419 = vpop.f32.mrf.mxu0
    %1420 = vdwg.mxu0
    %v1421 = vadd.f32 %v1344, %v1418
    %v1422 = vxor.u32 %v1421, 2147483648
    %v1423 = vmul.f32 %v1422, 1.442695
    %v1424 = vpow.pop %v1423
    %v1425 = vadd.f32 %v1424, 1.0
    %v1426 = vrcp.pop %v1425
    %v1427 = vmul.f32 1.0, %v1426
    %v1428 = vadd.f32 %v1418, %v811
    %1430 = vrot.lane.b32.xlu0 %v1428, 64
    %v1431 = vpop.permute.xlu0 %1430
    %v1433 = vmul.f32 %v1427, %v1431
    %1435 = vrot.lane.b32.xlu0 %v1433, 64
    %v1436 = vpop.permute.xlu0 %1435
    %v1438 = vadd.f32 %v1344, %v1436
    %v1439 = vtanh.pop %v1438
    %v1440 = vsub.f32 1.0, %v1427
    %1442 = vrot.lane.b32.xlu0 %v1439, 96
    %v1443 = vpop.permute.xlu0 %1442
    %v1445 = vmul.f32 %v1440, %v1443
    %v1446 = vmul.f32 %v1427, %v832
    %v1447 = vadd.f32 %v1445, %v1446
    %v1449 = vcombine.high %v1447, %v1447
    %v1451 = vunpack.c.l.s4 1966171168
    %v1452 = vunpack.c.0.s8 %v1451
    %v1453 = vlaneseq
    %v1454 = vshrl.u32 %v1453, 7
    %v1455 = vsub.s32 %v1452, %v1454
    %v1456 = vrot.slane %v1447, %v1455
    %v1458 = vunpack.c.l.s4 1966171168
    %v1459 = vunpack.c.0.s8 %v1458
    %v1460 = vlaneseq
    %v1461 = vshrl.u32 %v1460, 7
    %v1462 = vsub.s32 %v1459, %v1461
    %v1463 = vrot.slane %v1449, %v1462
    %v1464 = vcombine.high %v1456, %v1456
    %v1465 = vcombine.high %v1463, %v1463
    %v1467 = vunpack.c.l.s4 1966171168
    %v1468 = vunpack.c.0.s8 %v1467
    %v1469 = vlaneseq
    %v1470 = vshrl.u32 %v1469, 7
    %v1471 = vsub.s32 %v1468, %v1470
    %v1472 = vrot.slane %v1456, %v1471
    %v1474 = vunpack.c.l.s4 1966171168
    %v1475 = vunpack.c.0.s8 %v1474
    %v1476 = vlaneseq
    %v1477 = vshrl.u32 %v1476, 7
    %v1478 = vsub.s32 %v1475, %v1477
    %v1479 = vrot.slane %v1463, %v1478
    %v1481 = vunpack.c.l.s4 1966171168
    %v1482 = vunpack.c.0.s8 %v1481
    %v1483 = vlaneseq
    %v1484 = vshrl.u32 %v1483, 7
    %v1485 = vsub.s32 %v1482, %v1484
    %v1486 = vrot.slane %v1464, %v1485
    %v1488 = vunpack.c.l.s4 1966171168
    %v1489 = vunpack.c.0.s8 %v1488
    %v1490 = vlaneseq
    %v1491 = vshrl.u32 %v1490, 7
    %v1492 = vsub.s32 %v1489, %v1491
    %v1493 = vrot.slane %v1465, %v1492
    %v1494 = vcombine.high %v1472, %v1472
    %v1495 = vcombine.high %v1479, %v1479
    %v1496 = vcombine.high %v1486, %v1486
    %v1497 = vcombine.high %v1493, %v1493
    %v1498 = vlaneseq
    %v1499 = vshrl.u32 %v1498, 7
    %v1500 = vsub.s32 0, %v1499
    %v1501 = vrot.slane %v1472, %v1500
    %v1502 = vlaneseq
    %v1503 = vshrl.u32 %v1502, 7
    %v1504 = vsub.s32 0, %v1503
    %v1505 = vrot.slane %v1486, %v1504
    %v1506 = vlaneseq
    %v1507 = vshrl.u32 %v1506, 7
    %v1508 = vsub.s32 0, %v1507
    %v1509 = vrot.slane %v1494, %v1508
    %v1510 = vlaneseq
    %v1511 = vshrl.u32 %v1510, 7
    %v1512 = vsub.s32 0, %v1511
    %v1513 = vrot.slane %v1496, %v1512
    %v1514 = vlaneseq
    %v1515 = vshrl.u32 %v1514, 7
    %v1516 = vsub.s32 0, %v1515
    %v1517 = vrot.slane %v1479, %v1516
    %v1518 = vlaneseq
    %v1519 = vshrl.u32 %v1518, 7
    %v1520 = vsub.s32 0, %v1519
    %v1521 = vrot.slane %v1493, %v1520
    %v1522 = vlaneseq
    %v1523 = vshrl.u32 %v1522, 7
    %v1524 = vsub.s32 0, %v1523
    %v1525 = vrot.slane %v1495, %v1524
    %v1526 = vlaneseq
    %v1527 = vshrl.u32 %v1526, 7
    %v1528 = vsub.s32 0, %v1527
    %v1529 = vrot.slane %v1497, %v1528
    %1530 = vrot.lane.b32.xlu0 %v1501, 96
    %v1531 = vpop.permute.xlu0 %1530
    %1532 = vrot.lane.b32.xlu0 %v1505, 96
    %v1533 = vpop.permute.xlu0 %1532
    %1534 = vrot.lane.b32.xlu0 %v1509, 96
    %v1535 = vpop.permute.xlu0 %1534
    %1536 = vrot.lane.b32.xlu0 %v1513, 96
    %v1537 = vpop.permute.xlu0 %1536
    %1538 = vrot.lane.b32.xlu0 %v1517, 96
    %v1539 = vpop.permute.xlu0 %1538
    %1540 = vrot.lane.b32.xlu0 %v1521, 96
    %v1541 = vpop.permute.xlu0 %1540
    %1542 = vrot.lane.b32.xlu0 %v1525, 96
    %v1543 = vpop.permute.xlu0 %1542
    %1544 = vrot.lane.b32.xlu0 %v1529, 96
    %v1545 = vpop.permute.xlu0 %1544
    %1554 = vst.msk [vmem:[#allocation3 + $0x1] sm:$0x1] %vm939, %v1531
    %1555 = vst.msk [vmem:[#allocation3 + $0x9] sm:$0x1] %vm939, %v1533
    %1556 = vst.msk [vmem:[#allocation3 + $0x11] sm:$0x1] %vm939, %v1535
    %1557 = vst.msk [vmem:[#allocation3 + $0x19] sm:$0x1] %vm939, %v1537
    %1558 = vst.msk [vmem:[#allocation3 + $0x21] sm:$0x1] %vm939, %v1539
    %1559 = vst.msk [vmem:[#allocation3 + $0x29] sm:$0x1] %vm939, %v1541
    %1560 = vst.msk [vmem:[#allocation3 + $0x31] sm:$0x1] %vm939, %v1543
    %1561 = vst.msk [vmem:[#allocation3 + $0x39] sm:$0x1] %vm939, %v1545
    %v1562 = vld [vmem:[#allocation2 + $0x2] sm:$0x1]
    %v1563 = vld [vmem:[#allocation2 + $0xa] sm:$0x1]
    %v1564 = vld [vmem:[#allocation2 + $0x12] sm:$0x1]
    %v1565 = vld [vmem:[#allocation2 + $0x1a] sm:$0x1]
    %v1566 = vld [vmem:[#allocation2 + $0x22] sm:$0x1]
    %v1567 = vld [vmem:[#allocation2 + $0x2a] sm:$0x1]
    %v1568 = vld [vmem:[#allocation2 + $0x32] sm:$0x1]
    %v1569 = vld [vmem:[#allocation2 + $0x3a] sm:$0x1]
    %1570 = vmatprep.subr.mxu0 0.0
    %1571 = vmatpush1.msra.mxu0 0.0
    %1572 = vmatprep.subr.mxu0 0.0
    %1573 = vmatpush1.msra.mxu0 0.0
    %1574 = vmatprep.subr.mxu0 0.0
    %1575 = vmatpush1.msra.mxu0 0.0
    %1576 = vmatprep.subr.mxu0 0.0
    %1577 = vmatpush1.msra.mxu0 0.0
    %1578 = vmatprep.subr.mxu0 0.0
    %1579 = vmatpush1.msra.mxu0 0.0
    %1580 = vmatprep.subr.mxu0 0.0
    %1581 = vmatpush1.msra.mxu0 0.0
    %1582 = vmatprep.subr.mxu0 0.0
    %1583 = vmatpush1.msra.mxu0 0.0
    %1584 = vmatprep.subr.mxu0 0.0
    %1585 = vmatpush1.msra.mxu0 0.0
    %1586 = vmatprep.subr.mxu0 0.0
    %1587 = vmatpush1.msra.mxu0 0.0
    %1588 = vmatprep.subr.mxu0 0.0
    %1589 = vmatpush1.msra.mxu0 0.0
    %1590 = vmatprep.subr.mxu0 0.0
    %1591 = vmatpush1.msra.mxu0 0.0
    %1592 = vmatprep.subr.mxu0 0.0
    %1593 = vmatpush1.msra.mxu0 0.0
    %1594 = vmatprep.subr.mxu0 0.0
    %1595 = vmatpush1.msra.mxu0 %v143
    %1596 = vmatprep.subr.mxu0 0.0
    %1597 = vmatpush1.msra.mxu0 %v142
    %1598 = vmatprep.subr.mxu0 0.0
    %1599 = vmatpush1.msra.mxu0 %v141
    %1600 = vmatprep.subr.mxu0 0.0
    %1601 = vmatpush1.msra.mxu0 %v140
    %1602 = vmatprep.subr.mxu0 0.0
    %1603 = vmatpush2.msra.mxu0 0.0
    %1604 = vmatprep.subr.mxu0 0.0
    %1605 = vmatpush2.msra.mxu0 0.0
    %1606 = vmatprep.subr.mxu0 0.0
    %1607 = vmatpush2.msra.mxu0 0.0
    %1608 = vmatprep.subr.mxu0 0.0
    %1609 = vmatpush2.msra.mxu0 0.0
    %1610 = vmatprep.subr.mxu0 0.0
    %1611 = vmatpush2.msra.mxu0 0.0
    %1612 = vmatprep.subr.mxu0 0.0
    %1613 = vmatpush2.msra.mxu0 0.0
    %1614 = vmatprep.subr.mxu0 0.0
    %1615 = vmatpush2.msra.mxu0 0.0
    %1616 = vmatprep.subr.mxu0 0.0
    %1617 = vmatpush2.msra.mxu0 0.0
    %1618 = vmatprep.subr.mxu0 0.0
    %1619 = vmatpush2.msra.mxu0 0.0
    %1620 = vmatprep.subr.mxu0 0.0
    %1621 = vmatpush2.msra.mxu0 0.0
    %1622 = vmatprep.subr.mxu0 0.0
    %1623 = vmatpush2.msra.mxu0 0.0
    %1624 = vmatprep.subr.mxu0 0.0
    %1625 = vmatpush2.msra.mxu0 0.0
    %1626 = vmatprep.subr.mxu0 0.0
    %1627 = vmatpush2.msra.mxu0 0.0
    %1628 = vmatprep.subr.mxu0 0.0
    %1629 = vmatpush2.msra.mxu0 0.0
    %1630 = vmatprep.subr.mxu0 0.0
    %1631 = vmatpush2.msra.mxu0 0.0
    %1632 = vmatprep.subr.mxu0 0.0
    %1633 = vmatpush2.msra.mxu0 0.0
    %1634 = vmatprep.mubr.f32.mxu0 0.0
    %1635 = vmatmul.mubr.f32.gmra.mxu0 %v1275
    %v1636 = vpop.f32.mrf.mxu0
    %v1637 = vadd.f32 0.0, %v1636
    %v1638 = vpop.f32.mrf.mxu0
    %1639 = vdwg.mxu0
    %v1641 = vrot.slane %v1637, 1
    %v1642 = vrot.slane %v1637, 2
    %v1643 = vrot.slane %v1637, 3
    %v1644 = vrot.slane %v1637, 4
    %v1645 = vrot.slane %v1637, 5
    %v1646 = vrot.slane %v1637, 6
    %v1647 = vrot.slane %v1637, 7
    %v1656 = vadd.f32 %v1562, %v1637
    %v1657 = vadd.f32 %v1563, %v1641
    %v1658 = vadd.f32 %v1564, %v1642
    %v1659 = vadd.f32 %v1565, %v1643
    %v1660 = vadd.f32 %v1566, %v1644
    %v1661 = vadd.f32 %v1567, %v1645
    %v1662 = vadd.f32 %v1568, %v1646
    %v1663 = vadd.f32 %v1569, %v1647
    %v1664 = vxor.u32 %v1656, 2147483648
    %v1665 = vxor.u32 %v1657, 2147483648
    %v1666 = vxor.u32 %v1658, 2147483648
    %v1667 = vxor.u32 %v1659, 2147483648
    %v1668 = vxor.u32 %v1660, 2147483648
    %v1669 = vxor.u32 %v1661, 2147483648
    %v1670 = vxor.u32 %v1662, 2147483648
    %v1671 = vxor.u32 %v1663, 2147483648
    %v1672 = vmul.f32 %v1664, 1.442695
    %v1673 = vpow.pop %v1672
    %v1674 = vmul.f32 %v1665, 1.442695
    %v1675 = vpow.pop %v1674
    %v1676 = vmul.f32 %v1666, 1.442695
    %v1677 = vpow.pop %v1676
    %v1678 = vmul.f32 %v1667, 1.442695
    %v1679 = vpow.pop %v1678
    %v1680 = vmul.f32 %v1668, 1.442695
    %v1681 = vpow.pop %v1680
    %v1682 = vmul.f32 %v1669, 1.442695
    %v1683 = vpow.pop %v1682
    %v1684 = vmul.f32 %v1670, 1.442695
    %v1685 = vpow.pop %v1684
    %v1686 = vmul.f32 %v1671, 1.442695
    %v1687 = vpow.pop %v1686
    %v1688 = vadd.f32 %v1673, 1.0
    %v1689 = vadd.f32 %v1675, 1.0
    %v1690 = vadd.f32 %v1677, 1.0
    %v1691 = vadd.f32 %v1679, 1.0
    %v1692 = vadd.f32 %v1681, 1.0
    %v1693 = vadd.f32 %v1683, 1.0
    %v1694 = vadd.f32 %v1685, 1.0
    %v1695 = vadd.f32 %v1687, 1.0
    %v1696 = vrcp.pop %v1688
    %v1697 = vmul.f32 1.0, %v1696
    %v1698 = vrcp.pop %v1689
    %v1699 = vmul.f32 1.0, %v1698
    %v1700 = vrcp.pop %v1690
    %v1701 = vmul.f32 1.0, %v1700
    %v1702 = vrcp.pop %v1691
    %v1703 = vmul.f32 1.0, %v1702
    %v1704 = vrcp.pop %v1692
    %v1705 = vmul.f32 1.0, %v1704
    %v1706 = vrcp.pop %v1693
    %v1707 = vmul.f32 1.0, %v1706
    %v1708 = vrcp.pop %v1694
    %v1709 = vmul.f32 1.0, %v1708
    %v1710 = vrcp.pop %v1695
    %v1711 = vmul.f32 1.0, %v1710
    %v1712 = vadd.f32 %v1637, %v475
    %v1714 = vrot.slane %v1712, 1
    %v1715 = vrot.slane %v1712, 2
    %v1716 = vrot.slane %v1712, 3
    %v1717 = vrot.slane %v1712, 4
    %v1718 = vrot.slane %v1712, 5
    %v1719 = vrot.slane %v1712, 6
    %v1720 = vrot.slane %v1712, 7
    %1721 = vrot.lane.b32.xlu0 %v1712, 64
    %v1722 = vpop.permute.xlu0 %1721
    %1723 = vrot.lane.b32.xlu0 %v1714, 64
    %v1724 = vpop.permute.xlu0 %1723
    %1725 = vrot.lane.b32.xlu0 %v1715, 64
    %v1726 = vpop.permute.xlu0 %1725
    %1727 = vrot.lane.b32.xlu0 %v1716, 64
    %v1728 = vpop.permute.xlu0 %1727
    %1729 = vrot.lane.b32.xlu0 %v1717, 64
    %v1730 = vpop.permute.xlu0 %1729
    %1731 = vrot.lane.b32.xlu0 %v1718, 64
    %v1732 = vpop.permute.xlu0 %1731
    %1733 = vrot.lane.b32.xlu0 %v1719, 64
    %v1734 = vpop.permute.xlu0 %1733
    %1735 = vrot.lane.b32.xlu0 %v1720, 64
    %v1736 = vpop.permute.xlu0 %1735
    %v1745 = vmul.f32 %v1697, %v1722
    %v1746 = vmul.f32 %v1699, %v1724
    %v1747 = vmul.f32 %v1701, %v1726
    %v1748 = vmul.f32 %v1703, %v1728
    %v1749 = vmul.f32 %v1705, %v1730
    %v1750 = vmul.f32 %v1707, %v1732
    %v1751 = vmul.f32 %v1709, %v1734
    %v1752 = vmul.f32 %v1711, %v1736
    %1761 = vrot.lane.b32.xlu0 %v1745, 64
    %v1762 = vpop.permute.xlu0 %1761
    %1763 = vrot.lane.b32.xlu0 %v1746, 64
    %v1764 = vpop.permute.xlu0 %1763
    %1765 = vrot.lane.b32.xlu0 %v1747, 64
    %v1766 = vpop.permute.xlu0 %1765
    %1767 = vrot.lane.b32.xlu0 %v1748, 64
    %v1768 = vpop.permute.xlu0 %1767
    %1769 = vrot.lane.b32.xlu0 %v1749, 64
    %v1770 = vpop.permute.xlu0 %1769
    %1771 = vrot.lane.b32.xlu0 %v1750, 64
    %v1772 = vpop.permute.xlu0 %1771
    %1773 = vrot.lane.b32.xlu0 %v1751, 64
    %v1774 = vpop.permute.xlu0 %1773
    %1775 = vrot.lane.b32.xlu0 %v1752, 64
    %v1776 = vpop.permute.xlu0 %1775
    %v1785 = vadd.f32 %v1562, %v1762
    %v1786 = vadd.f32 %v1563, %v1764
    %v1787 = vadd.f32 %v1564, %v1766
    %v1788 = vadd.f32 %v1565, %v1768
    %v1789 = vadd.f32 %v1566, %v1770
    %v1790 = vadd.f32 %v1567, %v1772
    %v1791 = vadd.f32 %v1568, %v1774
    %v1792 = vadd.f32 %v1569, %v1776
    %v1793 = vtanh.pop %v1785
    %v1794 = vtanh.pop %v1786
    %v1795 = vtanh.pop %v1787
    %v1796 = vtanh.pop %v1788
    %v1797 = vtanh.pop %v1789
    %v1798 = vtanh.pop %v1790
    %v1799 = vtanh.pop %v1791
    %v1800 = vtanh.pop %v1792
    %v1801 = vsub.f32 1.0, %v1697
    %v1802 = vsub.f32 1.0, %v1699
    %v1803 = vsub.f32 1.0, %v1701
    %v1804 = vsub.f32 1.0, %v1703
    %v1805 = vsub.f32 1.0, %v1705
    %v1806 = vsub.f32 1.0, %v1707
    %v1807 = vsub.f32 1.0, %v1709
    %v1808 = vsub.f32 1.0, %v1711
    %1817 = vrot.lane.b32.xlu0 %v1793, 96
    %v1818 = vpop.permute.xlu0 %1817
    %1819 = vrot.lane.b32.xlu0 %v1794, 96
    %v1820 = vpop.permute.xlu0 %1819
    %1821 = vrot.lane.b32.xlu0 %v1795, 96
    %v1822 = vpop.permute.xlu0 %1821
    %1823 = vrot.lane.b32.xlu0 %v1796, 96
    %v1824 = vpop.permute.xlu0 %1823
    %1825 = vrot.lane.b32.xlu0 %v1797, 96
    %v1826 = vpop.permute.xlu0 %1825
    %1827 = vrot.lane.b32.xlu0 %v1798, 96
    %v1828 = vpop.permute.xlu0 %1827
    %1829 = vrot.lane.b32.xlu0 %v1799, 96
    %v1830 = vpop.permute.xlu0 %1829
    %1831 = vrot.lane.b32.xlu0 %v1800, 96
    %v1832 = vpop.permute.xlu0 %1831
    %v1841 = vmul.f32 %v1801, %v1818
    %v1842 = vmul.f32 %v1802, %v1820
    %v1843 = vmul.f32 %v1803, %v1822
    %v1844 = vmul.f32 %v1804, %v1824
    %v1845 = vmul.f32 %v1805, %v1826
    %v1846 = vmul.f32 %v1806, %v1828
    %v1847 = vmul.f32 %v1807, %v1830
    %v1848 = vmul.f32 %v1808, %v1832
    %v1849 = vmul.f32 %v1697, %v1243
    %v1850 = vmul.f32 %v1699, %v1244
    %v1851 = vmul.f32 %v1701, %v1245
    %v1852 = vmul.f32 %v1703, %v1246
    %v1853 = vmul.f32 %v1705, %v1247
    %v1854 = vmul.f32 %v1707, %v1248
    %v1855 = vmul.f32 %v1709, %v1249
    %v1856 = vmul.f32 %v1711, %v1250
    %v1857 = vadd.f32 %v1841, %v1849
    %v1858 = vadd.f32 %v1842, %v1850
    %v1859 = vadd.f32 %v1843, %v1851
    %v1860 = vadd.f32 %v1844, %v1852
    %v1861 = vadd.f32 %v1845, %v1853
    %v1862 = vadd.f32 %v1846, %v1854
    %v1863 = vadd.f32 %v1847, %v1855
    %v1864 = vadd.f32 %v1848, %v1856
    %v1873 = vrot.slane %v1858, 7
    %v1874 = vsel %vm639, %v1873, %v1857
    %v1875 = vrot.slane %v1859, 6
    %v1876 = vsel %vm642, %v1875, %v1874
    %v1877 = vrot.slane %v1860, 5
    %v1878 = vsel %vm645, %v1877, %v1876
    %v1879 = vrot.slane %v1861, 4
    %v1880 = vsel %vm648, %v1879, %v1878
    %v1881 = vrot.slane %v1862, 3
    %v1882 = vsel %vm651, %v1881, %v1880
    %v1883 = vrot.slane %v1863, 2
    %v1884 = vsel %vm654, %v1883, %v1882
    %v1885 = vrot.slane %v1864, 1
    %v1886 = vsel %vm657, %v1885, %v1884
    %1887 = vrot.lane.b32.xlu0 %v1886, 96
    %v1888 = vpop.permute.xlu0 %1887
    %v1889 = vsel %vm182, %v1888, 0
    %1891 = vmatprep.subr.mxu0 0.0
    %1892 = vmatpush1.msra.mxu0 0.0
    %1893 = vmatprep.subr.mxu0 0.0
    %1894 = vmatpush1.msra.mxu0 0.0
    %1895 = vmatprep.subr.mxu0 0.0
    %1896 = vmatpush1.msra.mxu0 0.0
    %1897 = vmatprep.subr.mxu0 0.0
    %1898 = vmatpush1.msra.mxu0 0.0
    %1899 = vmatprep.subr.mxu0 0.0
    %1900 = vmatpush1.msra.mxu0 0.0
    %1901 = vmatprep.subr.mxu0 0.0
    %1902 = vmatpush1.msra.mxu0 0.0
    %1903 = vmatprep.subr.mxu0 0.0
    %1904 = vmatpush1.msra.mxu0 0.0
    %1905 = vmatprep.subr.mxu0 0.0
    %1906 = vmatpush1.msra.mxu0 0.0
    %1907 = vmatprep.subr.mxu0 0.0
    %1908 = vmatpush1.msra.mxu0 0.0
    %1909 = vmatprep.subr.mxu0 0.0
    %1910 = vmatpush1.msra.mxu0 0.0
    %1911 = vmatprep.subr.mxu0 0.0
    %1912 = vmatpush1.msra.mxu0 0.0
    %1913 = vmatprep.subr.mxu0 0.0
    %1914 = vmatpush1.msra.mxu0 0.0
    %1915 = vmatprep.subr.mxu0 0.0
    %1916 = vmatpush1.msra.mxu0 %v139
    %1917 = vmatprep.subr.mxu0 0.0
    %1918 = vmatpush1.msra.mxu0 %v138
    %1919 = vmatprep.subr.mxu0 0.0
    %1920 = vmatpush1.msra.mxu0 %v137
    %1921 = vmatprep.subr.mxu0 0.0
    %1922 = vmatpush1.msra.mxu0 %v136
    %1923 = vmatprep.subr.mxu0 0.0
    %1924 = vmatpush2.msra.mxu0 0.0
    %1925 = vmatprep.subr.mxu0 0.0
    %1926 = vmatpush2.msra.mxu0 0.0
    %1927 = vmatprep.subr.mxu0 0.0
    %1928 = vmatpush2.msra.mxu0 0.0
    %1929 = vmatprep.subr.mxu0 0.0
    %1930 = vmatpush2.msra.mxu0 0.0
    %1931 = vmatprep.subr.mxu0 0.0
    %1932 = vmatpush2.msra.mxu0 0.0
    %1933 = vmatprep.subr.mxu0 0.0
    %1934 = vmatpush2.msra.mxu0 0.0
    %1935 = vmatprep.subr.mxu0 0.0
    %1936 = vmatpush2.msra.mxu0 0.0
    %1937 = vmatprep.subr.mxu0 0.0
    %1938 = vmatpush2.msra.mxu0 0.0
    %1939 = vmatprep.subr.mxu0 0.0
    %1940 = vmatpush2.msra.mxu0 0.0
    %1941 = vmatprep.subr.mxu0 0.0
    %1942 = vmatpush2.msra.mxu0 0.0
    %1943 = vmatprep.subr.mxu0 0.0
    %1944 = vmatpush2.msra.mxu0 0.0
    %1945 = vmatprep.subr.mxu0 0.0
    %1946 = vmatpush2.msra.mxu0 0.0
    %1947 = vmatprep.subr.mxu0 0.0
    %1948 = vmatpush2.msra.mxu0 0.0
    %1949 = vmatprep.subr.mxu0 0.0
    %1950 = vmatpush2.msra.mxu0 0.0
    %1951 = vmatprep.subr.mxu0 0.0
    %1952 = vmatpush2.msra.mxu0 0.0
    %1953 = vmatprep.subr.mxu0 0.0
    %1954 = vmatpush2.msra.mxu0 0.0
    %1955 = vmatprep.mubr.f32.mxu0 0.0
    %1956 = vmatmul.mubr.f32.gmra.mxu0 %v1889
    %v1957 = vpop.f32.mrf.mxu0
    %v1958 = vadd.f32 %v153, %v1957
    %v1959 = vpop.f32.mrf.mxu0
    %1960 = vdwg.mxu0
    %1961 = vrot.lane.b32.xlu0 %v1447, 96
    %v1962 = vpop.permute.xlu0 %1961
    %v1963 = vsel %vm182, %v1962, 0
    %1965 = vmatprep.subr.mxu0 0.0
    %1966 = vmatpush1.msra.mxu0 0.0
    %1967 = vmatprep.subr.mxu0 0.0
    %1968 = vmatpush1.msra.mxu0 0.0
    %1969 = vmatprep.subr.mxu0 0.0
    %1970 = vmatpush1.msra.mxu0 0.0
    %1971 = vmatprep.subr.mxu0 0.0
    %1972 = vmatpush1.msra.mxu0 0.0
    %1973 = vmatprep.subr.mxu0 0.0
    %1974 = vmatpush1.msra.mxu0 0.0
    %1975 = vmatprep.subr.mxu0 0.0
    %1976 = vmatpush1.msra.mxu0 0.0
    %1977 = vmatprep.subr.mxu0 0.0
    %1978 = vmatpush1.msra.mxu0 0.0
    %1979 = vmatprep.subr.mxu0 0.0
    %1980 = vmatpush1.msra.mxu0 0.0
    %1981 = vmatprep.subr.mxu0 0.0
    %1982 = vmatpush1.msra.mxu0 0.0
    %1983 = vmatprep.subr.mxu0 0.0
    %1984 = vmatpush1.msra.mxu0 0.0
    %1985 = vmatprep.subr.mxu0 0.0
    %1986 = vmatpush1.msra.mxu0 0.0
    %1987 = vmatprep.subr.mxu0 0.0
    %1988 = vmatpush1.msra.mxu0 0.0
    %1989 = vmatprep.subr.mxu0 0.0
    %1990 = vmatpush1.msra.mxu0 %v147
    %1991 = vmatprep.subr.mxu0 0.0
    %1992 = vmatpush1.msra.mxu0 %v146
    %1993 = vmatprep.subr.mxu0 0.0
    %1994 = vmatpush1.msra.mxu0 %v145
    %1995 = vmatprep.subr.mxu0 0.0
    %1996 = vmatpush1.msra.mxu0 %v144
    %1997 = vmatprep.subr.mxu0 0.0
    %1998 = vmatpush2.msra.mxu0 0.0
    %1999 = vmatprep.subr.mxu0 0.0
    %2000 = vmatpush2.msra.mxu0 0.0
    %2001 = vmatprep.subr.mxu0 0.0
    %2002 = vmatpush2.msra.mxu0 0.0
    %2003 = vmatprep.subr.mxu0 0.0
    %2004 = vmatpush2.msra.mxu0 0.0
    %2005 = vmatprep.subr.mxu0 0.0
    %2006 = vmatpush2.msra.mxu0 0.0
    %2007 = vmatprep.subr.mxu0 0.0
    %2008 = vmatpush2.msra.mxu0 0.0
    %2009 = vmatprep.subr.mxu0 0.0
    %2010 = vmatpush2.msra.mxu0 0.0
    %2011 = vmatprep.subr.mxu0 0.0
    %2012 = vmatpush2.msra.mxu0 0.0
    %2013 = vmatprep.subr.mxu0 0.0
    %2014 = vmatpush2.msra.mxu0 0.0
    %2015 = vmatprep.subr.mxu0 0.0
    %2016 = vmatpush2.msra.mxu0 0.0
    %2017 = vmatprep.subr.mxu0 0.0
    %2018 = vmatpush2.msra.mxu0 0.0
    %2019 = vmatprep.subr.mxu0 0.0
    %2020 = vmatpush2.msra.mxu0 0.0
    %2021 = vmatprep.subr.mxu0 0.0
    %2022 = vmatpush2.msra.mxu0 0.0
    %2023 = vmatprep.subr.mxu0 0.0
    %2024 = vmatpush2.msra.mxu0 0.0
    %2025 = vmatprep.subr.mxu0 0.0
    %2026 = vmatpush2.msra.mxu0 0.0
    %2027 = vmatprep.subr.mxu0 0.0
    %2028 = vmatpush2.msra.mxu0 0.0
    %2029 = vmatprep.mubr.f32.mxu0 0.0
    %2030 = vmatmul.mubr.f32.gmra.mxu0 %v1963
    %v2031 = vpop.f32.mrf.mxu0
    %v2032 = vadd.f32 0.0, %v2031
    %v2033 = vpop.f32.mrf.mxu0
    %2034 = vdwg.mxu0
    %v2035 = vadd.f32 %v1958, %v2032
    %v2036 = vxor.u32 %v2035, 2147483648
    %v2037 = vmul.f32 %v2036, 1.442695
    %v2038 = vpow.pop %v2037
    %v2039 = vadd.f32 %v2038, 1.0
    %v2040 = vrcp.pop %v2039
    %v2041 = vmul.f32 1.0, %v2040
    %v2042 = vadd.f32 %v2032, %v811
    %2044 = vrot.lane.b32.xlu0 %v2042, 64
    %v2045 = vpop.permute.xlu0 %2044
    %v2047 = vmul.f32 %v2041, %v2045
    %2049 = vrot.lane.b32.xlu0 %v2047, 64
    %v2050 = vpop.permute.xlu0 %2049
    %v2052 = vadd.f32 %v1958, %v2050
    %v2053 = vtanh.pop %v2052
    %v2054 = vsub.f32 1.0, %v2041
    %2056 = vrot.lane.b32.xlu0 %v2053, 96
    %v2057 = vpop.permute.xlu0 %2056
    %v2059 = vmul.f32 %v2054, %v2057
    %v2060 = vmul.f32 %v2041, %v1447
    %v2061 = vadd.f32 %v2059, %v2060
    %v2063 = vcombine.high %v2061, %v2061
    %v2065 = vunpack.c.l.s4 1966171168
    %v2066 = vunpack.c.0.s8 %v2065
    %v2067 = vlaneseq
    %v2068 = vshrl.u32 %v2067, 7
    %v2069 = vsub.s32 %v2066, %v2068
    %v2070 = vrot.slane %v2061, %v2069
    %v2072 = vunpack.c.l.s4 1966171168
    %v2073 = vunpack.c.0.s8 %v2072
    %v2074 = vlaneseq
    %v2075 = vshrl.u32 %v2074, 7
    %v2076 = vsub.s32 %v2073, %v2075
    %v2077 = vrot.slane %v2063, %v2076
    %v2078 = vcombine.high %v2070, %v2070
    %v2079 = vcombine.high %v2077, %v2077
    %v2081 = vunpack.c.l.s4 1966171168
    %v2082 = vunpack.c.0.s8 %v2081
    %v2083 = vlaneseq
    %v2084 = vshrl.u32 %v2083, 7
    %v2085 = vsub.s32 %v2082, %v2084
    %v2086 = vrot.slane %v2070, %v2085
    %v2088 = vunpack.c.l.s4 1966171168
    %v2089 = vunpack.c.0.s8 %v2088
    %v2090 = vlaneseq
    %v2091 = vshrl.u32 %v2090, 7
    %v2092 = vsub.s32 %v2089, %v2091
    %v2093 = vrot.slane %v2077, %v2092
    %v2095 = vunpack.c.l.s4 1966171168
    %v2096 = vunpack.c.0.s8 %v2095
    %v2097 = vlaneseq
    %v2098 = vshrl.u32 %v2097, 7
    %v2099 = vsub.s32 %v2096, %v2098
    %v2100 = vrot.slane %v2078, %v2099
    %v2102 = vunpack.c.l.s4 1966171168
    %v2103 = vunpack.c.0.s8 %v2102
    %v2104 = vlaneseq
    %v2105 = vshrl.u32 %v2104, 7
    %v2106 = vsub.s32 %v2103, %v2105
    %v2107 = vrot.slane %v2079, %v2106
    %v2108 = vcombine.high %v2086, %v2086
    %v2109 = vcombine.high %v2093, %v2093
    %v2110 = vcombine.high %v2100, %v2100
    %v2111 = vcombine.high %v2107, %v2107
    %v2112 = vlaneseq
    %v2113 = vshrl.u32 %v2112, 7
    %v2114 = vsub.s32 0, %v2113
    %v2115 = vrot.slane %v2086, %v2114
    %v2116 = vlaneseq
    %v2117 = vshrl.u32 %v2116, 7
    %v2118 = vsub.s32 0, %v2117
    %v2119 = vrot.slane %v2100, %v2118
    %v2120 = vlaneseq
    %v2121 = vshrl.u32 %v2120, 7
    %v2122 = vsub.s32 0, %v2121
    %v2123 = vrot.slane %v2108, %v2122
    %v2124 = vlaneseq
    %v2125 = vshrl.u32 %v2124, 7
    %v2126 = vsub.s32 0, %v2125
    %v2127 = vrot.slane %v2110, %v2126
    %v2128 = vlaneseq
    %v2129 = vshrl.u32 %v2128, 7
    %v2130 = vsub.s32 0, %v2129
    %v2131 = vrot.slane %v2093, %v2130
    %v2132 = vlaneseq
    %v2133 = vshrl.u32 %v2132, 7
    %v2134 = vsub.s32 0, %v2133
    %v2135 = vrot.slane %v2107, %v2134
    %v2136 = vlaneseq
    %v2137 = vshrl.u32 %v2136, 7
    %v2138 = vsub.s32 0, %v2137
    %v2139 = vrot.slane %v2109, %v2138
    %v2140 = vlaneseq
    %v2141 = vshrl.u32 %v2140, 7
    %v2142 = vsub.s32 0, %v2141
    %v2143 = vrot.slane %v2111, %v2142
    %2144 = vrot.lane.b32.xlu0 %v2115, 96
    %v2145 = vpop.permute.xlu0 %2144
    %2146 = vrot.lane.b32.xlu0 %v2119, 96
    %v2147 = vpop.permute.xlu0 %2146
    %2148 = vrot.lane.b32.xlu0 %v2123, 96
    %v2149 = vpop.permute.xlu0 %2148
    %2150 = vrot.lane.b32.xlu0 %v2127, 96
    %v2151 = vpop.permute.xlu0 %2150
    %2152 = vrot.lane.b32.xlu0 %v2131, 96
    %v2153 = vpop.permute.xlu0 %2152
    %2154 = vrot.lane.b32.xlu0 %v2135, 96
    %v2155 = vpop.permute.xlu0 %2154
    %2156 = vrot.lane.b32.xlu0 %v2139, 96
    %v2157 = vpop.permute.xlu0 %2156
    %2158 = vrot.lane.b32.xlu0 %v2143, 96
    %v2159 = vpop.permute.xlu0 %2158
    %2168 = vst.msk [vmem:[#allocation3 + $0x2] sm:$0x1] %vm939, %v2145
    %2169 = vst.msk [vmem:[#allocation3 + $0xa] sm:$0x1] %vm939, %v2147
    %2170 = vst.msk [vmem:[#allocation3 + $0x12] sm:$0x1] %vm939, %v2149
    %2171 = vst.msk [vmem:[#allocation3 + $0x1a] sm:$0x1] %vm939, %v2151
    %2172 = vst.msk [vmem:[#allocation3 + $0x22] sm:$0x1] %vm939, %v2153
    %2173 = vst.msk [vmem:[#allocation3 + $0x2a] sm:$0x1] %vm939, %v2155
    %2174 = vst.msk [vmem:[#allocation3 + $0x32] sm:$0x1] %vm939, %v2157
    %2175 = vst.msk [vmem:[#allocation3 + $0x3a] sm:$0x1] %vm939, %v2159
    %v2176 = vld [vmem:[#allocation2 + $0x3] sm:$0x1]
    %v2177 = vld [vmem:[#allocation2 + $0xb] sm:$0x1]
    %v2178 = vld [vmem:[#allocation2 + $0x13] sm:$0x1]
    %v2179 = vld [vmem:[#allocation2 + $0x1b] sm:$0x1]
    %v2180 = vld [vmem:[#allocation2 + $0x23] sm:$0x1]
    %v2181 = vld [vmem:[#allocation2 + $0x2b] sm:$0x1]
    %v2182 = vld [vmem:[#allocation2 + $0x33] sm:$0x1]
    %v2183 = vld [vmem:[#allocation2 + $0x3b] sm:$0x1]
    %2184 = vmatprep.subr.mxu0 0.0
    %2185 = vmatpush1.msra.mxu0 0.0
    %2186 = vmatprep.subr.mxu0 0.0
    %2187 = vmatpush1.msra.mxu0 0.0
    %2188 = vmatprep.subr.mxu0 0.0
    %2189 = vmatpush1.msra.mxu0 0.0
    %2190 = vmatprep.subr.mxu0 0.0
    %2191 = vmatpush1.msra.mxu0 0.0
    %2192 = vmatprep.subr.mxu0 0.0
    %2193 = vmatpush1.msra.mxu0 0.0
    %2194 = vmatprep.subr.mxu0 0.0
    %2195 = vmatpush1.msra.mxu0 0.0
    %2196 = vmatprep.subr.mxu0 0.0
    %2197 = vmatpush1.msra.mxu0 0.0
    %2198 = vmatprep.subr.mxu0 0.0
    %2199 = vmatpush1.msra.mxu0 0.0
    %2200 = vmatprep.subr.mxu0 0.0
    %2201 = vmatpush1.msra.mxu0 0.0
    %2202 = vmatprep.subr.mxu0 0.0
    %2203 = vmatpush1.msra.mxu0 0.0
    %2204 = vmatprep.subr.mxu0 0.0
    %2205 = vmatpush1.msra.mxu0 0.0
    %2206 = vmatprep.subr.mxu0 0.0
    %2207 = vmatpush1.msra.mxu0 0.0
    %2208 = vmatprep.subr.mxu0 0.0
    %2209 = vmatpush1.msra.mxu0 %v143
    %2210 = vmatprep.subr.mxu0 0.0
    %2211 = vmatpush1.msra.mxu0 %v142
    %2212 = vmatprep.subr.mxu0 0.0
    %2213 = vmatpush1.msra.mxu0 %v141
    %2214 = vmatprep.subr.mxu0 0.0
    %2215 = vmatpush1.msra.mxu0 %v140
    %2216 = vmatprep.subr.mxu0 0.0
    %2217 = vmatpush2.msra.mxu0 0.0
    %2218 = vmatprep.subr.mxu0 0.0
    %2219 = vmatpush2.msra.mxu0 0.0
    %2220 = vmatprep.subr.mxu0 0.0
    %2221 = vmatpush2.msra.mxu0 0.0
    %2222 = vmatprep.subr.mxu0 0.0
    %2223 = vmatpush2.msra.mxu0 0.0
    %2224 = vmatprep.subr.mxu0 0.0
    %2225 = vmatpush2.msra.mxu0 0.0
    %2226 = vmatprep.subr.mxu0 0.0
    %2227 = vmatpush2.msra.mxu0 0.0
    %2228 = vmatprep.subr.mxu0 0.0
    %2229 = vmatpush2.msra.mxu0 0.0
    %2230 = vmatprep.subr.mxu0 0.0
    %2231 = vmatpush2.msra.mxu0 0.0
    %2232 = vmatprep.subr.mxu0 0.0
    %2233 = vmatpush2.msra.mxu0 0.0
    %2234 = vmatprep.subr.mxu0 0.0
    %2235 = vmatpush2.msra.mxu0 0.0
    %2236 = vmatprep.subr.mxu0 0.0
    %2237 = vmatpush2.msra.mxu0 0.0
    %2238 = vmatprep.subr.mxu0 0.0
    %2239 = vmatpush2.msra.mxu0 0.0
    %2240 = vmatprep.subr.mxu0 0.0
    %2241 = vmatpush2.msra.mxu0 0.0
    %2242 = vmatprep.subr.mxu0 0.0
    %2243 = vmatpush2.msra.mxu0 0.0
    %2244 = vmatprep.subr.mxu0 0.0
    %2245 = vmatpush2.msra.mxu0 0.0
    %2246 = vmatprep.subr.mxu0 0.0
    %2247 = vmatpush2.msra.mxu0 0.0
    %2248 = vmatprep.mubr.f32.mxu0 0.0
    %2249 = vmatmul.mubr.f32.gmra.mxu0 %v1889
    %v2250 = vpop.f32.mrf.mxu0
    %v2251 = vadd.f32 0.0, %v2250
    %v2252 = vpop.f32.mrf.mxu0
    %2253 = vdwg.mxu0
    %v2255 = vrot.slane %v2251, 1
    %v2256 = vrot.slane %v2251, 2
    %v2257 = vrot.slane %v2251, 3
    %v2258 = vrot.slane %v2251, 4
    %v2259 = vrot.slane %v2251, 5
    %v2260 = vrot.slane %v2251, 6
    %v2261 = vrot.slane %v2251, 7
    %v2270 = vadd.f32 %v2176, %v2251
    %v2271 = vadd.f32 %v2177, %v2255
    %v2272 = vadd.f32 %v2178, %v2256
    %v2273 = vadd.f32 %v2179, %v2257
    %v2274 = vadd.f32 %v2180, %v2258
    %v2275 = vadd.f32 %v2181, %v2259
    %v2276 = vadd.f32 %v2182, %v2260
    %v2277 = vadd.f32 %v2183, %v2261
    %v2278 = vxor.u32 %v2270, 2147483648
    %v2279 = vxor.u32 %v2271, 2147483648
    %v2280 = vxor.u32 %v2272, 2147483648
    %v2281 = vxor.u32 %v2273, 2147483648
    %v2282 = vxor.u32 %v2274, 2147483648
    %v2283 = vxor.u32 %v2275, 2147483648
    %v2284 = vxor.u32 %v2276, 2147483648
    %v2285 = vxor.u32 %v2277, 2147483648
    %v2286 = vmul.f32 %v2278, 1.442695
    %v2287 = vpow.pop %v2286
    %v2288 = vmul.f32 %v2279, 1.442695
    %v2289 = vpow.pop %v2288
    %v2290 = vmul.f32 %v2280, 1.442695
    %v2291 = vpow.pop %v2290
    %v2292 = vmul.f32 %v2281, 1.442695
    %v2293 = vpow.pop %v2292
    %v2294 = vmul.f32 %v2282, 1.442695
    %v2295 = vpow.pop %v2294
    %v2296 = vmul.f32 %v2283, 1.442695
    %v2297 = vpow.pop %v2296
    %v2298 = vmul.f32 %v2284, 1.442695
    %v2299 = vpow.pop %v2298
    %v2300 = vmul.f32 %v2285, 1.442695
    %v2301 = vpow.pop %v2300
    %v2302 = vadd.f32 %v2287, 1.0
    %v2303 = vadd.f32 %v2289, 1.0
    %v2304 = vadd.f32 %v2291, 1.0
    %v2305 = vadd.f32 %v2293, 1.0
    %v2306 = vadd.f32 %v2295, 1.0
    %v2307 = vadd.f32 %v2297, 1.0
    %v2308 = vadd.f32 %v2299, 1.0
    %v2309 = vadd.f32 %v2301, 1.0
    %v2310 = vrcp.pop %v2302
    %v2311 = vmul.f32 1.0, %v2310
    %v2312 = vrcp.pop %v2303
    %v2313 = vmul.f32 1.0, %v2312
    %v2314 = vrcp.pop %v2304
    %v2315 = vmul.f32 1.0, %v2314
    %v2316 = vrcp.pop %v2305
    %v2317 = vmul.f32 1.0, %v2316
    %v2318 = vrcp.pop %v2306
    %v2319 = vmul.f32 1.0, %v2318
    %v2320 = vrcp.pop %v2307
    %v2321 = vmul.f32 1.0, %v2320
    %v2322 = vrcp.pop %v2308
    %v2323 = vmul.f32 1.0, %v2322
    %v2324 = vrcp.pop %v2309
    %v2325 = vmul.f32 1.0, %v2324
    %v2326 = vadd.f32 %v2251, %v475
    %v2328 = vrot.slane %v2326, 1
    %v2329 = vrot.slane %v2326, 2
    %v2330 = vrot.slane %v2326, 3
    %v2331 = vrot.slane %v2326, 4
    %v2332 = vrot.slane %v2326, 5
    %v2333 = vrot.slane %v2326, 6
    %v2334 = vrot.slane %v2326, 7
    %2335 = vrot.lane.b32.xlu0 %v2326, 64
    %v2336 = vpop.permute.xlu0 %2335
    %2337 = vrot.lane.b32.xlu0 %v2328, 64
    %v2338 = vpop.permute.xlu0 %2337
    %2339 = vrot.lane.b32.xlu0 %v2329, 64
    %v2340 = vpop.permute.xlu0 %2339
    %2341 = vrot.lane.b32.xlu0 %v2330, 64
    %v2342 = vpop.permute.xlu0 %2341
    %2343 = vrot.lane.b32.xlu0 %v2331, 64
    %v2344 = vpop.permute.xlu0 %2343
    %2345 = vrot.lane.b32.xlu0 %v2332, 64
    %v2346 = vpop.permute.xlu0 %2345
    %2347 = vrot.lane.b32.xlu0 %v2333, 64
    %v2348 = vpop.permute.xlu0 %2347
    %2349 = vrot.lane.b32.xlu0 %v2334, 64
    %v2350 = vpop.permute.xlu0 %2349
    %v2359 = vmul.f32 %v2311, %v2336
    %v2360 = vmul.f32 %v2313, %v2338
    %v2361 = vmul.f32 %v2315, %v2340
    %v2362 = vmul.f32 %v2317, %v2342
    %v2363 = vmul.f32 %v2319, %v2344
    %v2364 = vmul.f32 %v2321, %v2346
    %v2365 = vmul.f32 %v2323, %v2348
    %v2366 = vmul.f32 %v2325, %v2350
    %2375 = vrot.lane.b32.xlu0 %v2359, 64
    %v2376 = vpop.permute.xlu0 %2375
    %2377 = vrot.lane.b32.xlu0 %v2360, 64
    %v2378 = vpop.permute.xlu0 %2377
    %2379 = vrot.lane.b32.xlu0 %v2361, 64
    %v2380 = vpop.permute.xlu0 %2379
    %2381 = vrot.lane.b32.xlu0 %v2362, 64
    %v2382 = vpop.permute.xlu0 %2381
    %2383 = vrot.lane.b32.xlu0 %v2363, 64
    %v2384 = vpop.permute.xlu0 %2383
    %2385 = vrot.lane.b32.xlu0 %v2364, 64
    %v2386 = vpop.permute.xlu0 %2385
    %2387 = vrot.lane.b32.xlu0 %v2365, 64
    %v2388 = vpop.permute.xlu0 %2387
    %2389 = vrot.lane.b32.xlu0 %v2366, 64
    %v2390 = vpop.permute.xlu0 %2389
    %v2399 = vadd.f32 %v2176, %v2376
    %v2400 = vadd.f32 %v2177, %v2378
    %v2401 = vadd.f32 %v2178, %v2380
    %v2402 = vadd.f32 %v2179, %v2382
    %v2403 = vadd.f32 %v2180, %v2384
    %v2404 = vadd.f32 %v2181, %v2386
    %v2405 = vadd.f32 %v2182, %v2388
    %v2406 = vadd.f32 %v2183, %v2390
    %v2407 = vtanh.pop %v2399
    %v2408 = vtanh.pop %v2400
    %v2409 = vtanh.pop %v2401
    %v2410 = vtanh.pop %v2402
    %v2411 = vtanh.pop %v2403
    %v2412 = vtanh.pop %v2404
    %v2413 = vtanh.pop %v2405
    %v2414 = vtanh.pop %v2406
    %v2415 = vsub.f32 1.0, %v2311
    %v2416 = vsub.f32 1.0, %v2313
    %v2417 = vsub.f32 1.0, %v2315
    %v2418 = vsub.f32 1.0, %v2317
    %v2419 = vsub.f32 1.0, %v2319
    %v2420 = vsub.f32 1.0, %v2321
    %v2421 = vsub.f32 1.0, %v2323
    %v2422 = vsub.f32 1.0, %v2325
    %2431 = vrot.lane.b32.xlu0 %v2407, 96
    %v2432 = vpop.permute.xlu0 %2431
    %2433 = vrot.lane.b32.xlu0 %v2408, 96
    %v2434 = vpop.permute.xlu0 %2433
    %2435 = vrot.lane.b32.xlu0 %v2409, 96
    %v2436 = vpop.permute.xlu0 %2435
    %2437 = vrot.lane.b32.xlu0 %v2410, 96
    %v2438 = vpop.permute.xlu0 %2437
    %2439 = vrot.lane.b32.xlu0 %v2411, 96
    %v2440 = vpop.permute.xlu0 %2439
    %2441 = vrot.lane.b32.xlu0 %v2412, 96
    %v2442 = vpop.permute.xlu0 %2441
    %2443 = vrot.lane.b32.xlu0 %v2413, 96
    %v2444 = vpop.permute.xlu0 %2443
    %2445 = vrot.lane.b32.xlu0 %v2414, 96
    %v2446 = vpop.permute.xlu0 %2445
    %v2455 = vmul.f32 %v2415, %v2432
    %v2456 = vmul.f32 %v2416, %v2434
    %v2457 = vmul.f32 %v2417, %v2436
    %v2458 = vmul.f32 %v2418, %v2438
    %v2459 = vmul.f32 %v2419, %v2440
    %v2460 = vmul.f32 %v2420, %v2442
    %v2461 = vmul.f32 %v2421, %v2444
    %v2462 = vmul.f32 %v2422, %v2446
    %v2463 = vmul.f32 %v2311, %v1857
    %v2464 = vmul.f32 %v2313, %v1858
    %v2465 = vmul.f32 %v2315, %v1859
    %v2466 = vmul.f32 %v2317, %v1860
    %v2467 = vmul.f32 %v2319, %v1861
    %v2468 = vmul.f32 %v2321, %v1862
    %v2469 = vmul.f32 %v2323, %v1863
    %v2470 = vmul.f32 %v2325, %v1864
    %v2471 = vadd.f32 %v2455, %v2463
    %v2472 = vadd.f32 %v2456, %v2464
    %v2473 = vadd.f32 %v2457, %v2465
    %v2474 = vadd.f32 %v2458, %v2466
    %v2475 = vadd.f32 %v2459, %v2467
    %v2476 = vadd.f32 %v2460, %v2468
    %v2477 = vadd.f32 %v2461, %v2469
    %v2478 = vadd.f32 %v2462, %v2470
    %v2487 = vrot.slane %v2472, 7
    %v2488 = vsel %vm639, %v2487, %v2471
    %v2489 = vrot.slane %v2473, 6
    %v2490 = vsel %vm642, %v2489, %v2488
    %v2491 = vrot.slane %v2474, 5
    %v2492 = vsel %vm645, %v2491, %v2490
    %v2493 = vrot.slane %v2475, 4
    %v2494 = vsel %vm648, %v2493, %v2492
    %v2495 = vrot.slane %v2476, 3
    %v2496 = vsel %vm651, %v2495, %v2494
    %v2497 = vrot.slane %v2477, 2
    %v2498 = vsel %vm654, %v2497, %v2496
    %v2499 = vrot.slane %v2478, 1
    %v2500 = vsel %vm657, %v2499, %v2498
    %2501 = vrot.lane.b32.xlu0 %v2500, 96
    %v2502 = vpop.permute.xlu0 %2501
    %v2503 = vsel %vm182, %v2502, 0
    %2505 = vmatprep.subr.mxu0 0.0
    %2506 = vmatpush1.msra.mxu0 0.0
    %2507 = vmatprep.subr.mxu0 0.0
    %2508 = vmatpush1.msra.mxu0 0.0
    %2509 = vmatprep.subr.mxu0 0.0
    %2510 = vmatpush1.msra.mxu0 0.0
    %2511 = vmatprep.subr.mxu0 0.0
    %2512 = vmatpush1.msra.mxu0 0.0
    %2513 = vmatprep.subr.mxu0 0.0
    %2514 = vmatpush1.msra.mxu0 0.0
    %2515 = vmatprep.subr.mxu0 0.0
    %2516 = vmatpush1.msra.mxu0 0.0
    %2517 = vmatprep.subr.mxu0 0.0
    %2518 = vmatpush1.msra.mxu0 0.0
    %2519 = vmatprep.subr.mxu0 0.0
    %2520 = vmatpush1.msra.mxu0 0.0
    %2521 = vmatprep.subr.mxu0 0.0
    %2522 = vmatpush1.msra.mxu0 0.0
    %2523 = vmatprep.subr.mxu0 0.0
    %2524 = vmatpush1.msra.mxu0 0.0
    %2525 = vmatprep.subr.mxu0 0.0
    %2526 = vmatpush1.msra.mxu0 0.0
    %2527 = vmatprep.subr.mxu0 0.0
    %2528 = vmatpush1.msra.mxu0 0.0
    %2529 = vmatprep.subr.mxu0 0.0
    %2530 = vmatpush1.msra.mxu0 %v139
    %2531 = vmatprep.subr.mxu0 0.0
    %2532 = vmatpush1.msra.mxu0 %v138
    %2533 = vmatprep.subr.mxu0 0.0
    %2534 = vmatpush1.msra.mxu0 %v137
    %2535 = vmatprep.subr.mxu0 0.0
    %2536 = vmatpush1.msra.mxu0 %v136
    %2537 = vmatprep.subr.mxu0 0.0
    %2538 = vmatpush2.msra.mxu0 0.0
    %2539 = vmatprep.subr.mxu0 0.0
    %2540 = vmatpush2.msra.mxu0 0.0
    %2541 = vmatprep.subr.mxu0 0.0
    %2542 = vmatpush2.msra.mxu0 0.0
    %2543 = vmatprep.subr.mxu0 0.0
    %2544 = vmatpush2.msra.mxu0 0.0
    %2545 = vmatprep.subr.mxu0 0.0
    %2546 = vmatpush2.msra.mxu0 0.0
    %2547 = vmatprep.subr.mxu0 0.0
    %2548 = vmatpush2.msra.mxu0 0.0
    %2549 = vmatprep.subr.mxu0 0.0
    %2550 = vmatpush2.msra.mxu0 0.0
    %2551 = vmatprep.subr.mxu0 0.0
    %2552 = vmatpush2.msra.mxu0 0.0
    %2553 = vmatprep.subr.mxu0 0.0
    %2554 = vmatpush2.msra.mxu0 0.0
    %2555 = vmatprep.subr.mxu0 0.0
    %2556 = vmatpush2.msra.mxu0 0.0
    %2557 = vmatprep.subr.mxu0 0.0
    %2558 = vmatpush2.msra.mxu0 0.0
    %2559 = vmatprep.subr.mxu0 0.0
    %2560 = vmatpush2.msra.mxu0 0.0
    %2561 = vmatprep.subr.mxu0 0.0
    %2562 = vmatpush2.msra.mxu0 0.0
    %2563 = vmatprep.subr.mxu0 0.0
    %2564 = vmatpush2.msra.mxu0 0.0
    %2565 = vmatprep.subr.mxu0 0.0
    %2566 = vmatpush2.msra.mxu0 0.0
    %2567 = vmatprep.subr.mxu0 0.0
    %2568 = vmatpush2.msra.mxu0 0.0
    %2569 = vmatprep.mubr.f32.mxu0 0.0
    %2570 = vmatmul.mubr.f32.gmra.mxu0 %v2503
    %v2571 = vpop.f32.mrf.mxu0
    %v2572 = vadd.f32 %v153, %v2571
    %v2573 = vpop.f32.mrf.mxu0
    %2574 = vdwg.mxu0
    %2575 = vrot.lane.b32.xlu0 %v2061, 96
    %v2576 = vpop.permute.xlu0 %2575
    %v2577 = vsel %vm182, %v2576, 0
    %2579 = vmatprep.subr.mxu0 0.0
    %2580 = vmatpush1.msra.mxu0 0.0
    %2581 = vmatprep.subr.mxu0 0.0
    %2582 = vmatpush1.msra.mxu0 0.0
    %2583 = vmatprep.subr.mxu0 0.0
    %2584 = vmatpush1.msra.mxu0 0.0
    %2585 = vmatprep.subr.mxu0 0.0
    %2586 = vmatpush1.msra.mxu0 0.0
    %2587 = vmatprep.subr.mxu0 0.0
    %2588 = vmatpush1.msra.mxu0 0.0
    %2589 = vmatprep.subr.mxu0 0.0
    %2590 = vmatpush1.msra.mxu0 0.0
    %2591 = vmatprep.subr.mxu0 0.0
    %2592 = vmatpush1.msra.mxu0 0.0
    %2593 = vmatprep.subr.mxu0 0.0
    %2594 = vmatpush1.msra.mxu0 0.0
    %2595 = vmatprep.subr.mxu0 0.0
    %2596 = vmatpush1.msra.mxu0 0.0
    %2597 = vmatprep.subr.mxu0 0.0
    %2598 = vmatpush1.msra.mxu0 0.0
    %2599 = vmatprep.subr.mxu0 0.0
    %2600 = vmatpush1.msra.mxu0 0.0
    %2601 = vmatprep.subr.mxu0 0.0
    %2602 = vmatpush1.msra.mxu0 0.0
    %2603 = vmatprep.subr.mxu0 0.0
    %2604 = vmatpush1.msra.mxu0 %v147
    %2605 = vmatprep.subr.mxu0 0.0
    %2606 = vmatpush1.msra.mxu0 %v146
    %2607 = vmatprep.subr.mxu0 0.0
    %2608 = vmatpush1.msra.mxu0 %v145
    %2609 = vmatprep.subr.mxu0 0.0
    %2610 = vmatpush1.msra.mxu0 %v144
    %2611 = vmatprep.subr.mxu0 0.0
    %2612 = vmatpush2.msra.mxu0 0.0
    %2613 = vmatprep.subr.mxu0 0.0
    %2614 = vmatpush2.msra.mxu0 0.0
    %2615 = vmatprep.subr.mxu0 0.0
    %2616 = vmatpush2.msra.mxu0 0.0
    %2617 = vmatprep.subr.mxu0 0.0
    %2618 = vmatpush2.msra.mxu0 0.0
    %2619 = vmatprep.subr.mxu0 0.0
    %2620 = vmatpush2.msra.mxu0 0.0
    %2621 = vmatprep.subr.mxu0 0.0
    %2622 = vmatpush2.msra.mxu0 0.0
    %2623 = vmatprep.subr.mxu0 0.0
    %2624 = vmatpush2.msra.mxu0 0.0
    %2625 = vmatprep.subr.mxu0 0.0
    %2626 = vmatpush2.msra.mxu0 0.0
    %2627 = vmatprep.subr.mxu0 0.0
    %2628 = vmatpush2.msra.mxu0 0.0
    %2629 = vmatprep.subr.mxu0 0.0
    %2630 = vmatpush2.msra.mxu0 0.0
    %2631 = vmatprep.subr.mxu0 0.0
    %2632 = vmatpush2.msra.mxu0 0.0
    %2633 = vmatprep.subr.mxu0 0.0
    %2634 = vmatpush2.msra.mxu0 0.0
    %2635 = vmatprep.subr.mxu0 0.0
    %2636 = vmatpush2.msra.mxu0 0.0
    %2637 = vmatprep.subr.mxu0 0.0
    %2638 = vmatpush2.msra.mxu0 0.0
    %2639 = vmatprep.subr.mxu0 0.0
    %2640 = vmatpush2.msra.mxu0 0.0
    %2641 = vmatprep.subr.mxu0 0.0
    %2642 = vmatpush2.msra.mxu0 0.0
    %2643 = vmatprep.mubr.f32.mxu0 0.0
    %2644 = vmatmul.mubr.f32.gmra.mxu0 %v2577
    %v2645 = vpop.f32.mrf.mxu0
    %v2646 = vadd.f32 0.0, %v2645
    %v2647 = vpop.f32.mrf.mxu0
    %2648 = vdwg.mxu0
    %v2649 = vadd.f32 %v2572, %v2646
    %v2650 = vxor.u32 %v2649, 2147483648
    %v2651 = vmul.f32 %v2650, 1.442695
    %v2652 = vpow.pop %v2651
    %v2653 = vadd.f32 %v2652, 1.0
    %v2654 = vrcp.pop %v2653
    %v2655 = vmul.f32 1.0, %v2654
    %v2656 = vadd.f32 %v2646, %v811
    %2658 = vrot.lane.b32.xlu0 %v2656, 64
    %v2659 = vpop.permute.xlu0 %2658
    %v2661 = vmul.f32 %v2655, %v2659
    %2663 = vrot.lane.b32.xlu0 %v2661, 64
    %v2664 = vpop.permute.xlu0 %2663
    %v2666 = vadd.f32 %v2572, %v2664
    %v2667 = vtanh.pop %v2666
    %v2668 = vsub.f32 1.0, %v2655
    %2670 = vrot.lane.b32.xlu0 %v2667, 96
    %v2671 = vpop.permute.xlu0 %2670
    %v2673 = vmul.f32 %v2668, %v2671
    %v2674 = vmul.f32 %v2655, %v2061
    %v2675 = vadd.f32 %v2673, %v2674
    %v2677 = vcombine.high %v2675, %v2675
    %v2679 = vunpack.c.l.s4 1966171168
    %v2680 = vunpack.c.0.s8 %v2679
    %v2681 = vlaneseq
    %v2682 = vshrl.u32 %v2681, 7
    %v2683 = vsub.s32 %v2680, %v2682
    %v2684 = vrot.slane %v2675, %v2683
    %v2686 = vunpack.c.l.s4 1966171168
    %v2687 = vunpack.c.0.s8 %v2686
    %v2688 = vlaneseq
    %v2689 = vshrl.u32 %v2688, 7
    %v2690 = vsub.s32 %v2687, %v2689
    %v2691 = vrot.slane %v2677, %v2690
    %v2692 = vcombine.high %v2684, %v2684
    %v2693 = vcombine.high %v2691, %v2691
    %v2695 = vunpack.c.l.s4 1966171168
    %v2696 = vunpack.c.0.s8 %v2695
    %v2697 = vlaneseq
    %v2698 = vshrl.u32 %v2697, 7
    %v2699 = vsub.s32 %v2696, %v2698
    %v2700 = vrot.slane %v2684, %v2699
    %v2702 = vunpack.c.l.s4 1966171168
    %v2703 = vunpack.c.0.s8 %v2702
    %v2704 = vlaneseq
    %v2705 = vshrl.u32 %v2704, 7
    %v2706 = vsub.s32 %v2703, %v2705
    %v2707 = vrot.slane %v2691, %v2706
    %v2709 = vunpack.c.l.s4 1966171168
    %v2710 = vunpack.c.0.s8 %v2709
    %v2711 = vlaneseq
    %v2712 = vshrl.u32 %v2711, 7
    %v2713 = vsub.s32 %v2710, %v2712
    %v2714 = vrot.slane %v2692, %v2713
    %v2716 = vunpack.c.l.s4 1966171168
    %v2717 = vunpack.c.0.s8 %v2716
    %v2718 = vlaneseq
    %v2719 = vshrl.u32 %v2718, 7
    %v2720 = vsub.s32 %v2717, %v2719
    %v2721 = vrot.slane %v2693, %v2720
    %v2722 = vcombine.high %v2700, %v2700
    %v2723 = vcombine.high %v2707, %v2707
    %v2724 = vcombine.high %v2714, %v2714
    %v2725 = vcombine.high %v2721, %v2721
    %v2726 = vlaneseq
    %v2727 = vshrl.u32 %v2726, 7
    %v2728 = vsub.s32 0, %v2727
    %v2729 = vrot.slane %v2700, %v2728
    %v2730 = vlaneseq
    %v2731 = vshrl.u32 %v2730, 7
    %v2732 = vsub.s32 0, %v2731
    %v2733 = vrot.slane %v2714, %v2732
    %v2734 = vlaneseq
    %v2735 = vshrl.u32 %v2734, 7
    %v2736 = vsub.s32 0, %v2735
    %v2737 = vrot.slane %v2722, %v2736
    %v2738 = vlaneseq
    %v2739 = vshrl.u32 %v2738, 7
    %v2740 = vsub.s32 0, %v2739
    %v2741 = vrot.slane %v2724, %v2740
    %v2742 = vlaneseq
    %v2743 = vshrl.u32 %v2742, 7
    %v2744 = vsub.s32 0, %v2743
    %v2745 = vrot.slane %v2707, %v2744
    %v2746 = vlaneseq
    %v2747 = vshrl.u32 %v2746, 7
    %v2748 = vsub.s32 0, %v2747
    %v2749 = vrot.slane %v2721, %v2748
    %v2750 = vlaneseq
    %v2751 = vshrl.u32 %v2750, 7
    %v2752 = vsub.s32 0, %v2751
    %v2753 = vrot.slane %v2723, %v2752
    %v2754 = vlaneseq
    %v2755 = vshrl.u32 %v2754, 7
    %v2756 = vsub.s32 0, %v2755
    %v2757 = vrot.slane %v2725, %v2756
    %2758 = vrot.lane.b32.xlu0 %v2729, 96
    %v2759 = vpop.permute.xlu0 %2758
    %2760 = vrot.lane.b32.xlu0 %v2733, 96
    %v2761 = vpop.permute.xlu0 %2760
    %2762 = vrot.lane.b32.xlu0 %v2737, 96
    %v2763 = vpop.permute.xlu0 %2762
    %2764 = vrot.lane.b32.xlu0 %v2741, 96
    %v2765 = vpop.permute.xlu0 %2764
    %2766 = vrot.lane.b32.xlu0 %v2745, 96
    %v2767 = vpop.permute.xlu0 %2766
    %2768 = vrot.lane.b32.xlu0 %v2749, 96
    %v2769 = vpop.permute.xlu0 %2768
    %2770 = vrot.lane.b32.xlu0 %v2753, 96
    %v2771 = vpop.permute.xlu0 %2770
    %2772 = vrot.lane.b32.xlu0 %v2757, 96
    %v2773 = vpop.permute.xlu0 %2772
    %2782 = vst.msk [vmem:[#allocation3 + $0x3] sm:$0x1] %vm939, %v2759
    %2783 = vst.msk [vmem:[#allocation3 + $0xb] sm:$0x1] %vm939, %v2761
    %2784 = vst.msk [vmem:[#allocation3 + $0x13] sm:$0x1] %vm939, %v2763
    %2785 = vst.msk [vmem:[#allocation3 + $0x1b] sm:$0x1] %vm939, %v2765
    %2786 = vst.msk [vmem:[#allocation3 + $0x23] sm:$0x1] %vm939, %v2767
    %2787 = vst.msk [vmem:[#allocation3 + $0x2b] sm:$0x1] %vm939, %v2769
    %2788 = vst.msk [vmem:[#allocation3 + $0x33] sm:$0x1] %vm939, %v2771
    %2789 = vst.msk [vmem:[#allocation3 + $0x3b] sm:$0x1] %vm939, %v2773
    %v2790 = vld [vmem:[#allocation2 + $0x4] sm:$0x1]
    %v2791 = vld [vmem:[#allocation2 + $0xc] sm:$0x1]
    %v2792 = vld [vmem:[#allocation2 + $0x14] sm:$0x1]
    %v2793 = vld [vmem:[#allocation2 + $0x1c] sm:$0x1]
    %v2794 = vld [vmem:[#allocation2 + $0x24] sm:$0x1]
    %v2795 = vld [vmem:[#allocation2 + $0x2c] sm:$0x1]
    %v2796 = vld [vmem:[#allocation2 + $0x34] sm:$0x1]
    %v2797 = vld [vmem:[#allocation2 + $0x3c] sm:$0x1]
    %2798 = vmatprep.subr.mxu0 0.0
    %2799 = vmatpush1.msra.mxu0 0.0
    %2800 = vmatprep.subr.mxu0 0.0
    %2801 = vmatpush1.msra.mxu0 0.0
    %2802 = vmatprep.subr.mxu0 0.0
    %2803 = vmatpush1.msra.mxu0 0.0
    %2804 = vmatprep.subr.mxu0 0.0
    %2805 = vmatpush1.msra.mxu0 0.0
    %2806 = vmatprep.subr.mxu0 0.0
    %2807 = vmatpush1.msra.mxu0 0.0
    %2808 = vmatprep.subr.mxu0 0.0
    %2809 = vmatpush1.msra.mxu0 0.0
    %2810 = vmatprep.subr.mxu0 0.0
    %2811 = vmatpush1.msra.mxu0 0.0
    %2812 = vmatprep.subr.mxu0 0.0
    %2813 = vmatpush1.msra.mxu0 0.0
    %2814 = vmatprep.subr.mxu0 0.0
    %2815 = vmatpush1.msra.mxu0 0.0
    %2816 = vmatprep.subr.mxu0 0.0
    %2817 = vmatpush1.msra.mxu0 0.0
    %2818 = vmatprep.subr.mxu0 0.0
    %2819 = vmatpush1.msra.mxu0 0.0
    %2820 = vmatprep.subr.mxu0 0.0
    %2821 = vmatpush1.msra.mxu0 0.0
    %2822 = vmatprep.subr.mxu0 0.0
    %2823 = vmatpush1.msra.mxu0 %v143
    %2824 = vmatprep.subr.mxu0 0.0
    %2825 = vmatpush1.msra.mxu0 %v142
    %2826 = vmatprep.subr.mxu0 0.0
    %2827 = vmatpush1.msra.mxu0 %v141
    %2828 = vmatprep.subr.mxu0 0.0
    %2829 = vmatpush1.msra.mxu0 %v140
    %2830 = vmatprep.subr.mxu0 0.0
    %2831 = vmatpush2.msra.mxu0 0.0
    %2832 = vmatprep.subr.mxu0 0.0
    %2833 = vmatpush2.msra.mxu0 0.0
    %2834 = vmatprep.subr.mxu0 0.0
    %2835 = vmatpush2.msra.mxu0 0.0
    %2836 = vmatprep.subr.mxu0 0.0
    %2837 = vmatpush2.msra.mxu0 0.0
    %2838 = vmatprep.subr.mxu0 0.0
    %2839 = vmatpush2.msra.mxu0 0.0
    %2840 = vmatprep.subr.mxu0 0.0
    %2841 = vmatpush2.msra.mxu0 0.0
    %2842 = vmatprep.subr.mxu0 0.0
    %2843 = vmatpush2.msra.mxu0 0.0
    %2844 = vmatprep.subr.mxu0 0.0
    %2845 = vmatpush2.msra.mxu0 0.0
    %2846 = vmatprep.subr.mxu0 0.0
    %2847 = vmatpush2.msra.mxu0 0.0
    %2848 = vmatprep.subr.mxu0 0.0
    %2849 = vmatpush2.msra.mxu0 0.0
    %2850 = vmatprep.subr.mxu0 0.0
    %2851 = vmatpush2.msra.mxu0 0.0
    %2852 = vmatprep.subr.mxu0 0.0
    %2853 = vmatpush2.msra.mxu0 0.0
    %2854 = vmatprep.subr.mxu0 0.0
    %2855 = vmatpush2.msra.mxu0 0.0
    %2856 = vmatprep.subr.mxu0 0.0
    %2857 = vmatpush2.msra.mxu0 0.0
    %2858 = vmatprep.subr.mxu0 0.0
    %2859 = vmatpush2.msra.mxu0 0.0
    %2860 = vmatprep.subr.mxu0 0.0
    %2861 = vmatpush2.msra.mxu0 0.0
    %2862 = vmatprep.mubr.f32.mxu0 0.0
    %2863 = vmatmul.mubr.f32.gmra.mxu0 %v2503
    %v2864 = vpop.f32.mrf.mxu0
    %v2865 = vadd.f32 0.0, %v2864
    %v2866 = vpop.f32.mrf.mxu0
    %2867 = vdwg.mxu0
    %v2869 = vrot.slane %v2865, 1
    %v2870 = vrot.slane %v2865, 2
    %v2871 = vrot.slane %v2865, 3
    %v2872 = vrot.slane %v2865, 4
    %v2873 = vrot.slane %v2865, 5
    %v2874 = vrot.slane %v2865, 6
    %v2875 = vrot.slane %v2865, 7
    %v2884 = vadd.f32 %v2790, %v2865
    %v2885 = vadd.f32 %v2791, %v2869
    %v2886 = vadd.f32 %v2792, %v2870
    %v2887 = vadd.f32 %v2793, %v2871
    %v2888 = vadd.f32 %v2794, %v2872
    %v2889 = vadd.f32 %v2795, %v2873
    %v2890 = vadd.f32 %v2796, %v2874
    %v2891 = vadd.f32 %v2797, %v2875
    %v2892 = vxor.u32 %v2884, 2147483648
    %v2893 = vxor.u32 %v2885, 2147483648
    %v2894 = vxor.u32 %v2886, 2147483648
    %v2895 = vxor.u32 %v2887, 2147483648
    %v2896 = vxor.u32 %v2888, 2147483648
    %v2897 = vxor.u32 %v2889, 2147483648
    %v2898 = vxor.u32 %v2890, 2147483648
    %v2899 = vxor.u32 %v2891, 2147483648
    %v2900 = vmul.f32 %v2892, 1.442695
    %v2901 = vpow.pop %v2900
    %v2902 = vmul.f32 %v2893, 1.442695
    %v2903 = vpow.pop %v2902
    %v2904 = vmul.f32 %v2894, 1.442695
    %v2905 = vpow.pop %v2904
    %v2906 = vmul.f32 %v2895, 1.442695
    %v2907 = vpow.pop %v2906
    %v2908 = vmul.f32 %v2896, 1.442695
    %v2909 = vpow.pop %v2908
    %v2910 = vmul.f32 %v2897, 1.442695
    %v2911 = vpow.pop %v2910
    %v2912 = vmul.f32 %v2898, 1.442695
    %v2913 = vpow.pop %v2912
    %v2914 = vmul.f32 %v2899, 1.442695
    %v2915 = vpow.pop %v2914
    %v2916 = vadd.f32 %v2901, 1.0
    %v2917 = vadd.f32 %v2903, 1.0
    %v2918 = vadd.f32 %v2905, 1.0
    %v2919 = vadd.f32 %v2907, 1.0
    %v2920 = vadd.f32 %v2909, 1.0
    %v2921 = vadd.f32 %v2911, 1.0
    %v2922 = vadd.f32 %v2913, 1.0
    %v2923 = vadd.f32 %v2915, 1.0
    %v2924 = vrcp.pop %v2916
    %v2925 = vmul.f32 1.0, %v2924
    %v2926 = vrcp.pop %v2917
    %v2927 = vmul.f32 1.0, %v2926
    %v2928 = vrcp.pop %v2918
    %v2929 = vmul.f32 1.0, %v2928
    %v2930 = vrcp.pop %v2919
    %v2931 = vmul.f32 1.0, %v2930
    %v2932 = vrcp.pop %v2920
    %v2933 = vmul.f32 1.0, %v2932
    %v2934 = vrcp.pop %v2921
    %v2935 = vmul.f32 1.0, %v2934
    %v2936 = vrcp.pop %v2922
    %v2937 = vmul.f32 1.0, %v2936
    %v2938 = vrcp.pop %v2923
    %v2939 = vmul.f32 1.0, %v2938
    %v2940 = vadd.f32 %v2865, %v475
    %v2942 = vrot.slane %v2940, 1
    %v2943 = vrot.slane %v2940, 2
    %v2944 = vrot.slane %v2940, 3
    %v2945 = vrot.slane %v2940, 4
    %v2946 = vrot.slane %v2940, 5
    %v2947 = vrot.slane %v2940, 6
    %v2948 = vrot.slane %v2940, 7
    %2949 = vrot.lane.b32.xlu0 %v2940, 64
    %v2950 = vpop.permute.xlu0 %2949
    %2951 = vrot.lane.b32.xlu0 %v2942, 64
    %v2952 = vpop.permute.xlu0 %2951
    %2953 = vrot.lane.b32.xlu0 %v2943, 64
    %v2954 = vpop.permute.xlu0 %2953
    %2955 = vrot.lane.b32.xlu0 %v2944, 64
    %v2956 = vpop.permute.xlu0 %2955
    %2957 = vrot.lane.b32.xlu0 %v2945, 64
    %v2958 = vpop.permute.xlu0 %2957
    %2959 = vrot.lane.b32.xlu0 %v2946, 64
    %v2960 = vpop.permute.xlu0 %2959
    %2961 = vrot.lane.b32.xlu0 %v2947, 64
    %v2962 = vpop.permute.xlu0 %2961
    %2963 = vrot.lane.b32.xlu0 %v2948, 64
    %v2964 = vpop.permute.xlu0 %2963
    %v2973 = vmul.f32 %v2925, %v2950
    %v2974 = vmul.f32 %v2927, %v2952
    %v2975 = vmul.f32 %v2929, %v2954
    %v2976 = vmul.f32 %v2931, %v2956
    %v2977 = vmul.f32 %v2933, %v2958
    %v2978 = vmul.f32 %v2935, %v2960
    %v2979 = vmul.f32 %v2937, %v2962
    %v2980 = vmul.f32 %v2939, %v2964
    %2989 = vrot.lane.b32.xlu0 %v2973, 64
    %v2990 = vpop.permute.xlu0 %2989
    %2991 = vrot.lane.b32.xlu0 %v2974, 64
    %v2992 = vpop.permute.xlu0 %2991
    %2993 = vrot.lane.b32.xlu0 %v2975, 64
    %v2994 = vpop.permute.xlu0 %2993
    %2995 = vrot.lane.b32.xlu0 %v2976, 64
    %v2996 = vpop.permute.xlu0 %2995
    %2997 = vrot.lane.b32.xlu0 %v2977, 64
    %v2998 = vpop.permute.xlu0 %2997
    %2999 = vrot.lane.b32.xlu0 %v2978, 64
    %v3000 = vpop.permute.xlu0 %2999
    %3001 = vrot.lane.b32.xlu0 %v2979, 64
    %v3002 = vpop.permute.xlu0 %3001
    %3003 = vrot.lane.b32.xlu0 %v2980, 64
    %v3004 = vpop.permute.xlu0 %3003
    %v3013 = vadd.f32 %v2790, %v2990
    %v3014 = vadd.f32 %v2791, %v2992
    %v3015 = vadd.f32 %v2792, %v2994
    %v3016 = vadd.f32 %v2793, %v2996
    %v3017 = vadd.f32 %v2794, %v2998
    %v3018 = vadd.f32 %v2795, %v3000
    %v3019 = vadd.f32 %v2796, %v3002
    %v3020 = vadd.f32 %v2797, %v3004
    %v3021 = vtanh.pop %v3013
    %v3022 = vtanh.pop %v3014
    %v3023 = vtanh.pop %v3015
    %v3024 = vtanh.pop %v3016
    %v3025 = vtanh.pop %v3017
    %v3026 = vtanh.pop %v3018
    %v3027 = vtanh.pop %v3019
    %v3028 = vtanh.pop %v3020
    %v3029 = vsub.f32 1.0, %v2925
    %v3030 = vsub.f32 1.0, %v2927
    %v3031 = vsub.f32 1.0, %v2929
    %v3032 = vsub.f32 1.0, %v2931
    %v3033 = vsub.f32 1.0, %v2933
    %v3034 = vsub.f32 1.0, %v2935
    %v3035 = vsub.f32 1.0, %v2937
    %v3036 = vsub.f32 1.0, %v2939
    %3045 = vrot.lane.b32.xlu0 %v3021, 96
    %v3046 = vpop.permute.xlu0 %3045
    %3047 = vrot.lane.b32.xlu0 %v3022, 96
    %v3048 = vpop.permute.xlu0 %3047
    %3049 = vrot.lane.b32.xlu0 %v3023, 96
    %v3050 = vpop.permute.xlu0 %3049
    %3051 = vrot.lane.b32.xlu0 %v3024, 96
    %v3052 = vpop.permute.xlu0 %3051
    %3053 = vrot.lane.b32.xlu0 %v3025, 96
    %v3054 = vpop.permute.xlu0 %3053
    %3055 = vrot.lane.b32.xlu0 %v3026, 96
    %v3056 = vpop.permute.xlu0 %3055
    %3057 = vrot.lane.b32.xlu0 %v3027, 96
    %v3058 = vpop.permute.xlu0 %3057
    %3059 = vrot.lane.b32.xlu0 %v3028, 96
    %v3060 = vpop.permute.xlu0 %3059
    %v3069 = vmul.f32 %v3029, %v3046
    %v3070 = vmul.f32 %v3030, %v3048
    %v3071 = vmul.f32 %v3031, %v3050
    %v3072 = vmul.f32 %v3032, %v3052
    %v3073 = vmul.f32 %v3033, %v3054
    %v3074 = vmul.f32 %v3034, %v3056
    %v3075 = vmul.f32 %v3035, %v3058
    %v3076 = vmul.f32 %v3036, %v3060
    %v3077 = vmul.f32 %v2925, %v2471
    %v3078 = vmul.f32 %v2927, %v2472
    %v3079 = vmul.f32 %v2929, %v2473
    %v3080 = vmul.f32 %v2931, %v2474
    %v3081 = vmul.f32 %v2933, %v2475
    %v3082 = vmul.f32 %v2935, %v2476
    %v3083 = vmul.f32 %v2937, %v2477
    %v3084 = vmul.f32 %v2939, %v2478
    %v3085 = vadd.f32 %v3069, %v3077
    %v3086 = vadd.f32 %v3070, %v3078
    %v3087 = vadd.f32 %v3071, %v3079
    %v3088 = vadd.f32 %v3072, %v3080
    %v3089 = vadd.f32 %v3073, %v3081
    %v3090 = vadd.f32 %v3074, %v3082
    %v3091 = vadd.f32 %v3075, %v3083
    %v3092 = vadd.f32 %v3076, %v3084
    %v3101 = vrot.slane %v3086, 7
    %v3102 = vsel %vm639, %v3101, %v3085
    %v3103 = vrot.slane %v3087, 6
    %v3104 = vsel %vm642, %v3103, %v3102
    %v3105 = vrot.slane %v3088, 5
    %v3106 = vsel %vm645, %v3105, %v3104
    %v3107 = vrot.slane %v3089, 4
    %v3108 = vsel %vm648, %v3107, %v3106
    %v3109 = vrot.slane %v3090, 3
    %v3110 = vsel %vm651, %v3109, %v3108
    %v3111 = vrot.slane %v3091, 2
    %v3112 = vsel %vm654, %v3111, %v3110
    %v3113 = vrot.slane %v3092, 1
    %v3114 = vsel %vm657, %v3113, %v3112
    %3115 = vrot.lane.b32.xlu0 %v3114, 96
    %v3116 = vpop.permute.xlu0 %3115
    %v3117 = vsel %vm182, %v3116, 0
    %3119 = vmatprep.subr.mxu0 0.0
    %3120 = vmatpush1.msra.mxu0 0.0
    %3121 = vmatprep.subr.mxu0 0.0
    %3122 = vmatpush1.msra.mxu0 0.0
    %3123 = vmatprep.subr.mxu0 0.0
    %3124 = vmatpush1.msra.mxu0 0.0
    %3125 = vmatprep.subr.mxu0 0.0
    %3126 = vmatpush1.msra.mxu0 0.0
    %3127 = vmatprep.subr.mxu0 0.0
    %3128 = vmatpush1.msra.mxu0 0.0
    %3129 = vmatprep.subr.mxu0 0.0
    %3130 = vmatpush1.msra.mxu0 0.0
    %3131 = vmatprep.subr.mxu0 0.0
    %3132 = vmatpush1.msra.mxu0 0.0
    %3133 = vmatprep.subr.mxu0 0.0
    %3134 = vmatpush1.msra.mxu0 0.0
    %3135 = vmatprep.subr.mxu0 0.0
    %3136 = vmatpush1.msra.mxu0 0.0
    %3137 = vmatprep.subr.mxu0 0.0
    %3138 = vmatpush1.msra.mxu0 0.0
    %3139 = vmatprep.subr.mxu0 0.0
    %3140 = vmatpush1.msra.mxu0 0.0
    %3141 = vmatprep.subr.mxu0 0.0
    %3142 = vmatpush1.msra.mxu0 0.0
    %3143 = vmatprep.subr.mxu0 0.0
    %3144 = vmatpush1.msra.mxu0 %v139
    %3145 = vmatprep.subr.mxu0 0.0
    %3146 = vmatpush1.msra.mxu0 %v138
    %3147 = vmatprep.subr.mxu0 0.0
    %3148 = vmatpush1.msra.mxu0 %v137
    %3149 = vmatprep.subr.mxu0 0.0
    %3150 = vmatpush1.msra.mxu0 %v136
    %3151 = vmatprep.subr.mxu0 0.0
    %3152 = vmatpush2.msra.mxu0 0.0
    %3153 = vmatprep.subr.mxu0 0.0
    %3154 = vmatpush2.msra.mxu0 0.0
    %3155 = vmatprep.subr.mxu0 0.0
    %3156 = vmatpush2.msra.mxu0 0.0
    %3157 = vmatprep.subr.mxu0 0.0
    %3158 = vmatpush2.msra.mxu0 0.0
    %3159 = vmatprep.subr.mxu0 0.0
    %3160 = vmatpush2.msra.mxu0 0.0
    %3161 = vmatprep.subr.mxu0 0.0
    %3162 = vmatpush2.msra.mxu0 0.0
    %3163 = vmatprep.subr.mxu0 0.0
    %3164 = vmatpush2.msra.mxu0 0.0
    %3165 = vmatprep.subr.mxu0 0.0
    %3166 = vmatpush2.msra.mxu0 0.0
    %3167 = vmatprep.subr.mxu0 0.0
    %3168 = vmatpush2.msra.mxu0 0.0
    %3169 = vmatprep.subr.mxu0 0.0
    %3170 = vmatpush2.msra.mxu0 0.0
    %3171 = vmatprep.subr.mxu0 0.0
    %3172 = vmatpush2.msra.mxu0 0.0
    %3173 = vmatprep.subr.mxu0 0.0
    %3174 = vmatpush2.msra.mxu0 0.0
    %3175 = vmatprep.subr.mxu0 0.0
    %3176 = vmatpush2.msra.mxu0 0.0
    %3177 = vmatprep.subr.mxu0 0.0
    %3178 = vmatpush2.msra.mxu0 0.0
    %3179 = vmatprep.subr.mxu0 0.0
    %3180 = vmatpush2.msra.mxu0 0.0
    %3181 = vmatprep.subr.mxu0 0.0
    %3182 = vmatpush2.msra.mxu0 0.0
    %3183 = vmatprep.mubr.f32.mxu0 0.0
    %3184 = vmatmul.mubr.f32.gmra.mxu0 %v3117
    %v3185 = vpop.f32.mrf.mxu0
    %v3186 = vadd.f32 %v153, %v3185
    %v3187 = vpop.f32.mrf.mxu0
    %3188 = vdwg.mxu0
    %3189 = vrot.lane.b32.xlu0 %v2675, 96
    %v3190 = vpop.permute.xlu0 %3189
    %v3191 = vsel %vm182, %v3190, 0
    %3193 = vmatprep.subr.mxu0 0.0
    %3194 = vmatpush1.msra.mxu0 0.0
    %3195 = vmatprep.subr.mxu0 0.0
    %3196 = vmatpush1.msra.mxu0 0.0
    %3197 = vmatprep.subr.mxu0 0.0
    %3198 = vmatpush1.msra.mxu0 0.0
    %3199 = vmatprep.subr.mxu0 0.0
    %3200 = vmatpush1.msra.mxu0 0.0
    %3201 = vmatprep.subr.mxu0 0.0
    %3202 = vmatpush1.msra.mxu0 0.0
    %3203 = vmatprep.subr.mxu0 0.0
    %3204 = vmatpush1.msra.mxu0 0.0
    %3205 = vmatprep.subr.mxu0 0.0
    %3206 = vmatpush1.msra.mxu0 0.0
    %3207 = vmatprep.subr.mxu0 0.0
    %3208 = vmatpush1.msra.mxu0 0.0
    %3209 = vmatprep.subr.mxu0 0.0
    %3210 = vmatpush1.msra.mxu0 0.0
    %3211 = vmatprep.subr.mxu0 0.0
    %3212 = vmatpush1.msra.mxu0 0.0
    %3213 = vmatprep.subr.mxu0 0.0
    %3214 = vmatpush1.msra.mxu0 0.0
    %3215 = vmatprep.subr.mxu0 0.0
    %3216 = vmatpush1.msra.mxu0 0.0
    %3217 = vmatprep.subr.mxu0 0.0
    %3218 = vmatpush1.msra.mxu0 %v147
    %3219 = vmatprep.subr.mxu0 0.0
    %3220 = vmatpush1.msra.mxu0 %v146
    %3221 = vmatprep.subr.mxu0 0.0
    %3222 = vmatpush1.msra.mxu0 %v145
    %3223 = vmatprep.subr.mxu0 0.0
    %3224 = vmatpush1.msra.mxu0 %v144
    %3225 = vmatprep.subr.mxu0 0.0
    %3226 = vmatpush2.msra.mxu0 0.0
    %3227 = vmatprep.subr.mxu0 0.0
    %3228 = vmatpush2.msra.mxu0 0.0
    %3229 = vmatprep.subr.mxu0 0.0
    %3230 = vmatpush2.msra.mxu0 0.0
    %3231 = vmatprep.subr.mxu0 0.0
    %3232 = vmatpush2.msra.mxu0 0.0
    %3233 = vmatprep.subr.mxu0 0.0
    %3234 = vmatpush2.msra.mxu0 0.0
    %3235 = vmatprep.subr.mxu0 0.0
    %3236 = vmatpush2.msra.mxu0 0.0
    %3237 = vmatprep.subr.mxu0 0.0
    %3238 = vmatpush2.msra.mxu0 0.0
    %3239 = vmatprep.subr.mxu0 0.0
    %3240 = vmatpush2.msra.mxu0 0.0
    %3241 = vmatprep.subr.mxu0 0.0
    %3242 = vmatpush2.msra.mxu0 0.0
    %3243 = vmatprep.subr.mxu0 0.0
    %3244 = vmatpush2.msra.mxu0 0.0
    %3245 = vmatprep.subr.mxu0 0.0
    %3246 = vmatpush2.msra.mxu0 0.0
    %3247 = vmatprep.subr.mxu0 0.0
    %3248 = vmatpush2.msra.mxu0 0.0
    %3249 = vmatprep.subr.mxu0 0.0
    %3250 = vmatpush2.msra.mxu0 0.0
    %3251 = vmatprep.subr.mxu0 0.0
    %3252 = vmatpush2.msra.mxu0 0.0
    %3253 = vmatprep.subr.mxu0 0.0
    %3254 = vmatpush2.msra.mxu0 0.0
    %3255 = vmatprep.subr.mxu0 0.0
    %3256 = vmatpush2.msra.mxu0 0.0
    %3257 = vmatprep.mubr.f32.mxu0 0.0
    %3258 = vmatmul.mubr.f32.gmra.mxu0 %v3191
    %v3259 = vpop.f32.mrf.mxu0
    %v3260 = vadd.f32 0.0, %v3259
    %v3261 = vpop.f32.mrf.mxu0
    %3262 = vdwg.mxu0
    %v3263 = vadd.f32 %v3186, %v3260
    %v3264 = vxor.u32 %v3263, 2147483648
    %v3265 = vmul.f32 %v3264, 1.442695
    %v3266 = vpow.pop %v3265
    %v3267 = vadd.f32 %v3266, 1.0
    %v3268 = vrcp.pop %v3267
    %v3269 = vmul.f32 1.0, %v3268
    %v3270 = vadd.f32 %v3260, %v811
    %3272 = vrot.lane.b32.xlu0 %v3270, 64
    %v3273 = vpop.permute.xlu0 %3272
    %v3275 = vmul.f32 %v3269, %v3273
    %3277 = vrot.lane.b32.xlu0 %v3275, 64
    %v3278 = vpop.permute.xlu0 %3277
    %v3280 = vadd.f32 %v3186, %v3278
    %v3281 = vtanh.pop %v3280
    %v3282 = vsub.f32 1.0, %v3269
    %3284 = vrot.lane.b32.xlu0 %v3281, 96
    %v3285 = vpop.permute.xlu0 %3284
    %v3287 = vmul.f32 %v3282, %v3285
    %v3288 = vmul.f32 %v3269, %v2675
    %v3289 = vadd.f32 %v3287, %v3288
    %v3291 = vcombine.high %v3289, %v3289
    %v3293 = vunpack.c.l.s4 1966171168
    %v3294 = vunpack.c.0.s8 %v3293
    %v3295 = vlaneseq
    %v3296 = vshrl.u32 %v3295, 7
    %v3297 = vsub.s32 %v3294, %v3296
    %v3298 = vrot.slane %v3289, %v3297
    %v3300 = vunpack.c.l.s4 1966171168
    %v3301 = vunpack.c.0.s8 %v3300
    %v3302 = vlaneseq
    %v3303 = vshrl.u32 %v3302, 7
    %v3304 = vsub.s32 %v3301, %v3303
    %v3305 = vrot.slane %v3291, %v3304
    %v3306 = vcombine.high %v3298, %v3298
    %v3307 = vcombine.high %v3305, %v3305
    %v3309 = vunpack.c.l.s4 1966171168
    %v3310 = vunpack.c.0.s8 %v3309
    %v3311 = vlaneseq
    %v3312 = vshrl.u32 %v3311, 7
    %v3313 = vsub.s32 %v3310, %v3312
    %v3314 = vrot.slane %v3298, %v3313
    %v3316 = vunpack.c.l.s4 1966171168
    %v3317 = vunpack.c.0.s8 %v3316
    %v3318 = vlaneseq
    %v3319 = vshrl.u32 %v3318, 7
    %v3320 = vsub.s32 %v3317, %v3319
    %v3321 = vrot.slane %v3305, %v3320
    %v3323 = vunpack.c.l.s4 1966171168
    %v3324 = vunpack.c.0.s8 %v3323
    %v3325 = vlaneseq
    %v3326 = vshrl.u32 %v3325, 7
    %v3327 = vsub.s32 %v3324, %v3326
    %v3328 = vrot.slane %v3306, %v3327
    %v3330 = vunpack.c.l.s4 1966171168
    %v3331 = vunpack.c.0.s8 %v3330
    %v3332 = vlaneseq
    %v3333 = vshrl.u32 %v3332, 7
    %v3334 = vsub.s32 %v3331, %v3333
    %v3335 = vrot.slane %v3307, %v3334
    %v3336 = vcombine.high %v3314, %v3314
    %v3337 = vcombine.high %v3321, %v3321
    %v3338 = vcombine.high %v3328, %v3328
    %v3339 = vcombine.high %v3335, %v3335
    %v3340 = vlaneseq
    %v3341 = vshrl.u32 %v3340, 7
    %v3342 = vsub.s32 0, %v3341
    %v3343 = vrot.slane %v3314, %v3342
    %v3344 = vlaneseq
    %v3345 = vshrl.u32 %v3344, 7
    %v3346 = vsub.s32 0, %v3345
    %v3347 = vrot.slane %v3328, %v3346
    %v3348 = vlaneseq
    %v3349 = vshrl.u32 %v3348, 7
    %v3350 = vsub.s32 0, %v3349
    %v3351 = vrot.slane %v3336, %v3350
    %v3352 = vlaneseq
    %v3353 = vshrl.u32 %v3352, 7
    %v3354 = vsub.s32 0, %v3353
    %v3355 = vrot.slane %v3338, %v3354
    %v3356 = vlaneseq
    %v3357 = vshrl.u32 %v3356, 7
    %v3358 = vsub.s32 0, %v3357
    %v3359 = vrot.slane %v3321, %v3358
    %v3360 = vlaneseq
    %v3361 = vshrl.u32 %v3360, 7
    %v3362 = vsub.s32 0, %v3361
    %v3363 = vrot.slane %v3335, %v3362
    %v3364 = vlaneseq
    %v3365 = vshrl.u32 %v3364, 7
    %v3366 = vsub.s32 0, %v3365
    %v3367 = vrot.slane %v3337, %v3366
    %v3368 = vlaneseq
    %v3369 = vshrl.u32 %v3368, 7
    %v3370 = vsub.s32 0, %v3369
    %v3371 = vrot.slane %v3339, %v3370
    %3372 = vrot.lane.b32.xlu0 %v3343, 96
    %v3373 = vpop.permute.xlu0 %3372
    %3374 = vrot.lane.b32.xlu0 %v3347, 96
    %v3375 = vpop.permute.xlu0 %3374
    %3376 = vrot.lane.b32.xlu0 %v3351, 96
    %v3377 = vpop.permute.xlu0 %3376
    %3378 = vrot.lane.b32.xlu0 %v3355, 96
    %v3379 = vpop.permute.xlu0 %3378
    %3380 = vrot.lane.b32.xlu0 %v3359, 96
    %v3381 = vpop.permute.xlu0 %3380
    %3382 = vrot.lane.b32.xlu0 %v3363, 96
    %v3383 = vpop.permute.xlu0 %3382
    %3384 = vrot.lane.b32.xlu0 %v3367, 96
    %v3385 = vpop.permute.xlu0 %3384
    %3386 = vrot.lane.b32.xlu0 %v3371, 96
    %v3387 = vpop.permute.xlu0 %3386
    %3396 = vst.msk [vmem:[#allocation3 + $0x4] sm:$0x1] %vm939, %v3373
    %3397 = vst.msk [vmem:[#allocation3 + $0xc] sm:$0x1] %vm939, %v3375
    %3398 = vst.msk [vmem:[#allocation3 + $0x14] sm:$0x1] %vm939, %v3377
    %3399 = vst.msk [vmem:[#allocation3 + $0x1c] sm:$0x1] %vm939, %v3379
    %3400 = vst.msk [vmem:[#allocation3 + $0x24] sm:$0x1] %vm939, %v3381
    %3401 = vst.msk [vmem:[#allocation3 + $0x2c] sm:$0x1] %vm939, %v3383
    %3402 = vst.msk [vmem:[#allocation3 + $0x34] sm:$0x1] %vm939, %v3385
    %3403 = vst.msk [vmem:[#allocation3 + $0x3c] sm:$0x1] %vm939, %v3387
    %v3404 = vld [vmem:[#allocation2 + $0x5] sm:$0x1]
    %v3405 = vld [vmem:[#allocation2 + $0xd] sm:$0x1]
    %v3406 = vld [vmem:[#allocation2 + $0x15] sm:$0x1]
    %v3407 = vld [vmem:[#allocation2 + $0x1d] sm:$0x1]
    %v3408 = vld [vmem:[#allocation2 + $0x25] sm:$0x1]
    %v3409 = vld [vmem:[#allocation2 + $0x2d] sm:$0x1]
    %v3410 = vld [vmem:[#allocation2 + $0x35] sm:$0x1]
    %v3411 = vld [vmem:[#allocation2 + $0x3d] sm:$0x1]
    %3412 = vmatprep.subr.mxu0 0.0
    %3413 = vmatpush1.msra.mxu0 0.0
    %3414 = vmatprep.subr.mxu0 0.0
    %3415 = vmatpush1.msra.mxu0 0.0
    %3416 = vmatprep.subr.mxu0 0.0
    %3417 = vmatpush1.msra.mxu0 0.0
    %3418 = vmatprep.subr.mxu0 0.0
    %3419 = vmatpush1.msra.mxu0 0.0
    %3420 = vmatprep.subr.mxu0 0.0
    %3421 = vmatpush1.msra.mxu0 0.0
    %3422 = vmatprep.subr.mxu0 0.0
    %3423 = vmatpush1.msra.mxu0 0.0
    %3424 = vmatprep.subr.mxu0 0.0
    %3425 = vmatpush1.msra.mxu0 0.0
    %3426 = vmatprep.subr.mxu0 0.0
    %3427 = vmatpush1.msra.mxu0 0.0
    %3428 = vmatprep.subr.mxu0 0.0
    %3429 = vmatpush1.msra.mxu0 0.0
    %3430 = vmatprep.subr.mxu0 0.0
    %3431 = vmatpush1.msra.mxu0 0.0
    %3432 = vmatprep.subr.mxu0 0.0
    %3433 = vmatpush1.msra.mxu0 0.0
    %3434 = vmatprep.subr.mxu0 0.0
    %3435 = vmatpush1.msra.mxu0 0.0
    %3436 = vmatprep.subr.mxu0 0.0
    %3437 = vmatpush1.msra.mxu0 %v143
    %3438 = vmatprep.subr.mxu0 0.0
    %3439 = vmatpush1.msra.mxu0 %v142
    %3440 = vmatprep.subr.mxu0 0.0
    %3441 = vmatpush1.msra.mxu0 %v141
    %3442 = vmatprep.subr.mxu0 0.0
    %3443 = vmatpush1.msra.mxu0 %v140
    %3444 = vmatprep.subr.mxu0 0.0
    %3445 = vmatpush2.msra.mxu0 0.0
    %3446 = vmatprep.subr.mxu0 0.0
    %3447 = vmatpush2.msra.mxu0 0.0
    %3448 = vmatprep.subr.mxu0 0.0
    %3449 = vmatpush2.msra.mxu0 0.0
    %3450 = vmatprep.subr.mxu0 0.0
    %3451 = vmatpush2.msra.mxu0 0.0
    %3452 = vmatprep.subr.mxu0 0.0
    %3453 = vmatpush2.msra.mxu0 0.0
    %3454 = vmatprep.subr.mxu0 0.0
    %3455 = vmatpush2.msra.mxu0 0.0
    %3456 = vmatprep.subr.mxu0 0.0
    %3457 = vmatpush2.msra.mxu0 0.0
    %3458 = vmatprep.subr.mxu0 0.0
    %3459 = vmatpush2.msra.mxu0 0.0
    %3460 = vmatprep.subr.mxu0 0.0
    %3461 = vmatpush2.msra.mxu0 0.0
    %3462 = vmatprep.subr.mxu0 0.0
    %3463 = vmatpush2.msra.mxu0 0.0
    %3464 = vmatprep.subr.mxu0 0.0
    %3465 = vmatpush2.msra.mxu0 0.0
    %3466 = vmatprep.subr.mxu0 0.0
    %3467 = vmatpush2.msra.mxu0 0.0
    %3468 = vmatprep.subr.mxu0 0.0
    %3469 = vmatpush2.msra.mxu0 0.0
    %3470 = vmatprep.subr.mxu0 0.0
    %3471 = vmatpush2.msra.mxu0 0.0
    %3472 = vmatprep.subr.mxu0 0.0
    %3473 = vmatpush2.msra.mxu0 0.0
    %3474 = vmatprep.subr.mxu0 0.0
    %3475 = vmatpush2.msra.mxu0 0.0
    %3476 = vmatprep.mubr.f32.mxu0 0.0
    %3477 = vmatmul.mubr.f32.gmra.mxu0 %v3117
    %v3478 = vpop.f32.mrf.mxu0
    %v3479 = vadd.f32 0.0, %v3478
    %v3480 = vpop.f32.mrf.mxu0
    %3481 = vdwg.mxu0
    %v3483 = vrot.slane %v3479, 1
    %v3484 = vrot.slane %v3479, 2
    %v3485 = vrot.slane %v3479, 3
    %v3486 = vrot.slane %v3479, 4
    %v3487 = vrot.slane %v3479, 5
    %v3488 = vrot.slane %v3479, 6
    %v3489 = vrot.slane %v3479, 7
    %v3498 = vadd.f32 %v3404, %v3479
    %v3499 = vadd.f32 %v3405, %v3483
    %v3500 = vadd.f32 %v3406, %v3484
    %v3501 = vadd.f32 %v3407, %v3485
    %v3502 = vadd.f32 %v3408, %v3486
    %v3503 = vadd.f32 %v3409, %v3487
    %v3504 = vadd.f32 %v3410, %v3488
    %v3505 = vadd.f32 %v3411, %v3489
    %v3506 = vxor.u32 %v3498, 2147483648
    %v3507 = vxor.u32 %v3499, 2147483648
    %v3508 = vxor.u32 %v3500, 2147483648
    %v3509 = vxor.u32 %v3501, 2147483648
    %v3510 = vxor.u32 %v3502, 2147483648
    %v3511 = vxor.u32 %v3503, 2147483648
    %v3512 = vxor.u32 %v3504, 2147483648
    %v3513 = vxor.u32 %v3505, 2147483648
    %v3514 = vmul.f32 %v3506, 1.442695
    %v3515 = vpow.pop %v3514
    %v3516 = vmul.f32 %v3507, 1.442695
    %v3517 = vpow.pop %v3516
    %v3518 = vmul.f32 %v3508, 1.442695
    %v3519 = vpow.pop %v3518
    %v3520 = vmul.f32 %v3509, 1.442695
    %v3521 = vpow.pop %v3520
    %v3522 = vmul.f32 %v3510, 1.442695
    %v3523 = vpow.pop %v3522
    %v3524 = vmul.f32 %v3511, 1.442695
    %v3525 = vpow.pop %v3524
    %v3526 = vmul.f32 %v3512, 1.442695
    %v3527 = vpow.pop %v3526
    %v3528 = vmul.f32 %v3513, 1.442695
    %v3529 = vpow.pop %v3528
    %v3530 = vadd.f32 %v3515, 1.0
    %v3531 = vadd.f32 %v3517, 1.0
    %v3532 = vadd.f32 %v3519, 1.0
    %v3533 = vadd.f32 %v3521, 1.0
    %v3534 = vadd.f32 %v3523, 1.0
    %v3535 = vadd.f32 %v3525, 1.0
    %v3536 = vadd.f32 %v3527, 1.0
    %v3537 = vadd.f32 %v3529, 1.0
    %v3538 = vrcp.pop %v3530
    %v3539 = vmul.f32 1.0, %v3538
    %v3540 = vrcp.pop %v3531
    %v3541 = vmul.f32 1.0, %v3540
    %v3542 = vrcp.pop %v3532
    %v3543 = vmul.f32 1.0, %v3542
    %v3544 = vrcp.pop %v3533
    %v3545 = vmul.f32 1.0, %v3544
    %v3546 = vrcp.pop %v3534
    %v3547 = vmul.f32 1.0, %v3546
    %v3548 = vrcp.pop %v3535
    %v3549 = vmul.f32 1.0, %v3548
    %v3550 = vrcp.pop %v3536
    %v3551 = vmul.f32 1.0, %v3550
    %v3552 = vrcp.pop %v3537
    %v3553 = vmul.f32 1.0, %v3552
    %v3554 = vadd.f32 %v3479, %v475
    %v3556 = vrot.slane %v3554, 1
    %v3557 = vrot.slane %v3554, 2
    %v3558 = vrot.slane %v3554, 3
    %v3559 = vrot.slane %v3554, 4
    %v3560 = vrot.slane %v3554, 5
    %v3561 = vrot.slane %v3554, 6
    %v3562 = vrot.slane %v3554, 7
    %3563 = vrot.lane.b32.xlu0 %v3554, 64
    %v3564 = vpop.permute.xlu0 %3563
    %3565 = vrot.lane.b32.xlu0 %v3556, 64
    %v3566 = vpop.permute.xlu0 %3565
    %3567 = vrot.lane.b32.xlu0 %v3557, 64
    %v3568 = vpop.permute.xlu0 %3567
    %3569 = vrot.lane.b32.xlu0 %v3558, 64
    %v3570 = vpop.permute.xlu0 %3569
    %3571 = vrot.lane.b32.xlu0 %v3559, 64
    %v3572 = vpop.permute.xlu0 %3571
    %3573 = vrot.lane.b32.xlu0 %v3560, 64
    %v3574 = vpop.permute.xlu0 %3573
    %3575 = vrot.lane.b32.xlu0 %v3561, 64
    %v3576 = vpop.permute.xlu0 %3575
    %3577 = vrot.lane.b32.xlu0 %v3562, 64
    %v3578 = vpop.permute.xlu0 %3577
    %v3587 = vmul.f32 %v3539, %v3564
    %v3588 = vmul.f32 %v3541, %v3566
    %v3589 = vmul.f32 %v3543, %v3568
    %v3590 = vmul.f32 %v3545, %v3570
    %v3591 = vmul.f32 %v3547, %v3572
    %v3592 = vmul.f32 %v3549, %v3574
    %v3593 = vmul.f32 %v3551, %v3576
    %v3594 = vmul.f32 %v3553, %v3578
    %3603 = vrot.lane.b32.xlu0 %v3587, 64
    %v3604 = vpop.permute.xlu0 %3603
    %3605 = vrot.lane.b32.xlu0 %v3588, 64
    %v3606 = vpop.permute.xlu0 %3605
    %3607 = vrot.lane.b32.xlu0 %v3589, 64
    %v3608 = vpop.permute.xlu0 %3607
    %3609 = vrot.lane.b32.xlu0 %v3590, 64
    %v3610 = vpop.permute.xlu0 %3609
    %3611 = vrot.lane.b32.xlu0 %v3591, 64
    %v3612 = vpop.permute.xlu0 %3611
    %3613 = vrot.lane.b32.xlu0 %v3592, 64
    %v3614 = vpop.permute.xlu0 %3613
    %3615 = vrot.lane.b32.xlu0 %v3593, 64
    %v3616 = vpop.permute.xlu0 %3615
    %3617 = vrot.lane.b32.xlu0 %v3594, 64
    %v3618 = vpop.permute.xlu0 %3617
    %v3627 = vadd.f32 %v3404, %v3604
    %v3628 = vadd.f32 %v3405, %v3606
    %v3629 = vadd.f32 %v3406, %v3608
    %v3630 = vadd.f32 %v3407, %v3610
    %v3631 = vadd.f32 %v3408, %v3612
    %v3632 = vadd.f32 %v3409, %v3614
    %v3633 = vadd.f32 %v3410, %v3616
    %v3634 = vadd.f32 %v3411, %v3618
    %v3635 = vtanh.pop %v3627
    %v3636 = vtanh.pop %v3628
    %v3637 = vtanh.pop %v3629
    %v3638 = vtanh.pop %v3630
    %v3639 = vtanh.pop %v3631
    %v3640 = vtanh.pop %v3632
    %v3641 = vtanh.pop %v3633
    %v3642 = vtanh.pop %v3634
    %v3643 = vsub.f32 1.0, %v3539
    %v3644 = vsub.f32 1.0, %v3541
    %v3645 = vsub.f32 1.0, %v3543
    %v3646 = vsub.f32 1.0, %v3545
    %v3647 = vsub.f32 1.0, %v3547
    %v3648 = vsub.f32 1.0, %v3549
    %v3649 = vsub.f32 1.0, %v3551
    %v3650 = vsub.f32 1.0, %v3553
    %3659 = vrot.lane.b32.xlu0 %v3635, 96
    %v3660 = vpop.permute.xlu0 %3659
    %3661 = vrot.lane.b32.xlu0 %v3636, 96
    %v3662 = vpop.permute.xlu0 %3661
    %3663 = vrot.lane.b32.xlu0 %v3637, 96
    %v3664 = vpop.permute.xlu0 %3663
    %3665 = vrot.lane.b32.xlu0 %v3638, 96
    %v3666 = vpop.permute.xlu0 %3665
    %3667 = vrot.lane.b32.xlu0 %v3639, 96
    %v3668 = vpop.permute.xlu0 %3667
    %3669 = vrot.lane.b32.xlu0 %v3640, 96
    %v3670 = vpop.permute.xlu0 %3669
    %3671 = vrot.lane.b32.xlu0 %v3641, 96
    %v3672 = vpop.permute.xlu0 %3671
    %3673 = vrot.lane.b32.xlu0 %v3642, 96
    %v3674 = vpop.permute.xlu0 %3673
    %v3683 = vmul.f32 %v3643, %v3660
    %v3684 = vmul.f32 %v3644, %v3662
    %v3685 = vmul.f32 %v3645, %v3664
    %v3686 = vmul.f32 %v3646, %v3666
    %v3687 = vmul.f32 %v3647, %v3668
    %v3688 = vmul.f32 %v3648, %v3670
    %v3689 = vmul.f32 %v3649, %v3672
    %v3690 = vmul.f32 %v3650, %v3674
    %v3691 = vmul.f32 %v3539, %v3085
    %v3692 = vmul.f32 %v3541, %v3086
    %v3693 = vmul.f32 %v3543, %v3087
    %v3694 = vmul.f32 %v3545, %v3088
    %v3695 = vmul.f32 %v3547, %v3089
    %v3696 = vmul.f32 %v3549, %v3090
    %v3697 = vmul.f32 %v3551, %v3091
    %v3698 = vmul.f32 %v3553, %v3092
    %v3699 = vadd.f32 %v3683, %v3691
    %v3700 = vadd.f32 %v3684, %v3692
    %v3701 = vadd.f32 %v3685, %v3693
    %v3702 = vadd.f32 %v3686, %v3694
    %v3703 = vadd.f32 %v3687, %v3695
    %v3704 = vadd.f32 %v3688, %v3696
    %v3705 = vadd.f32 %v3689, %v3697
    %v3706 = vadd.f32 %v3690, %v3698
    %v3715 = vrot.slane %v3700, 7
    %v3716 = vsel %vm639, %v3715, %v3699
    %v3717 = vrot.slane %v3701, 6
    %v3718 = vsel %vm642, %v3717, %v3716
    %v3719 = vrot.slane %v3702, 5
    %v3720 = vsel %vm645, %v3719, %v3718
    %v3721 = vrot.slane %v3703, 4
    %v3722 = vsel %vm648, %v3721, %v3720
    %v3723 = vrot.slane %v3704, 3
    %v3724 = vsel %vm651, %v3723, %v3722
    %v3725 = vrot.slane %v3705, 2
    %v3726 = vsel %vm654, %v3725, %v3724
    %v3727 = vrot.slane %v3706, 1
    %v3728 = vsel %vm657, %v3727, %v3726
    %3729 = vrot.lane.b32.xlu0 %v3728, 96
    %v3730 = vpop.permute.xlu0 %3729
    %v3731 = vsel %vm182, %v3730, 0
    %3733 = vmatprep.subr.mxu0 0.0
    %3734 = vmatpush1.msra.mxu0 0.0
    %3735 = vmatprep.subr.mxu0 0.0
    %3736 = vmatpush1.msra.mxu0 0.0
    %3737 = vmatprep.subr.mxu0 0.0
    %3738 = vmatpush1.msra.mxu0 0.0
    %3739 = vmatprep.subr.mxu0 0.0
    %3740 = vmatpush1.msra.mxu0 0.0
    %3741 = vmatprep.subr.mxu0 0.0
    %3742 = vmatpush1.msra.mxu0 0.0
    %3743 = vmatprep.subr.mxu0 0.0
    %3744 = vmatpush1.msra.mxu0 0.0
    %3745 = vmatprep.subr.mxu0 0.0
    %3746 = vmatpush1.msra.mxu0 0.0
    %3747 = vmatprep.subr.mxu0 0.0
    %3748 = vmatpush1.msra.mxu0 0.0
    %3749 = vmatprep.subr.mxu0 0.0
    %3750 = vmatpush1.msra.mxu0 0.0
    %3751 = vmatprep.subr.mxu0 0.0
    %3752 = vmatpush1.msra.mxu0 0.0
    %3753 = vmatprep.subr.mxu0 0.0
    %3754 = vmatpush1.msra.mxu0 0.0
    %3755 = vmatprep.subr.mxu0 0.0
    %3756 = vmatpush1.msra.mxu0 0.0
    %3757 = vmatprep.subr.mxu0 0.0
    %3758 = vmatpush1.msra.mxu0 %v139
    %3759 = vmatprep.subr.mxu0 0.0
    %3760 = vmatpush1.msra.mxu0 %v138
    %3761 = vmatprep.subr.mxu0 0.0
    %3762 = vmatpush1.msra.mxu0 %v137
    %3763 = vmatprep.subr.mxu0 0.0
    %3764 = vmatpush1.msra.mxu0 %v136
    %3765 = vmatprep.subr.mxu0 0.0
    %3766 = vmatpush2.msra.mxu0 0.0
    %3767 = vmatprep.subr.mxu0 0.0
    %3768 = vmatpush2.msra.mxu0 0.0
    %3769 = vmatprep.subr.mxu0 0.0
    %3770 = vmatpush2.msra.mxu0 0.0
    %3771 = vmatprep.subr.mxu0 0.0
    %3772 = vmatpush2.msra.mxu0 0.0
    %3773 = vmatprep.subr.mxu0 0.0
    %3774 = vmatpush2.msra.mxu0 0.0
    %3775 = vmatprep.subr.mxu0 0.0
    %3776 = vmatpush2.msra.mxu0 0.0
    %3777 = vmatprep.subr.mxu0 0.0
    %3778 = vmatpush2.msra.mxu0 0.0
    %3779 = vmatprep.subr.mxu0 0.0
    %3780 = vmatpush2.msra.mxu0 0.0
    %3781 = vmatprep.subr.mxu0 0.0
    %3782 = vmatpush2.msra.mxu0 0.0
    %3783 = vmatprep.subr.mxu0 0.0
    %3784 = vmatpush2.msra.mxu0 0.0
    %3785 = vmatprep.subr.mxu0 0.0
    %3786 = vmatpush2.msra.mxu0 0.0
    %3787 = vmatprep.subr.mxu0 0.0
    %3788 = vmatpush2.msra.mxu0 0.0
    %3789 = vmatprep.subr.mxu0 0.0
    %3790 = vmatpush2.msra.mxu0 0.0
    %3791 = vmatprep.subr.mxu0 0.0
    %3792 = vmatpush2.msra.mxu0 0.0
    %3793 = vmatprep.subr.mxu0 0.0
    %3794 = vmatpush2.msra.mxu0 0.0
    %3795 = vmatprep.subr.mxu0 0.0
    %3796 = vmatpush2.msra.mxu0 0.0
    %3797 = vmatprep.mubr.f32.mxu0 0.0
    %3798 = vmatmul.mubr.f32.gmra.mxu0 %v3731
    %v3799 = vpop.f32.mrf.mxu0
    %v3800 = vadd.f32 %v153, %v3799
    %v3801 = vpop.f32.mrf.mxu0
    %3802 = vdwg.mxu0
    %3803 = vrot.lane.b32.xlu0 %v3289, 96
    %v3804 = vpop.permute.xlu0 %3803
    %v3805 = vsel %vm182, %v3804, 0
    %3807 = vmatprep.subr.mxu0 0.0
    %3808 = vmatpush1.msra.mxu0 0.0
    %3809 = vmatprep.subr.mxu0 0.0
    %3810 = vmatpush1.msra.mxu0 0.0
    %3811 = vmatprep.subr.mxu0 0.0
    %3812 = vmatpush1.msra.mxu0 0.0
    %3813 = vmatprep.subr.mxu0 0.0
    %3814 = vmatpush1.msra.mxu0 0.0
    %3815 = vmatprep.subr.mxu0 0.0
    %3816 = vmatpush1.msra.mxu0 0.0
    %3817 = vmatprep.subr.mxu0 0.0
    %3818 = vmatpush1.msra.mxu0 0.0
    %3819 = vmatprep.subr.mxu0 0.0
    %3820 = vmatpush1.msra.mxu0 0.0
    %3821 = vmatprep.subr.mxu0 0.0
    %3822 = vmatpush1.msra.mxu0 0.0
    %3823 = vmatprep.subr.mxu0 0.0
    %3824 = vmatpush1.msra.mxu0 0.0
    %3825 = vmatprep.subr.mxu0 0.0
    %3826 = vmatpush1.msra.mxu0 0.0
    %3827 = vmatprep.subr.mxu0 0.0
    %3828 = vmatpush1.msra.mxu0 0.0
    %3829 = vmatprep.subr.mxu0 0.0
    %3830 = vmatpush1.msra.mxu0 0.0
    %3831 = vmatprep.subr.mxu0 0.0
    %3832 = vmatpush1.msra.mxu0 %v147
    %3833 = vmatprep.subr.mxu0 0.0
    %3834 = vmatpush1.msra.mxu0 %v146
    %3835 = vmatprep.subr.mxu0 0.0
    %3836 = vmatpush1.msra.mxu0 %v145
    %3837 = vmatprep.subr.mxu0 0.0
    %3838 = vmatpush1.msra.mxu0 %v144
    %3839 = vmatprep.subr.mxu0 0.0
    %3840 = vmatpush2.msra.mxu0 0.0
    %3841 = vmatprep.subr.mxu0 0.0
    %3842 = vmatpush2.msra.mxu0 0.0
    %3843 = vmatprep.subr.mxu0 0.0
    %3844 = vmatpush2.msra.mxu0 0.0
    %3845 = vmatprep.subr.mxu0 0.0
    %3846 = vmatpush2.msra.mxu0 0.0
    %3847 = vmatprep.subr.mxu0 0.0
    %3848 = vmatpush2.msra.mxu0 0.0
    %3849 = vmatprep.subr.mxu0 0.0
    %3850 = vmatpush2.msra.mxu0 0.0
    %3851 = vmatprep.subr.mxu0 0.0
    %3852 = vmatpush2.msra.mxu0 0.0
    %3853 = vmatprep.subr.mxu0 0.0
    %3854 = vmatpush2.msra.mxu0 0.0
    %3855 = vmatprep.subr.mxu0 0.0
    %3856 = vmatpush2.msra.mxu0 0.0
    %3857 = vmatprep.subr.mxu0 0.0
    %3858 = vmatpush2.msra.mxu0 0.0
    %3859 = vmatprep.subr.mxu0 0.0
    %3860 = vmatpush2.msra.mxu0 0.0
    %3861 = vmatprep.subr.mxu0 0.0
    %3862 = vmatpush2.msra.mxu0 0.0
    %3863 = vmatprep.subr.mxu0 0.0
    %3864 = vmatpush2.msra.mxu0 0.0
    %3865 = vmatprep.subr.mxu0 0.0
    %3866 = vmatpush2.msra.mxu0 0.0
    %3867 = vmatprep.subr.mxu0 0.0
    %3868 = vmatpush2.msra.mxu0 0.0
    %3869 = vmatprep.subr.mxu0 0.0
    %3870 = vmatpush2.msra.mxu0 0.0
    %3871 = vmatprep.mubr.f32.mxu0 0.0
    %3872 = vmatmul.mubr.f32.gmra.mxu0 %v3805
    %v3873 = vpop.f32.mrf.mxu0
    %v3874 = vadd.f32 0.0, %v3873
    %v3875 = vpop.f32.mrf.mxu0
    %3876 = vdwg.mxu0
    %v3877 = vadd.f32 %v3800, %v3874
    %v3878 = vxor.u32 %v3877, 2147483648
    %v3879 = vmul.f32 %v3878, 1.442695
    %v3880 = vpow.pop %v3879
    %v3881 = vadd.f32 %v3880, 1.0
    %v3882 = vrcp.pop %v3881
    %v3883 = vmul.f32 1.0, %v3882
    %v3884 = vadd.f32 %v3874, %v811
    %3886 = vrot.lane.b32.xlu0 %v3884, 64
    %v3887 = vpop.permute.xlu0 %3886
    %v3889 = vmul.f32 %v3883, %v3887
    %3891 = vrot.lane.b32.xlu0 %v3889, 64
    %v3892 = vpop.permute.xlu0 %3891
    %v3894 = vadd.f32 %v3800, %v3892
    %v3895 = vtanh.pop %v3894
    %v3896 = vsub.f32 1.0, %v3883
    %3898 = vrot.lane.b32.xlu0 %v3895, 96
    %v3899 = vpop.permute.xlu0 %3898
    %v3901 = vmul.f32 %v3896, %v3899
    %v3902 = vmul.f32 %v3883, %v3289
    %v3903 = vadd.f32 %v3901, %v3902
    %v3905 = vcombine.high %v3903, %v3903
    %v3907 = vunpack.c.l.s4 1966171168
    %v3908 = vunpack.c.0.s8 %v3907
    %v3909 = vlaneseq
    %v3910 = vshrl.u32 %v3909, 7
    %v3911 = vsub.s32 %v3908, %v3910
    %v3912 = vrot.slane %v3903, %v3911
    %v3914 = vunpack.c.l.s4 1966171168
    %v3915 = vunpack.c.0.s8 %v3914
    %v3916 = vlaneseq
    %v3917 = vshrl.u32 %v3916, 7
    %v3918 = vsub.s32 %v3915, %v3917
    %v3919 = vrot.slane %v3905, %v3918
    %v3920 = vcombine.high %v3912, %v3912
    %v3921 = vcombine.high %v3919, %v3919
    %v3923 = vunpack.c.l.s4 1966171168
    %v3924 = vunpack.c.0.s8 %v3923
    %v3925 = vlaneseq
    %v3926 = vshrl.u32 %v3925, 7
    %v3927 = vsub.s32 %v3924, %v3926
    %v3928 = vrot.slane %v3912, %v3927
    %v3930 = vunpack.c.l.s4 1966171168
    %v3931 = vunpack.c.0.s8 %v3930
    %v3932 = vlaneseq
    %v3933 = vshrl.u32 %v3932, 7
    %v3934 = vsub.s32 %v3931, %v3933
    %v3935 = vrot.slane %v3919, %v3934
    %v3937 = vunpack.c.l.s4 1966171168
    %v3938 = vunpack.c.0.s8 %v3937
    %v3939 = vlaneseq
    %v3940 = vshrl.u32 %v3939, 7
    %v3941 = vsub.s32 %v3938, %v3940
    %v3942 = vrot.slane %v3920, %v3941
    %v3944 = vunpack.c.l.s4 1966171168
    %v3945 = vunpack.c.0.s8 %v3944
    %v3946 = vlaneseq
    %v3947 = vshrl.u32 %v3946, 7
    %v3948 = vsub.s32 %v3945, %v3947
    %v3949 = vrot.slane %v3921, %v3948
    %v3950 = vcombine.high %v3928, %v3928
    %v3951 = vcombine.high %v3935, %v3935
    %v3952 = vcombine.high %v3942, %v3942
    %v3953 = vcombine.high %v3949, %v3949
    %v3954 = vlaneseq
    %v3955 = vshrl.u32 %v3954, 7
    %v3956 = vsub.s32 0, %v3955
    %v3957 = vrot.slane %v3928, %v3956
    %v3958 = vlaneseq
    %v3959 = vshrl.u32 %v3958, 7
    %v3960 = vsub.s32 0, %v3959
    %v3961 = vrot.slane %v3942, %v3960
    %v3962 = vlaneseq
    %v3963 = vshrl.u32 %v3962, 7
    %v3964 = vsub.s32 0, %v3963
    %v3965 = vrot.slane %v3950, %v3964
    %v3966 = vlaneseq
    %v3967 = vshrl.u32 %v3966, 7
    %v3968 = vsub.s32 0, %v3967
    %v3969 = vrot.slane %v3952, %v3968
    %v3970 = vlaneseq
    %v3971 = vshrl.u32 %v3970, 7
    %v3972 = vsub.s32 0, %v3971
    %v3973 = vrot.slane %v3935, %v3972
    %v3974 = vlaneseq
    %v3975 = vshrl.u32 %v3974, 7
    %v3976 = vsub.s32 0, %v3975
    %v3977 = vrot.slane %v3949, %v3976
    %v3978 = vlaneseq
    %v3979 = vshrl.u32 %v3978, 7
    %v3980 = vsub.s32 0, %v3979
    %v3981 = vrot.slane %v3951, %v3980
    %v3982 = vlaneseq
    %v3983 = vshrl.u32 %v3982, 7
    %v3984 = vsub.s32 0, %v3983
    %v3985 = vrot.slane %v3953, %v3984
    %3986 = vrot.lane.b32.xlu0 %v3957, 96
    %v3987 = vpop.permute.xlu0 %3986
    %3988 = vrot.lane.b32.xlu0 %v3961, 96
    %v3989 = vpop.permute.xlu0 %3988
    %3990 = vrot.lane.b32.xlu0 %v3965, 96
    %v3991 = vpop.permute.xlu0 %3990
    %3992 = vrot.lane.b32.xlu0 %v3969, 96
    %v3993 = vpop.permute.xlu0 %3992
    %3994 = vrot.lane.b32.xlu0 %v3973, 96
    %v3995 = vpop.permute.xlu0 %3994
    %3996 = vrot.lane.b32.xlu0 %v3977, 96
    %v3997 = vpop.permute.xlu0 %3996
    %3998 = vrot.lane.b32.xlu0 %v3981, 96
    %v3999 = vpop.permute.xlu0 %3998
    %4000 = vrot.lane.b32.xlu0 %v3985, 96
    %v4001 = vpop.permute.xlu0 %4000
    %4010 = vst.msk [vmem:[#allocation3 + $0x5] sm:$0x1] %vm939, %v3987
    %4011 = vst.msk [vmem:[#allocation3 + $0xd] sm:$0x1] %vm939, %v3989
    %4012 = vst.msk [vmem:[#allocation3 + $0x15] sm:$0x1] %vm939, %v3991
    %4013 = vst.msk [vmem:[#allocation3 + $0x1d] sm:$0x1] %vm939, %v3993
    %4014 = vst.msk [vmem:[#allocation3 + $0x25] sm:$0x1] %vm939, %v3995
    %4015 = vst.msk [vmem:[#allocation3 + $0x2d] sm:$0x1] %vm939, %v3997
    %4016 = vst.msk [vmem:[#allocation3 + $0x35] sm:$0x1] %vm939, %v3999
    %4017 = vst.msk [vmem:[#allocation3 + $0x3d] sm:$0x1] %vm939, %v4001
    %v4018 = vld [vmem:[#allocation2 + $0x6] sm:$0x1]
    %v4019 = vld [vmem:[#allocation2 + $0xe] sm:$0x1]
    %v4020 = vld [vmem:[#allocation2 + $0x16] sm:$0x1]
    %v4021 = vld [vmem:[#allocation2 + $0x1e] sm:$0x1]
    %v4022 = vld [vmem:[#allocation2 + $0x26] sm:$0x1]
    %v4023 = vld [vmem:[#allocation2 + $0x2e] sm:$0x1]
    %v4024 = vld [vmem:[#allocation2 + $0x36] sm:$0x1]
    %v4025 = vld [vmem:[#allocation2 + $0x3e] sm:$0x1]
    %4026 = vmatprep.subr.mxu0 0.0
    %4027 = vmatpush1.msra.mxu0 0.0
    %4028 = vmatprep.subr.mxu0 0.0
    %4029 = vmatpush1.msra.mxu0 0.0
    %4030 = vmatprep.subr.mxu0 0.0
    %4031 = vmatpush1.msra.mxu0 0.0
    %4032 = vmatprep.subr.mxu0 0.0
    %4033 = vmatpush1.msra.mxu0 0.0
    %4034 = vmatprep.subr.mxu0 0.0
    %4035 = vmatpush1.msra.mxu0 0.0
    %4036 = vmatprep.subr.mxu0 0.0
    %4037 = vmatpush1.msra.mxu0 0.0
    %4038 = vmatprep.subr.mxu0 0.0
    %4039 = vmatpush1.msra.mxu0 0.0
    %4040 = vmatprep.subr.mxu0 0.0
    %4041 = vmatpush1.msra.mxu0 0.0
    %4042 = vmatprep.subr.mxu0 0.0
    %4043 = vmatpush1.msra.mxu0 0.0
    %4044 = vmatprep.subr.mxu0 0.0
    %4045 = vmatpush1.msra.mxu0 0.0
    %4046 = vmatprep.subr.mxu0 0.0
    %4047 = vmatpush1.msra.mxu0 0.0
    %4048 = vmatprep.subr.mxu0 0.0
    %4049 = vmatpush1.msra.mxu0 0.0
    %4050 = vmatprep.subr.mxu0 0.0
    %4051 = vmatpush1.msra.mxu0 %v143
    %4052 = vmatprep.subr.mxu0 0.0
    %4053 = vmatpush1.msra.mxu0 %v142
    %4054 = vmatprep.subr.mxu0 0.0
    %4055 = vmatpush1.msra.mxu0 %v141
    %4056 = vmatprep.subr.mxu0 0.0
    %4057 = vmatpush1.msra.mxu0 %v140
    %4058 = vmatprep.subr.mxu0 0.0
    %4059 = vmatpush2.msra.mxu0 0.0
    %4060 = vmatprep.subr.mxu0 0.0
    %4061 = vmatpush2.msra.mxu0 0.0
    %4062 = vmatprep.subr.mxu0 0.0
    %4063 = vmatpush2.msra.mxu0 0.0
    %4064 = vmatprep.subr.mxu0 0.0
    %4065 = vmatpush2.msra.mxu0 0.0
    %4066 = vmatprep.subr.mxu0 0.0
    %4067 = vmatpush2.msra.mxu0 0.0
    %4068 = vmatprep.subr.mxu0 0.0
    %4069 = vmatpush2.msra.mxu0 0.0
    %4070 = vmatprep.subr.mxu0 0.0
    %4071 = vmatpush2.msra.mxu0 0.0
    %4072 = vmatprep.subr.mxu0 0.0
    %4073 = vmatpush2.msra.mxu0 0.0
    %4074 = vmatprep.subr.mxu0 0.0
    %4075 = vmatpush2.msra.mxu0 0.0
    %4076 = vmatprep.subr.mxu0 0.0
    %4077 = vmatpush2.msra.mxu0 0.0
    %4078 = vmatprep.subr.mxu0 0.0
    %4079 = vmatpush2.msra.mxu0 0.0
    %4080 = vmatprep.subr.mxu0 0.0
    %4081 = vmatpush2.msra.mxu0 0.0
    %4082 = vmatprep.subr.mxu0 0.0
    %4083 = vmatpush2.msra.mxu0 0.0
    %4084 = vmatprep.subr.mxu0 0.0
    %4085 = vmatpush2.msra.mxu0 0.0
    %4086 = vmatprep.subr.mxu0 0.0
    %4087 = vmatpush2.msra.mxu0 0.0
    %4088 = vmatprep.subr.mxu0 0.0
    %4089 = vmatpush2.msra.mxu0 0.0
    %4090 = vmatprep.mubr.f32.mxu0 0.0
    %4091 = vmatmul.mubr.f32.gmra.mxu0 %v3731
    %v4092 = vpop.f32.mrf.mxu0
    %v4093 = vadd.f32 0.0, %v4092
    %v4094 = vpop.f32.mrf.mxu0
    %4095 = vdwg.mxu0
    %v4097 = vrot.slane %v4093, 1
    %v4098 = vrot.slane %v4093, 2
    %v4099 = vrot.slane %v4093, 3
    %v4100 = vrot.slane %v4093, 4
    %v4101 = vrot.slane %v4093, 5
    %v4102 = vrot.slane %v4093, 6
    %v4103 = vrot.slane %v4093, 7
    %v4112 = vadd.f32 %v4018, %v4093
    %v4113 = vadd.f32 %v4019, %v4097
    %v4114 = vadd.f32 %v4020, %v4098
    %v4115 = vadd.f32 %v4021, %v4099
    %v4116 = vadd.f32 %v4022, %v4100
    %v4117 = vadd.f32 %v4023, %v4101
    %v4118 = vadd.f32 %v4024, %v4102
    %v4119 = vadd.f32 %v4025, %v4103
    %v4120 = vxor.u32 %v4112, 2147483648
    %v4121 = vxor.u32 %v4113, 2147483648
    %v4122 = vxor.u32 %v4114, 2147483648
    %v4123 = vxor.u32 %v4115, 2147483648
    %v4124 = vxor.u32 %v4116, 2147483648
    %v4125 = vxor.u32 %v4117, 2147483648
    %v4126 = vxor.u32 %v4118, 2147483648
    %v4127 = vxor.u32 %v4119, 2147483648
    %v4128 = vmul.f32 %v4120, 1.442695
    %v4129 = vpow.pop %v4128
    %v4130 = vmul.f32 %v4121, 1.442695
    %v4131 = vpow.pop %v4130
    %v4132 = vmul.f32 %v4122, 1.442695
    %v4133 = vpow.pop %v4132
    %v4134 = vmul.f32 %v4123, 1.442695
    %v4135 = vpow.pop %v4134
    %v4136 = vmul.f32 %v4124, 1.442695
    %v4137 = vpow.pop %v4136
    %v4138 = vmul.f32 %v4125, 1.442695
    %v4139 = vpow.pop %v4138
    %v4140 = vmul.f32 %v4126, 1.442695
    %v4141 = vpow.pop %v4140
    %v4142 = vmul.f32 %v4127, 1.442695
    %v4143 = vpow.pop %v4142
    %v4144 = vadd.f32 %v4129, 1.0
    %v4145 = vadd.f32 %v4131, 1.0
    %v4146 = vadd.f32 %v4133, 1.0
    %v4147 = vadd.f32 %v4135, 1.0
    %v4148 = vadd.f32 %v4137, 1.0
    %v4149 = vadd.f32 %v4139, 1.0
    %v4150 = vadd.f32 %v4141, 1.0
    %v4151 = vadd.f32 %v4143, 1.0
    %v4152 = vrcp.pop %v4144
    %v4153 = vmul.f32 1.0, %v4152
    %v4154 = vrcp.pop %v4145
    %v4155 = vmul.f32 1.0, %v4154
    %v4156 = vrcp.pop %v4146
    %v4157 = vmul.f32 1.0, %v4156
    %v4158 = vrcp.pop %v4147
    %v4159 = vmul.f32 1.0, %v4158
    %v4160 = vrcp.pop %v4148
    %v4161 = vmul.f32 1.0, %v4160
    %v4162 = vrcp.pop %v4149
    %v4163 = vmul.f32 1.0, %v4162
    %v4164 = vrcp.pop %v4150
    %v4165 = vmul.f32 1.0, %v4164
    %v4166 = vrcp.pop %v4151
    %v4167 = vmul.f32 1.0, %v4166
    %v4168 = vadd.f32 %v4093, %v475
    %v4170 = vrot.slane %v4168, 1
    %v4171 = vrot.slane %v4168, 2
    %v4172 = vrot.slane %v4168, 3
    %v4173 = vrot.slane %v4168, 4
    %v4174 = vrot.slane %v4168, 5
    %v4175 = vrot.slane %v4168, 6
    %v4176 = vrot.slane %v4168, 7
    %4177 = vrot.lane.b32.xlu0 %v4168, 64
    %v4178 = vpop.permute.xlu0 %4177
    %4179 = vrot.lane.b32.xlu0 %v4170, 64
    %v4180 = vpop.permute.xlu0 %4179
    %4181 = vrot.lane.b32.xlu0 %v4171, 64
    %v4182 = vpop.permute.xlu0 %4181
    %4183 = vrot.lane.b32.xlu0 %v4172, 64
    %v4184 = vpop.permute.xlu0 %4183
    %4185 = vrot.lane.b32.xlu0 %v4173, 64
    %v4186 = vpop.permute.xlu0 %4185
    %4187 = vrot.lane.b32.xlu0 %v4174, 64
    %v4188 = vpop.permute.xlu0 %4187
    %4189 = vrot.lane.b32.xlu0 %v4175, 64
    %v4190 = vpop.permute.xlu0 %4189
    %4191 = vrot.lane.b32.xlu0 %v4176, 64
    %v4192 = vpop.permute.xlu0 %4191
    %v4201 = vmul.f32 %v4153, %v4178
    %v4202 = vmul.f32 %v4155, %v4180
    %v4203 = vmul.f32 %v4157, %v4182
    %v4204 = vmul.f32 %v4159, %v4184
    %v4205 = vmul.f32 %v4161, %v4186
    %v4206 = vmul.f32 %v4163, %v4188
    %v4207 = vmul.f32 %v4165, %v4190
    %v4208 = vmul.f32 %v4167, %v4192
    %4217 = vrot.lane.b32.xlu0 %v4201, 64
    %v4218 = vpop.permute.xlu0 %4217
    %4219 = vrot.lane.b32.xlu0 %v4202, 64
    %v4220 = vpop.permute.xlu0 %4219
    %4221 = vrot.lane.b32.xlu0 %v4203, 64
    %v4222 = vpop.permute.xlu0 %4221
    %4223 = vrot.lane.b32.xlu0 %v4204, 64
    %v4224 = vpop.permute.xlu0 %4223
    %4225 = vrot.lane.b32.xlu0 %v4205, 64
    %v4226 = vpop.permute.xlu0 %4225
    %4227 = vrot.lane.b32.xlu0 %v4206, 64
    %v4228 = vpop.permute.xlu0 %4227
    %4229 = vrot.lane.b32.xlu0 %v4207, 64
    %v4230 = vpop.permute.xlu0 %4229
    %4231 = vrot.lane.b32.xlu0 %v4208, 64
    %v4232 = vpop.permute.xlu0 %4231
    %v4241 = vadd.f32 %v4018, %v4218
    %v4242 = vadd.f32 %v4019, %v4220
    %v4243 = vadd.f32 %v4020, %v4222
    %v4244 = vadd.f32 %v4021, %v4224
    %v4245 = vadd.f32 %v4022, %v4226
    %v4246 = vadd.f32 %v4023, %v4228
    %v4247 = vadd.f32 %v4024, %v4230
    %v4248 = vadd.f32 %v4025, %v4232
    %v4249 = vtanh.pop %v4241
    %v4250 = vtanh.pop %v4242
    %v4251 = vtanh.pop %v4243
    %v4252 = vtanh.pop %v4244
    %v4253 = vtanh.pop %v4245
    %v4254 = vtanh.pop %v4246
    %v4255 = vtanh.pop %v4247
    %v4256 = vtanh.pop %v4248
    %v4257 = vsub.f32 1.0, %v4153
    %v4258 = vsub.f32 1.0, %v4155
    %v4259 = vsub.f32 1.0, %v4157
    %v4260 = vsub.f32 1.0, %v4159
    %v4261 = vsub.f32 1.0, %v4161
    %v4262 = vsub.f32 1.0, %v4163
    %v4263 = vsub.f32 1.0, %v4165
    %v4264 = vsub.f32 1.0, %v4167
    %4273 = vrot.lane.b32.xlu0 %v4249, 96
    %v4274 = vpop.permute.xlu0 %4273
    %4275 = vrot.lane.b32.xlu0 %v4250, 96
    %v4276 = vpop.permute.xlu0 %4275
    %4277 = vrot.lane.b32.xlu0 %v4251, 96
    %v4278 = vpop.permute.xlu0 %4277
    %4279 = vrot.lane.b32.xlu0 %v4252, 96
    %v4280 = vpop.permute.xlu0 %4279
    %4281 = vrot.lane.b32.xlu0 %v4253, 96
    %v4282 = vpop.permute.xlu0 %4281
    %4283 = vrot.lane.b32.xlu0 %v4254, 96
    %v4284 = vpop.permute.xlu0 %4283
    %4285 = vrot.lane.b32.xlu0 %v4255, 96
    %v4286 = vpop.permute.xlu0 %4285
    %4287 = vrot.lane.b32.xlu0 %v4256, 96
    %v4288 = vpop.permute.xlu0 %4287
    %v4297 = vmul.f32 %v4257, %v4274
    %v4298 = vmul.f32 %v4258, %v4276
    %v4299 = vmul.f32 %v4259, %v4278
    %v4300 = vmul.f32 %v4260, %v4280
    %v4301 = vmul.f32 %v4261, %v4282
    %v4302 = vmul.f32 %v4262, %v4284
    %v4303 = vmul.f32 %v4263, %v4286
    %v4304 = vmul.f32 %v4264, %v4288
    %v4305 = vmul.f32 %v4153, %v3699
    %v4306 = vmul.f32 %v4155, %v3700
    %v4307 = vmul.f32 %v4157, %v3701
    %v4308 = vmul.f32 %v4159, %v3702
    %v4309 = vmul.f32 %v4161, %v3703
    %v4310 = vmul.f32 %v4163, %v3704
    %v4311 = vmul.f32 %v4165, %v3705
    %v4312 = vmul.f32 %v4167, %v3706
    %v4313 = vadd.f32 %v4297, %v4305
    %v4314 = vadd.f32 %v4298, %v4306
    %v4315 = vadd.f32 %v4299, %v4307
    %v4316 = vadd.f32 %v4300, %v4308
    %v4317 = vadd.f32 %v4301, %v4309
    %v4318 = vadd.f32 %v4302, %v4310
    %v4319 = vadd.f32 %v4303, %v4311
    %v4320 = vadd.f32 %v4304, %v4312
    %v4329 = vrot.slane %v4314, 7
    %v4330 = vsel %vm639, %v4329, %v4313
    %v4331 = vrot.slane %v4315, 6
    %v4332 = vsel %vm642, %v4331, %v4330
    %v4333 = vrot.slane %v4316, 5
    %v4334 = vsel %vm645, %v4333, %v4332
    %v4335 = vrot.slane %v4317, 4
    %v4336 = vsel %vm648, %v4335, %v4334
    %v4337 = vrot.slane %v4318, 3
    %v4338 = vsel %vm651, %v4337, %v4336
    %v4339 = vrot.slane %v4319, 2
    %v4340 = vsel %vm654, %v4339, %v4338
    %v4341 = vrot.slane %v4320, 1
    %v4342 = vsel %vm657, %v4341, %v4340
    %4343 = vrot.lane.b32.xlu0 %v4342, 96
    %v4344 = vpop.permute.xlu0 %4343
    %v4345 = vsel %vm182, %v4344, 0
    %4347 = vmatprep.subr.mxu0 0.0
    %4348 = vmatpush1.msra.mxu0 0.0
    %4349 = vmatprep.subr.mxu0 0.0
    %4350 = vmatpush1.msra.mxu0 0.0
    %4351 = vmatprep.subr.mxu0 0.0
    %4352 = vmatpush1.msra.mxu0 0.0
    %4353 = vmatprep.subr.mxu0 0.0
    %4354 = vmatpush1.msra.mxu0 0.0
    %4355 = vmatprep.subr.mxu0 0.0
    %4356 = vmatpush1.msra.mxu0 0.0
    %4357 = vmatprep.subr.mxu0 0.0
    %4358 = vmatpush1.msra.mxu0 0.0
    %4359 = vmatprep.subr.mxu0 0.0
    %4360 = vmatpush1.msra.mxu0 0.0
    %4361 = vmatprep.subr.mxu0 0.0
    %4362 = vmatpush1.msra.mxu0 0.0
    %4363 = vmatprep.subr.mxu0 0.0
    %4364 = vmatpush1.msra.mxu0 0.0
    %4365 = vmatprep.subr.mxu0 0.0
    %4366 = vmatpush1.msra.mxu0 0.0
    %4367 = vmatprep.subr.mxu0 0.0
    %4368 = vmatpush1.msra.mxu0 0.0
    %4369 = vmatprep.subr.mxu0 0.0
    %4370 = vmatpush1.msra.mxu0 0.0
    %4371 = vmatprep.subr.mxu0 0.0
    %4372 = vmatpush1.msra.mxu0 %v139
    %4373 = vmatprep.subr.mxu0 0.0
    %4374 = vmatpush1.msra.mxu0 %v138
    %4375 = vmatprep.subr.mxu0 0.0
    %4376 = vmatpush1.msra.mxu0 %v137
    %4377 = vmatprep.subr.mxu0 0.0
    %4378 = vmatpush1.msra.mxu0 %v136
    %4379 = vmatprep.subr.mxu0 0.0
    %4380 = vmatpush2.msra.mxu0 0.0
    %4381 = vmatprep.subr.mxu0 0.0
    %4382 = vmatpush2.msra.mxu0 0.0
    %4383 = vmatprep.subr.mxu0 0.0
    %4384 = vmatpush2.msra.mxu0 0.0
    %4385 = vmatprep.subr.mxu0 0.0
    %4386 = vmatpush2.msra.mxu0 0.0
    %4387 = vmatprep.subr.mxu0 0.0
    %4388 = vmatpush2.msra.mxu0 0.0
    %4389 = vmatprep.subr.mxu0 0.0
    %4390 = vmatpush2.msra.mxu0 0.0
    %4391 = vmatprep.subr.mxu0 0.0
    %4392 = vmatpush2.msra.mxu0 0.0
    %4393 = vmatprep.subr.mxu0 0.0
    %4394 = vmatpush2.msra.mxu0 0.0
    %4395 = vmatprep.subr.mxu0 0.0
    %4396 = vmatpush2.msra.mxu0 0.0
    %4397 = vmatprep.subr.mxu0 0.0
    %4398 = vmatpush2.msra.mxu0 0.0
    %4399 = vmatprep.subr.mxu0 0.0
    %4400 = vmatpush2.msra.mxu0 0.0
    %4401 = vmatprep.subr.mxu0 0.0
    %4402 = vmatpush2.msra.mxu0 0.0
    %4403 = vmatprep.subr.mxu0 0.0
    %4404 = vmatpush2.msra.mxu0 0.0
    %4405 = vmatprep.subr.mxu0 0.0
    %4406 = vmatpush2.msra.mxu0 0.0
    %4407 = vmatprep.subr.mxu0 0.0
    %4408 = vmatpush2.msra.mxu0 0.0
    %4409 = vmatprep.subr.mxu0 0.0
    %4410 = vmatpush2.msra.mxu0 0.0
    %4411 = vmatprep.mubr.f32.mxu0 0.0
    %4412 = vmatmul.mubr.f32.gmra.mxu0 %v4345
    %v4413 = vpop.f32.mrf.mxu0
    %v4414 = vadd.f32 %v153, %v4413
    %v4415 = vpop.f32.mrf.mxu0
    %4416 = vdwg.mxu0
    %4417 = vrot.lane.b32.xlu0 %v3903, 96
    %v4418 = vpop.permute.xlu0 %4417
    %v4419 = vsel %vm182, %v4418, 0
    %4421 = vmatprep.subr.mxu0 0.0
    %4422 = vmatpush1.msra.mxu0 0.0
    %4423 = vmatprep.subr.mxu0 0.0
    %4424 = vmatpush1.msra.mxu0 0.0
    %4425 = vmatprep.subr.mxu0 0.0
    %4426 = vmatpush1.msra.mxu0 0.0
    %4427 = vmatprep.subr.mxu0 0.0
    %4428 = vmatpush1.msra.mxu0 0.0
    %4429 = vmatprep.subr.mxu0 0.0
    %4430 = vmatpush1.msra.mxu0 0.0
    %4431 = vmatprep.subr.mxu0 0.0
    %4432 = vmatpush1.msra.mxu0 0.0
    %4433 = vmatprep.subr.mxu0 0.0
    %4434 = vmatpush1.msra.mxu0 0.0
    %4435 = vmatprep.subr.mxu0 0.0
    %4436 = vmatpush1.msra.mxu0 0.0
    %4437 = vmatprep.subr.mxu0 0.0
    %4438 = vmatpush1.msra.mxu0 0.0
    %4439 = vmatprep.subr.mxu0 0.0
    %4440 = vmatpush1.msra.mxu0 0.0
    %4441 = vmatprep.subr.mxu0 0.0
    %4442 = vmatpush1.msra.mxu0 0.0
    %4443 = vmatprep.subr.mxu0 0.0
    %4444 = vmatpush1.msra.mxu0 0.0
    %4445 = vmatprep.subr.mxu0 0.0
    %4446 = vmatpush1.msra.mxu0 %v147
    %4447 = vmatprep.subr.mxu0 0.0
    %4448 = vmatpush1.msra.mxu0 %v146
    %4449 = vmatprep.subr.mxu0 0.0
    %4450 = vmatpush1.msra.mxu0 %v145
    %4451 = vmatprep.subr.mxu0 0.0
    %4452 = vmatpush1.msra.mxu0 %v144
    %4453 = vmatprep.subr.mxu0 0.0
    %4454 = vmatpush2.msra.mxu0 0.0
    %4455 = vmatprep.subr.mxu0 0.0
    %4456 = vmatpush2.msra.mxu0 0.0
    %4457 = vmatprep.subr.mxu0 0.0
    %4458 = vmatpush2.msra.mxu0 0.0
    %4459 = vmatprep.subr.mxu0 0.0
    %4460 = vmatpush2.msra.mxu0 0.0
    %4461 = vmatprep.subr.mxu0 0.0
    %4462 = vmatpush2.msra.mxu0 0.0
    %4463 = vmatprep.subr.mxu0 0.0
    %4464 = vmatpush2.msra.mxu0 0.0
    %4465 = vmatprep.subr.mxu0 0.0
    %4466 = vmatpush2.msra.mxu0 0.0
    %4467 = vmatprep.subr.mxu0 0.0
    %4468 = vmatpush2.msra.mxu0 0.0
    %4469 = vmatprep.subr.mxu0 0.0
    %4470 = vmatpush2.msra.mxu0 0.0
    %4471 = vmatprep.subr.mxu0 0.0
    %4472 = vmatpush2.msra.mxu0 0.0
    %4473 = vmatprep.subr.mxu0 0.0
    %4474 = vmatpush2.msra.mxu0 0.0
    %4475 = vmatprep.subr.mxu0 0.0
    %4476 = vmatpush2.msra.mxu0 0.0
    %4477 = vmatprep.subr.mxu0 0.0
    %4478 = vmatpush2.msra.mxu0 0.0
    %4479 = vmatprep.subr.mxu0 0.0
    %4480 = vmatpush2.msra.mxu0 0.0
    %4481 = vmatprep.subr.mxu0 0.0
    %4482 = vmatpush2.msra.mxu0 0.0
    %4483 = vmatprep.subr.mxu0 0.0
    %4484 = vmatpush2.msra.mxu0 0.0
    %4485 = vmatprep.mubr.f32.mxu0 0.0
    %4486 = vmatmul.mubr.f32.gmra.mxu0 %v4419
    %v4487 = vpop.f32.mrf.mxu0
    %v4488 = vadd.f32 0.0, %v4487
    %v4489 = vpop.f32.mrf.mxu0
    %4490 = vdwg.mxu0
    %v4491 = vadd.f32 %v4414, %v4488
    %v4492 = vxor.u32 %v4491, 2147483648
    %v4493 = vmul.f32 %v4492, 1.442695
    %v4494 = vpow.pop %v4493
    %v4495 = vadd.f32 %v4494, 1.0
    %v4496 = vrcp.pop %v4495
    %v4497 = vmul.f32 1.0, %v4496
    %v4498 = vadd.f32 %v4488, %v811
    %4500 = vrot.lane.b32.xlu0 %v4498, 64
    %v4501 = vpop.permute.xlu0 %4500
    %v4503 = vmul.f32 %v4497, %v4501
    %4505 = vrot.lane.b32.xlu0 %v4503, 64
    %v4506 = vpop.permute.xlu0 %4505
    %v4508 = vadd.f32 %v4414, %v4506
    %v4509 = vtanh.pop %v4508
    %v4510 = vsub.f32 1.0, %v4497
    %4512 = vrot.lane.b32.xlu0 %v4509, 96
    %v4513 = vpop.permute.xlu0 %4512
    %v4515 = vmul.f32 %v4510, %v4513
    %v4516 = vmul.f32 %v4497, %v3903
    %v4517 = vadd.f32 %v4515, %v4516
    %v4519 = vcombine.high %v4517, %v4517
    %v4521 = vunpack.c.l.s4 1966171168
    %v4522 = vunpack.c.0.s8 %v4521
    %v4523 = vlaneseq
    %v4524 = vshrl.u32 %v4523, 7
    %v4525 = vsub.s32 %v4522, %v4524
    %v4526 = vrot.slane %v4517, %v4525
    %v4528 = vunpack.c.l.s4 1966171168
    %v4529 = vunpack.c.0.s8 %v4528
    %v4530 = vlaneseq
    %v4531 = vshrl.u32 %v4530, 7
    %v4532 = vsub.s32 %v4529, %v4531
    %v4533 = vrot.slane %v4519, %v4532
    %v4534 = vcombine.high %v4526, %v4526
    %v4535 = vcombine.high %v4533, %v4533
    %v4537 = vunpack.c.l.s4 1966171168
    %v4538 = vunpack.c.0.s8 %v4537
    %v4539 = vlaneseq
    %v4540 = vshrl.u32 %v4539, 7
    %v4541 = vsub.s32 %v4538, %v4540
    %v4542 = vrot.slane %v4526, %v4541
    %v4544 = vunpack.c.l.s4 1966171168
    %v4545 = vunpack.c.0.s8 %v4544
    %v4546 = vlaneseq
    %v4547 = vshrl.u32 %v4546, 7
    %v4548 = vsub.s32 %v4545, %v4547
    %v4549 = vrot.slane %v4533, %v4548
    %v4551 = vunpack.c.l.s4 1966171168
    %v4552 = vunpack.c.0.s8 %v4551
    %v4553 = vlaneseq
    %v4554 = vshrl.u32 %v4553, 7
    %v4555 = vsub.s32 %v4552, %v4554
    %v4556 = vrot.slane %v4534, %v4555
    %v4558 = vunpack.c.l.s4 1966171168
    %v4559 = vunpack.c.0.s8 %v4558
    %v4560 = vlaneseq
    %v4561 = vshrl.u32 %v4560, 7
    %v4562 = vsub.s32 %v4559, %v4561
    %v4563 = vrot.slane %v4535, %v4562
    %v4564 = vcombine.high %v4542, %v4542
    %v4565 = vcombine.high %v4549, %v4549
    %v4566 = vcombine.high %v4556, %v4556
    %v4567 = vcombine.high %v4563, %v4563
    %v4568 = vlaneseq
    %v4569 = vshrl.u32 %v4568, 7
    %v4570 = vsub.s32 0, %v4569
    %v4571 = vrot.slane %v4542, %v4570
    %v4572 = vlaneseq
    %v4573 = vshrl.u32 %v4572, 7
    %v4574 = vsub.s32 0, %v4573
    %v4575 = vrot.slane %v4556, %v4574
    %v4576 = vlaneseq
    %v4577 = vshrl.u32 %v4576, 7
    %v4578 = vsub.s32 0, %v4577
    %v4579 = vrot.slane %v4564, %v4578
    %v4580 = vlaneseq
    %v4581 = vshrl.u32 %v4580, 7
    %v4582 = vsub.s32 0, %v4581
    %v4583 = vrot.slane %v4566, %v4582
    %v4584 = vlaneseq
    %v4585 = vshrl.u32 %v4584, 7
    %v4586 = vsub.s32 0, %v4585
    %v4587 = vrot.slane %v4549, %v4586
    %v4588 = vlaneseq
    %v4589 = vshrl.u32 %v4588, 7
    %v4590 = vsub.s32 0, %v4589
    %v4591 = vrot.slane %v4563, %v4590
    %v4592 = vlaneseq
    %v4593 = vshrl.u32 %v4592, 7
    %v4594 = vsub.s32 0, %v4593
    %v4595 = vrot.slane %v4565, %v4594
    %v4596 = vlaneseq
    %v4597 = vshrl.u32 %v4596, 7
    %v4598 = vsub.s32 0, %v4597
    %v4599 = vrot.slane %v4567, %v4598
    %4600 = vrot.lane.b32.xlu0 %v4571, 96
    %v4601 = vpop.permute.xlu0 %4600
    %4602 = vrot.lane.b32.xlu0 %v4575, 96
    %v4603 = vpop.permute.xlu0 %4602
    %4604 = vrot.lane.b32.xlu0 %v4579, 96
    %v4605 = vpop.permute.xlu0 %4604
    %4606 = vrot.lane.b32.xlu0 %v4583, 96
    %v4607 = vpop.permute.xlu0 %4606
    %4608 = vrot.lane.b32.xlu0 %v4587, 96
    %v4609 = vpop.permute.xlu0 %4608
    %4610 = vrot.lane.b32.xlu0 %v4591, 96
    %v4611 = vpop.permute.xlu0 %4610
    %4612 = vrot.lane.b32.xlu0 %v4595, 96
    %v4613 = vpop.permute.xlu0 %4612
    %4614 = vrot.lane.b32.xlu0 %v4599, 96
    %v4615 = vpop.permute.xlu0 %4614
    %4624 = vst.msk [vmem:[#allocation3 + $0x6] sm:$0x1] %vm939, %v4601
    %4625 = vst.msk [vmem:[#allocation3 + $0xe] sm:$0x1] %vm939, %v4603
    %4626 = vst.msk [vmem:[#allocation3 + $0x16] sm:$0x1] %vm939, %v4605
    %4627 = vst.msk [vmem:[#allocation3 + $0x1e] sm:$0x1] %vm939, %v4607
    %4628 = vst.msk [vmem:[#allocation3 + $0x26] sm:$0x1] %vm939, %v4609
    %4629 = vst.msk [vmem:[#allocation3 + $0x2e] sm:$0x1] %vm939, %v4611
    %4630 = vst.msk [vmem:[#allocation3 + $0x36] sm:$0x1] %vm939, %v4613
    %4631 = vst.msk [vmem:[#allocation3 + $0x3e] sm:$0x1] %vm939, %v4615
    %v4632 = vld [vmem:[#allocation2 + $0x7] sm:$0x1]
    %v4633 = vld [vmem:[#allocation2 + $0xf] sm:$0x1]
    %v4634 = vld [vmem:[#allocation2 + $0x17] sm:$0x1]
    %v4635 = vld [vmem:[#allocation2 + $0x1f] sm:$0x1]
    %v4636 = vld [vmem:[#allocation2 + $0x27] sm:$0x1]
    %v4637 = vld [vmem:[#allocation2 + $0x2f] sm:$0x1]
    %v4638 = vld [vmem:[#allocation2 + $0x37] sm:$0x1]
    %v4639 = vld [vmem:[#allocation2 + $0x3f] sm:$0x1]
    %4640 = vmatprep.subr.mxu0 0.0
    %4641 = vmatpush1.msra.mxu0 0.0
    %4642 = vmatprep.subr.mxu0 0.0
    %4643 = vmatpush1.msra.mxu0 0.0
    %4644 = vmatprep.subr.mxu0 0.0
    %4645 = vmatpush1.msra.mxu0 0.0
    %4646 = vmatprep.subr.mxu0 0.0
    %4647 = vmatpush1.msra.mxu0 0.0
    %4648 = vmatprep.subr.mxu0 0.0
    %4649 = vmatpush1.msra.mxu0 0.0
    %4650 = vmatprep.subr.mxu0 0.0
    %4651 = vmatpush1.msra.mxu0 0.0
    %4652 = vmatprep.subr.mxu0 0.0
    %4653 = vmatpush1.msra.mxu0 0.0
    %4654 = vmatprep.subr.mxu0 0.0
    %4655 = vmatpush1.msra.mxu0 0.0
    %4656 = vmatprep.subr.mxu0 0.0
    %4657 = vmatpush1.msra.mxu0 0.0
    %4658 = vmatprep.subr.mxu0 0.0
    %4659 = vmatpush1.msra.mxu0 0.0
    %4660 = vmatprep.subr.mxu0 0.0
    %4661 = vmatpush1.msra.mxu0 0.0
    %4662 = vmatprep.subr.mxu0 0.0
    %4663 = vmatpush1.msra.mxu0 0.0
    %4664 = vmatprep.subr.mxu0 0.0
    %4665 = vmatpush1.msra.mxu0 %v143
    %4666 = vmatprep.subr.mxu0 0.0
    %4667 = vmatpush1.msra.mxu0 %v142
    %4668 = vmatprep.subr.mxu0 0.0
    %4669 = vmatpush1.msra.mxu0 %v141
    %4670 = vmatprep.subr.mxu0 0.0
    %4671 = vmatpush1.msra.mxu0 %v140
    %4672 = vmatprep.subr.mxu0 0.0
    %4673 = vmatpush2.msra.mxu0 0.0
    %4674 = vmatprep.subr.mxu0 0.0
    %4675 = vmatpush2.msra.mxu0 0.0
    %4676 = vmatprep.subr.mxu0 0.0
    %4677 = vmatpush2.msra.mxu0 0.0
    %4678 = vmatprep.subr.mxu0 0.0
    %4679 = vmatpush2.msra.mxu0 0.0
    %4680 = vmatprep.subr.mxu0 0.0
    %4681 = vmatpush2.msra.mxu0 0.0
    %4682 = vmatprep.subr.mxu0 0.0
    %4683 = vmatpush2.msra.mxu0 0.0
    %4684 = vmatprep.subr.mxu0 0.0
    %4685 = vmatpush2.msra.mxu0 0.0
    %4686 = vmatprep.subr.mxu0 0.0
    %4687 = vmatpush2.msra.mxu0 0.0
    %4688 = vmatprep.subr.mxu0 0.0
    %4689 = vmatpush2.msra.mxu0 0.0
    %4690 = vmatprep.subr.mxu0 0.0
    %4691 = vmatpush2.msra.mxu0 0.0
    %4692 = vmatprep.subr.mxu0 0.0
    %4693 = vmatpush2.msra.mxu0 0.0
    %4694 = vmatprep.subr.mxu0 0.0
    %4695 = vmatpush2.msra.mxu0 0.0
    %4696 = vmatprep.subr.mxu0 0.0
    %4697 = vmatpush2.msra.mxu0 0.0
    %4698 = vmatprep.subr.mxu0 0.0
    %4699 = vmatpush2.msra.mxu0 0.0
    %4700 = vmatprep.subr.mxu0 0.0
    %4701 = vmatpush2.msra.mxu0 0.0
    %4702 = vmatprep.subr.mxu0 0.0
    %4703 = vmatpush2.msra.mxu0 0.0
    %4704 = vmatprep.mubr.f32.mxu0 0.0
    %4705 = vmatmul.mubr.f32.gmra.mxu0 %v4345
    %v4706 = vpop.f32.mrf.mxu0
    %v4707 = vadd.f32 0.0, %v4706
    %v4708 = vpop.f32.mrf.mxu0
    %4709 = vdwg.mxu0
    %v4711 = vrot.slane %v4707, 1
    %v4712 = vrot.slane %v4707, 2
    %v4713 = vrot.slane %v4707, 3
    %v4714 = vrot.slane %v4707, 4
    %v4715 = vrot.slane %v4707, 5
    %v4716 = vrot.slane %v4707, 6
    %v4717 = vrot.slane %v4707, 7
    %v4726 = vadd.f32 %v4632, %v4707
    %v4727 = vadd.f32 %v4633, %v4711
    %v4728 = vadd.f32 %v4634, %v4712
    %v4729 = vadd.f32 %v4635, %v4713
    %v4730 = vadd.f32 %v4636, %v4714
    %v4731 = vadd.f32 %v4637, %v4715
    %v4732 = vadd.f32 %v4638, %v4716
    %v4733 = vadd.f32 %v4639, %v4717
    %v4734 = vxor.u32 %v4726, 2147483648
    %v4735 = vxor.u32 %v4727, 2147483648
    %v4736 = vxor.u32 %v4728, 2147483648
    %v4737 = vxor.u32 %v4729, 2147483648
    %v4738 = vxor.u32 %v4730, 2147483648
    %v4739 = vxor.u32 %v4731, 2147483648
    %v4740 = vxor.u32 %v4732, 2147483648
    %v4741 = vxor.u32 %v4733, 2147483648
    %v4742 = vmul.f32 %v4734, 1.442695
    %v4743 = vpow.pop %v4742
    %v4744 = vmul.f32 %v4735, 1.442695
    %v4745 = vpow.pop %v4744
    %v4746 = vmul.f32 %v4736, 1.442695
    %v4747 = vpow.pop %v4746
    %v4748 = vmul.f32 %v4737, 1.442695
    %v4749 = vpow.pop %v4748
    %v4750 = vmul.f32 %v4738, 1.442695
    %v4751 = vpow.pop %v4750
    %v4752 = vmul.f32 %v4739, 1.442695
    %v4753 = vpow.pop %v4752
    %v4754 = vmul.f32 %v4740, 1.442695
    %v4755 = vpow.pop %v4754
    %v4756 = vmul.f32 %v4741, 1.442695
    %v4757 = vpow.pop %v4756
    %v4758 = vadd.f32 %v4743, 1.0
    %v4759 = vadd.f32 %v4745, 1.0
    %v4760 = vadd.f32 %v4747, 1.0
    %v4761 = vadd.f32 %v4749, 1.0
    %v4762 = vadd.f32 %v4751, 1.0
    %v4763 = vadd.f32 %v4753, 1.0
    %v4764 = vadd.f32 %v4755, 1.0
    %v4765 = vadd.f32 %v4757, 1.0
    %v4766 = vrcp.pop %v4758
    %v4767 = vmul.f32 1.0, %v4766
    %v4768 = vrcp.pop %v4759
    %v4769 = vmul.f32 1.0, %v4768
    %v4770 = vrcp.pop %v4760
    %v4771 = vmul.f32 1.0, %v4770
    %v4772 = vrcp.pop %v4761
    %v4773 = vmul.f32 1.0, %v4772
    %v4774 = vrcp.pop %v4762
    %v4775 = vmul.f32 1.0, %v4774
    %v4776 = vrcp.pop %v4763
    %v4777 = vmul.f32 1.0, %v4776
    %v4778 = vrcp.pop %v4764
    %v4779 = vmul.f32 1.0, %v4778
    %v4780 = vrcp.pop %v4765
    %v4781 = vmul.f32 1.0, %v4780
    %v4782 = vadd.f32 %v4707, %v475
    %v4784 = vrot.slane %v4782, 1
    %v4785 = vrot.slane %v4782, 2
    %v4786 = vrot.slane %v4782, 3
    %v4787 = vrot.slane %v4782, 4
    %v4788 = vrot.slane %v4782, 5
    %v4789 = vrot.slane %v4782, 6
    %v4790 = vrot.slane %v4782, 7
    %4791 = vrot.lane.b32.xlu0 %v4782, 64
    %v4792 = vpop.permute.xlu0 %4791
    %4793 = vrot.lane.b32.xlu0 %v4784, 64
    %v4794 = vpop.permute.xlu0 %4793
    %4795 = vrot.lane.b32.xlu0 %v4785, 64
    %v4796 = vpop.permute.xlu0 %4795
    %4797 = vrot.lane.b32.xlu0 %v4786, 64
    %v4798 = vpop.permute.xlu0 %4797
    %4799 = vrot.lane.b32.xlu0 %v4787, 64
    %v4800 = vpop.permute.xlu0 %4799
    %4801 = vrot.lane.b32.xlu0 %v4788, 64
    %v4802 = vpop.permute.xlu0 %4801
    %4803 = vrot.lane.b32.xlu0 %v4789, 64
    %v4804 = vpop.permute.xlu0 %4803
    %4805 = vrot.lane.b32.xlu0 %v4790, 64
    %v4806 = vpop.permute.xlu0 %4805
    %v4815 = vmul.f32 %v4767, %v4792
    %v4816 = vmul.f32 %v4769, %v4794
    %v4817 = vmul.f32 %v4771, %v4796
    %v4818 = vmul.f32 %v4773, %v4798
    %v4819 = vmul.f32 %v4775, %v4800
    %v4820 = vmul.f32 %v4777, %v4802
    %v4821 = vmul.f32 %v4779, %v4804
    %v4822 = vmul.f32 %v4781, %v4806
    %4831 = vrot.lane.b32.xlu0 %v4815, 64
    %v4832 = vpop.permute.xlu0 %4831
    %4833 = vrot.lane.b32.xlu0 %v4816, 64
    %v4834 = vpop.permute.xlu0 %4833
    %4835 = vrot.lane.b32.xlu0 %v4817, 64
    %v4836 = vpop.permute.xlu0 %4835
    %4837 = vrot.lane.b32.xlu0 %v4818, 64
    %v4838 = vpop.permute.xlu0 %4837
    %4839 = vrot.lane.b32.xlu0 %v4819, 64
    %v4840 = vpop.permute.xlu0 %4839
    %4841 = vrot.lane.b32.xlu0 %v4820, 64
    %v4842 = vpop.permute.xlu0 %4841
    %4843 = vrot.lane.b32.xlu0 %v4821, 64
    %v4844 = vpop.permute.xlu0 %4843
    %4845 = vrot.lane.b32.xlu0 %v4822, 64
    %v4846 = vpop.permute.xlu0 %4845
    %v4855 = vadd.f32 %v4632, %v4832
    %v4856 = vadd.f32 %v4633, %v4834
    %v4857 = vadd.f32 %v4634, %v4836
    %v4858 = vadd.f32 %v4635, %v4838
    %v4859 = vadd.f32 %v4636, %v4840
    %v4860 = vadd.f32 %v4637, %v4842
    %v4861 = vadd.f32 %v4638, %v4844
    %v4862 = vadd.f32 %v4639, %v4846
    %v4863 = vtanh.pop %v4855
    %v4864 = vtanh.pop %v4856
    %v4865 = vtanh.pop %v4857
    %v4866 = vtanh.pop %v4858
    %v4867 = vtanh.pop %v4859
    %v4868 = vtanh.pop %v4860
    %v4869 = vtanh.pop %v4861
    %v4870 = vtanh.pop %v4862
    %v4871 = vsub.f32 1.0, %v4767
    %v4872 = vsub.f32 1.0, %v4769
    %v4873 = vsub.f32 1.0, %v4771
    %v4874 = vsub.f32 1.0, %v4773
    %v4875 = vsub.f32 1.0, %v4775
    %v4876 = vsub.f32 1.0, %v4777
    %v4877 = vsub.f32 1.0, %v4779
    %v4878 = vsub.f32 1.0, %v4781
    %4887 = vrot.lane.b32.xlu0 %v4863, 96
    %v4888 = vpop.permute.xlu0 %4887
    %4889 = vrot.lane.b32.xlu0 %v4864, 96
    %v4890 = vpop.permute.xlu0 %4889
    %4891 = vrot.lane.b32.xlu0 %v4865, 96
    %v4892 = vpop.permute.xlu0 %4891
    %4893 = vrot.lane.b32.xlu0 %v4866, 96
    %v4894 = vpop.permute.xlu0 %4893
    %4895 = vrot.lane.b32.xlu0 %v4867, 96
    %v4896 = vpop.permute.xlu0 %4895
    %4897 = vrot.lane.b32.xlu0 %v4868, 96
    %v4898 = vpop.permute.xlu0 %4897
    %4899 = vrot.lane.b32.xlu0 %v4869, 96
    %v4900 = vpop.permute.xlu0 %4899
    %4901 = vrot.lane.b32.xlu0 %v4870, 96
    %v4902 = vpop.permute.xlu0 %4901
    %v4911 = vmul.f32 %v4871, %v4888
    %v4912 = vmul.f32 %v4872, %v4890
    %v4913 = vmul.f32 %v4873, %v4892
    %v4914 = vmul.f32 %v4874, %v4894
    %v4915 = vmul.f32 %v4875, %v4896
    %v4916 = vmul.f32 %v4876, %v4898
    %v4917 = vmul.f32 %v4877, %v4900
    %v4918 = vmul.f32 %v4878, %v4902
    %v4919 = vmul.f32 %v4767, %v4313
    %v4920 = vmul.f32 %v4769, %v4314
    %v4921 = vmul.f32 %v4771, %v4315
    %v4922 = vmul.f32 %v4773, %v4316
    %v4923 = vmul.f32 %v4775, %v4317
    %v4924 = vmul.f32 %v4777, %v4318
    %v4925 = vmul.f32 %v4779, %v4319
    %v4926 = vmul.f32 %v4781, %v4320
    %v4927 = vadd.f32 %v4911, %v4919
    %v4928 = vadd.f32 %v4912, %v4920
    %v4929 = vadd.f32 %v4913, %v4921
    %v4930 = vadd.f32 %v4914, %v4922
    %v4931 = vadd.f32 %v4915, %v4923
    %v4932 = vadd.f32 %v4916, %v4924
    %v4933 = vadd.f32 %v4917, %v4925
    %v4934 = vadd.f32 %v4918, %v4926
    %v4943 = vrot.slane %v4928, 7
    %v4944 = vsel %vm639, %v4943, %v4927
    %v4945 = vrot.slane %v4929, 6
    %v4946 = vsel %vm642, %v4945, %v4944
    %v4947 = vrot.slane %v4930, 5
    %v4948 = vsel %vm645, %v4947, %v4946
    %v4949 = vrot.slane %v4931, 4
    %v4950 = vsel %vm648, %v4949, %v4948
    %v4951 = vrot.slane %v4932, 3
    %v4952 = vsel %vm651, %v4951, %v4950
    %v4953 = vrot.slane %v4933, 2
    %v4954 = vsel %vm654, %v4953, %v4952
    %v4955 = vrot.slane %v4934, 1
    %v4956 = vsel %vm657, %v4955, %v4954
    %4957 = vrot.lane.b32.xlu0 %v4956, 96
    %v4958 = vpop.permute.xlu0 %4957
    %v4959 = vsel %vm182, %v4958, 0
    %4961 = vmatprep.subr.mxu0 0.0
    %4962 = vmatpush1.msra.mxu0 0.0
    %4963 = vmatprep.subr.mxu0 0.0
    %4964 = vmatpush1.msra.mxu0 0.0
    %4965 = vmatprep.subr.mxu0 0.0
    %4966 = vmatpush1.msra.mxu0 0.0
    %4967 = vmatprep.subr.mxu0 0.0
    %4968 = vmatpush1.msra.mxu0 0.0
    %4969 = vmatprep.subr.mxu0 0.0
    %4970 = vmatpush1.msra.mxu0 0.0
    %4971 = vmatprep.subr.mxu0 0.0
    %4972 = vmatpush1.msra.mxu0 0.0
    %4973 = vmatprep.subr.mxu0 0.0
    %4974 = vmatpush1.msra.mxu0 0.0
    %4975 = vmatprep.subr.mxu0 0.0
    %4976 = vmatpush1.msra.mxu0 0.0
    %4977 = vmatprep.subr.mxu0 0.0
    %4978 = vmatpush1.msra.mxu0 0.0
    %4979 = vmatprep.subr.mxu0 0.0
    %4980 = vmatpush1.msra.mxu0 0.0
    %4981 = vmatprep.subr.mxu0 0.0
    %4982 = vmatpush1.msra.mxu0 0.0
    %4983 = vmatprep.subr.mxu0 0.0
    %4984 = vmatpush1.msra.mxu0 0.0
    %4985 = vmatprep.subr.mxu0 0.0
    %4986 = vmatpush1.msra.mxu0 %v139
    %4987 = vmatprep.subr.mxu0 0.0
    %4988 = vmatpush1.msra.mxu0 %v138
    %4989 = vmatprep.subr.mxu0 0.0
    %4990 = vmatpush1.msra.mxu0 %v137
    %4991 = vmatprep.subr.mxu0 0.0
    %4992 = vmatpush1.msra.mxu0 %v136
    %4993 = vmatprep.subr.mxu0 0.0
    %4994 = vmatpush2.msra.mxu0 0.0
    %4995 = vmatprep.subr.mxu0 0.0
    %4996 = vmatpush2.msra.mxu0 0.0
    %4997 = vmatprep.subr.mxu0 0.0
    %4998 = vmatpush2.msra.mxu0 0.0
    %4999 = vmatprep.subr.mxu0 0.0
    %5000 = vmatpush2.msra.mxu0 0.0
    %5001 = vmatprep.subr.mxu0 0.0
    %5002 = vmatpush2.msra.mxu0 0.0
    %5003 = vmatprep.subr.mxu0 0.0
    %5004 = vmatpush2.msra.mxu0 0.0
    %5005 = vmatprep.subr.mxu0 0.0
    %5006 = vmatpush2.msra.mxu0 0.0
    %5007 = vmatprep.subr.mxu0 0.0
    %5008 = vmatpush2.msra.mxu0 0.0
    %5009 = vmatprep.subr.mxu0 0.0
    %5010 = vmatpush2.msra.mxu0 0.0
    %5011 = vmatprep.subr.mxu0 0.0
    %5012 = vmatpush2.msra.mxu0 0.0
    %5013 = vmatprep.subr.mxu0 0.0
    %5014 = vmatpush2.msra.mxu0 0.0
    %5015 = vmatprep.subr.mxu0 0.0
    %5016 = vmatpush2.msra.mxu0 0.0
    %5017 = vmatprep.subr.mxu0 0.0
    %5018 = vmatpush2.msra.mxu0 0.0
    %5019 = vmatprep.subr.mxu0 0.0
    %5020 = vmatpush2.msra.mxu0 0.0
    %5021 = vmatprep.subr.mxu0 0.0
    %5022 = vmatpush2.msra.mxu0 0.0
    %5023 = vmatprep.subr.mxu0 0.0
    %5024 = vmatpush2.msra.mxu0 0.0
    %5025 = vmatprep.mubr.f32.mxu0 0.0
    %5026 = vmatmul.mubr.f32.gmra.mxu0 %v4959
    %v5027 = vpop.f32.mrf.mxu0
    %v5028 = vadd.f32 %v153, %v5027
    %v5029 = vpop.f32.mrf.mxu0
    %5030 = vdwg.mxu0
    %5031 = vrot.lane.b32.xlu0 %v4517, 96
    %v5032 = vpop.permute.xlu0 %5031
    %v5033 = vsel %vm182, %v5032, 0
    %5035 = vmatprep.subr.mxu0 0.0
    %5036 = vmatpush1.msra.mxu0 0.0
    %5037 = vmatprep.subr.mxu0 0.0
    %5038 = vmatpush1.msra.mxu0 0.0
    %5039 = vmatprep.subr.mxu0 0.0
    %5040 = vmatpush1.msra.mxu0 0.0
    %5041 = vmatprep.subr.mxu0 0.0
    %5042 = vmatpush1.msra.mxu0 0.0
    %5043 = vmatprep.subr.mxu0 0.0
    %5044 = vmatpush1.msra.mxu0 0.0
    %5045 = vmatprep.subr.mxu0 0.0
    %5046 = vmatpush1.msra.mxu0 0.0
    %5047 = vmatprep.subr.mxu0 0.0
    %5048 = vmatpush1.msra.mxu0 0.0
    %5049 = vmatprep.subr.mxu0 0.0
    %5050 = vmatpush1.msra.mxu0 0.0
    %5051 = vmatprep.subr.mxu0 0.0
    %5052 = vmatpush1.msra.mxu0 0.0
    %5053 = vmatprep.subr.mxu0 0.0
    %5054 = vmatpush1.msra.mxu0 0.0
    %5055 = vmatprep.subr.mxu0 0.0
    %5056 = vmatpush1.msra.mxu0 0.0
    %5057 = vmatprep.subr.mxu0 0.0
    %5058 = vmatpush1.msra.mxu0 0.0
    %5059 = vmatprep.subr.mxu0 0.0
    %5060 = vmatpush1.msra.mxu0 %v147
    %5061 = vmatprep.subr.mxu0 0.0
    %5062 = vmatpush1.msra.mxu0 %v146
    %5063 = vmatprep.subr.mxu0 0.0
    %5064 = vmatpush1.msra.mxu0 %v145
    %5065 = vmatprep.subr.mxu0 0.0
    %5066 = vmatpush1.msra.mxu0 %v144
    %5067 = vmatprep.subr.mxu0 0.0
    %5068 = vmatpush2.msra.mxu0 0.0
    %5069 = vmatprep.subr.mxu0 0.0
    %5070 = vmatpush2.msra.mxu0 0.0
    %5071 = vmatprep.subr.mxu0 0.0
    %5072 = vmatpush2.msra.mxu0 0.0
    %5073 = vmatprep.subr.mxu0 0.0
    %5074 = vmatpush2.msra.mxu0 0.0
    %5075 = vmatprep.subr.mxu0 0.0
    %5076 = vmatpush2.msra.mxu0 0.0
    %5077 = vmatprep.subr.mxu0 0.0
    %5078 = vmatpush2.msra.mxu0 0.0
    %5079 = vmatprep.subr.mxu0 0.0
    %5080 = vmatpush2.msra.mxu0 0.0
    %5081 = vmatprep.subr.mxu0 0.0
    %5082 = vmatpush2.msra.mxu0 0.0
    %5083 = vmatprep.subr.mxu0 0.0
    %5084 = vmatpush2.msra.mxu0 0.0
    %5085 = vmatprep.subr.mxu0 0.0
    %5086 = vmatpush2.msra.mxu0 0.0
    %5087 = vmatprep.subr.mxu0 0.0
    %5088 = vmatpush2.msra.mxu0 0.0
    %5089 = vmatprep.subr.mxu0 0.0
    %5090 = vmatpush2.msra.mxu0 0.0
    %5091 = vmatprep.subr.mxu0 0.0
    %5092 = vmatpush2.msra.mxu0 0.0
    %5093 = vmatprep.subr.mxu0 0.0
    %5094 = vmatpush2.msra.mxu0 0.0
    %5095 = vmatprep.subr.mxu0 0.0
    %5096 = vmatpush2.msra.mxu0 0.0
    %5097 = vmatprep.subr.mxu0 0.0
    %5098 = vmatpush2.msra.mxu0 0.0
    %5099 = vmatprep.mubr.f32.mxu0 0.0
    %5100 = vmatmul.mubr.f32.gmra.mxu0 %v5033
    %v5101 = vpop.f32.mrf.mxu0
    %v5102 = vadd.f32 0.0, %v5101
    %v5103 = vpop.f32.mrf.mxu0
    %5104 = vdwg.mxu0
    %v5105 = vadd.f32 %v5028, %v5102
    %v5106 = vxor.u32 %v5105, 2147483648
    %v5107 = vmul.f32 %v5106, 1.442695
    %v5108 = vpow.pop %v5107
    %v5109 = vadd.f32 %v5108, 1.0
    %v5110 = vrcp.pop %v5109
    %v5111 = vmul.f32 1.0, %v5110
    %v5112 = vadd.f32 %v5102, %v811
    %5114 = vrot.lane.b32.xlu0 %v5112, 64
    %v5115 = vpop.permute.xlu0 %5114
    %v5117 = vmul.f32 %v5111, %v5115
    %5119 = vrot.lane.b32.xlu0 %v5117, 64
    %v5120 = vpop.permute.xlu0 %5119
    %v5122 = vadd.f32 %v5028, %v5120
    %v5123 = vtanh.pop %v5122
    %v5124 = vsub.f32 1.0, %v5111
    %5126 = vrot.lane.b32.xlu0 %v5123, 96
    %v5127 = vpop.permute.xlu0 %5126
    %v5129 = vmul.f32 %v5124, %v5127
    %v5130 = vmul.f32 %v5111, %v4517
    %v5131 = vadd.f32 %v5129, %v5130
    %v5133 = vcombine.high %v5131, %v5131
    %v5135 = vunpack.c.l.s4 1966171168
    %v5136 = vunpack.c.0.s8 %v5135
    %v5137 = vlaneseq
    %v5138 = vshrl.u32 %v5137, 7
    %v5139 = vsub.s32 %v5136, %v5138
    %v5140 = vrot.slane %v5131, %v5139
    %v5142 = vunpack.c.l.s4 1966171168
    %v5143 = vunpack.c.0.s8 %v5142
    %v5144 = vlaneseq
    %v5145 = vshrl.u32 %v5144, 7
    %v5146 = vsub.s32 %v5143, %v5145
    %v5147 = vrot.slane %v5133, %v5146
    %v5148 = vcombine.high %v5140, %v5140
    %v5149 = vcombine.high %v5147, %v5147
    %v5151 = vunpack.c.l.s4 1966171168
    %v5152 = vunpack.c.0.s8 %v5151
    %v5153 = vlaneseq
    %v5154 = vshrl.u32 %v5153, 7
    %v5155 = vsub.s32 %v5152, %v5154
    %v5156 = vrot.slane %v5140, %v5155
    %v5158 = vunpack.c.l.s4 1966171168
    %v5159 = vunpack.c.0.s8 %v5158
    %v5160 = vlaneseq
    %v5161 = vshrl.u32 %v5160, 7
    %v5162 = vsub.s32 %v5159, %v5161
    %v5163 = vrot.slane %v5147, %v5162
    %v5165 = vunpack.c.l.s4 1966171168
    %v5166 = vunpack.c.0.s8 %v5165
    %v5167 = vlaneseq
    %v5168 = vshrl.u32 %v5167, 7
    %v5169 = vsub.s32 %v5166, %v5168
    %v5170 = vrot.slane %v5148, %v5169
    %v5172 = vunpack.c.l.s4 1966171168
    %v5173 = vunpack.c.0.s8 %v5172
    %v5174 = vlaneseq
    %v5175 = vshrl.u32 %v5174, 7
    %v5176 = vsub.s32 %v5173, %v5175
    %v5177 = vrot.slane %v5149, %v5176
    %v5178 = vcombine.high %v5156, %v5156
    %v5179 = vcombine.high %v5163, %v5163
    %v5180 = vcombine.high %v5170, %v5170
    %v5181 = vcombine.high %v5177, %v5177
    %v5182 = vlaneseq
    %v5183 = vshrl.u32 %v5182, 7
    %v5184 = vsub.s32 0, %v5183
    %v5185 = vrot.slane %v5156, %v5184
    %v5186 = vlaneseq
    %v5187 = vshrl.u32 %v5186, 7
    %v5188 = vsub.s32 0, %v5187
    %v5189 = vrot.slane %v5170, %v5188
    %v5190 = vlaneseq
    %v5191 = vshrl.u32 %v5190, 7
    %v5192 = vsub.s32 0, %v5191
    %v5193 = vrot.slane %v5178, %v5192
    %v5194 = vlaneseq
    %v5195 = vshrl.u32 %v5194, 7
    %v5196 = vsub.s32 0, %v5195
    %v5197 = vrot.slane %v5180, %v5196
    %v5198 = vlaneseq
    %v5199 = vshrl.u32 %v5198, 7
    %v5200 = vsub.s32 0, %v5199
    %v5201 = vrot.slane %v5163, %v5200
    %v5202 = vlaneseq
    %v5203 = vshrl.u32 %v5202, 7
    %v5204 = vsub.s32 0, %v5203
    %v5205 = vrot.slane %v5177, %v5204
    %v5206 = vlaneseq
    %v5207 = vshrl.u32 %v5206, 7
    %v5208 = vsub.s32 0, %v5207
    %v5209 = vrot.slane %v5179, %v5208
    %v5210 = vlaneseq
    %v5211 = vshrl.u32 %v5210, 7
    %v5212 = vsub.s32 0, %v5211
    %v5213 = vrot.slane %v5181, %v5212
    %5214 = vrot.lane.b32.xlu0 %v5185, 96
    %v5215 = vpop.permute.xlu0 %5214
    %5216 = vrot.lane.b32.xlu0 %v5189, 96
    %v5217 = vpop.permute.xlu0 %5216
    %5218 = vrot.lane.b32.xlu0 %v5193, 96
    %v5219 = vpop.permute.xlu0 %5218
    %5220 = vrot.lane.b32.xlu0 %v5197, 96
    %v5221 = vpop.permute.xlu0 %5220
    %5222 = vrot.lane.b32.xlu0 %v5201, 96
    %v5223 = vpop.permute.xlu0 %5222
    %5224 = vrot.lane.b32.xlu0 %v5205, 96
    %v5225 = vpop.permute.xlu0 %5224
    %5226 = vrot.lane.b32.xlu0 %v5209, 96
    %v5227 = vpop.permute.xlu0 %5226
    %5228 = vrot.lane.b32.xlu0 %v5213, 96
    %v5229 = vpop.permute.xlu0 %5228
    %5238 = vst.msk [vmem:[#allocation3 + $0x7] sm:$0x1] %vm939, %v5215
    %5239 = vst.msk [vmem:[#allocation3 + $0xf] sm:$0x1] %vm939, %v5217
    %5240 = vst.msk [vmem:[#allocation3 + $0x17] sm:$0x1] %vm939, %v5219
    %5241 = vst.msk [vmem:[#allocation3 + $0x1f] sm:$0x1] %vm939, %v5221
    %5242 = vst.msk [vmem:[#allocation3 + $0x27] sm:$0x1] %vm939, %v5223
    %5243 = vst.msk [vmem:[#allocation3 + $0x2f] sm:$0x1] %vm939, %v5225
    %5244 = vst.msk [vmem:[#allocation3 + $0x37] sm:$0x1] %vm939, %v5227
    %5245 = vst.msk [vmem:[#allocation3 + $0x3f] sm:$0x1] %vm939, %v5229
    %v5246 = vld [vmem:[#allocation3] sm:$0xff]
    %v5247 = vld [vmem:[#allocation3 + $0x8] sm:$0xff]
    %v5248 = vld [vmem:[#allocation3 + $0x10] sm:$0xff]
    %v5249 = vld [vmem:[#allocation3 + $0x18] sm:$0xff]
    %v5250 = vld [vmem:[#allocation3 + $0x20] sm:$0xff]
    %v5251 = vld [vmem:[#allocation3 + $0x28] sm:$0xff]
    %v5252 = vld [vmem:[#allocation3 + $0x30] sm:$0xff]
    %v5253 = vld [vmem:[#allocation3 + $0x38] sm:$0xff]
    %v5254 = vld [vmem:[#allocation13] sm:$0xff]
    %v5255 = vld [vmem:[#allocation13 + $0x8] sm:$0xff]
    %v5256 = vld [vmem:[#allocation13 + $0x10] sm:$0xff]
    %v5257 = vld [vmem:[#allocation13 + $0x18] sm:$0xff]
    %v5258 = vld [vmem:[#allocation15] sm:$0x1]
    %v5260 = vlaneseq
    %v5261 = vshrl.u32 %v5260, 7
    %v5262 = vsub.s32 0, %v5261
    %v5263 = vrot.slane %v5258, %v5262
    %v5266 = vsel %vm182, %v5246, 0
    %v5269 = vsel %vm182, %v5247, 0
    %v5272 = vsel %vm182, %v5248, 0
    %v5275 = vsel %vm182, %v5249, 0
    %v5278 = vsel %vm182, %v5250, 0
    %v5281 = vsel %vm182, %v5251, 0
    %v5284 = vsel %vm182, %v5252, 0
    %v5287 = vsel %vm182, %v5253, 0
    %5289 = vmatprep.subr.mxu0 0.0
    %5290 = vmatpush1.msra.mxu0 0.0
    %5291 = vmatprep.subr.mxu0 0.0
    %5292 = vmatpush1.msra.mxu0 0.0
    %5293 = vmatprep.subr.mxu0 0.0
    %5294 = vmatpush1.msra.mxu0 0.0
    %5295 = vmatprep.subr.mxu0 0.0
    %5296 = vmatpush1.msra.mxu0 0.0
    %5297 = vmatprep.subr.mxu0 0.0
    %5298 = vmatpush1.msra.mxu0 0.0
    %5299 = vmatprep.subr.mxu0 0.0
    %5300 = vmatpush1.msra.mxu0 0.0
    %5301 = vmatprep.subr.mxu0 0.0
    %5302 = vmatpush1.msra.mxu0 0.0
    %5303 = vmatprep.subr.mxu0 0.0
    %5304 = vmatpush1.msra.mxu0 0.0
    %5305 = vmatprep.subr.mxu0 0.0
    %5306 = vmatpush1.msra.mxu0 0.0
    %5307 = vmatprep.subr.mxu0 0.0
    %5308 = vmatpush1.msra.mxu0 0.0
    %5309 = vmatprep.subr.mxu0 0.0
    %5310 = vmatpush1.msra.mxu0 0.0
    %5311 = vmatprep.subr.mxu0 0.0
    %5312 = vmatpush1.msra.mxu0 0.0
    %5313 = vmatprep.subr.mxu0 0.0
    %5314 = vmatpush1.msra.mxu0 %v5257
    %5315 = vmatprep.subr.mxu0 0.0
    %5316 = vmatpush1.msra.mxu0 %v5256
    %5317 = vmatprep.subr.mxu0 0.0
    %5318 = vmatpush1.msra.mxu0 %v5255
    %5319 = vmatprep.subr.mxu0 0.0
    %5320 = vmatpush1.msra.mxu0 %v5254
    %5321 = vmatprep.subr.mxu0 0.0
    %5322 = vmatpush2.msra.mxu0 0.0
    %5323 = vmatprep.subr.mxu0 0.0
    %5324 = vmatpush2.msra.mxu0 0.0
    %5325 = vmatprep.subr.mxu0 0.0
    %5326 = vmatpush2.msra.mxu0 0.0
    %5327 = vmatprep.subr.mxu0 0.0
    %5328 = vmatpush2.msra.mxu0 0.0
    %5329 = vmatprep.subr.mxu0 0.0
    %5330 = vmatpush2.msra.mxu0 0.0
    %5331 = vmatprep.subr.mxu0 0.0
    %5332 = vmatpush2.msra.mxu0 0.0
    %5333 = vmatprep.subr.mxu0 0.0
    %5334 = vmatpush2.msra.mxu0 0.0
    %5335 = vmatprep.subr.mxu0 0.0
    %5336 = vmatpush2.msra.mxu0 0.0
    %5337 = vmatprep.subr.mxu0 0.0
    %5338 = vmatpush2.msra.mxu0 0.0
    %5339 = vmatprep.subr.mxu0 0.0
    %5340 = vmatpush2.msra.mxu0 0.0
    %5341 = vmatprep.subr.mxu0 0.0
    %5342 = vmatpush2.msra.mxu0 0.0
    %5343 = vmatprep.subr.mxu0 0.0
    %5344 = vmatpush2.msra.mxu0 0.0
    %5345 = vmatprep.subr.mxu0 0.0
    %5346 = vmatpush2.msra.mxu0 0.0
    %5347 = vmatprep.subr.mxu0 0.0
    %5348 = vmatpush2.msra.mxu0 0.0
    %5349 = vmatprep.subr.mxu0 0.0
    %5350 = vmatpush2.msra.mxu0 0.0
    %5351 = vmatprep.subr.mxu0 0.0
    %5352 = vmatpush2.msra.mxu0 0.0
    %5353 = vmatprep.mubr.f32.mxu0 0.0
    %5354 = vmatmul.mubr.f32.gmra.mxu0 %v5266
    %v5355 = vpop.f32.mrf.mxu0
    %v5356 = vadd.f32 %v5263, %v5355
    %v5357 = vpop.f32.mrf.mxu0
    %5358 = vmatprep.mubr.f32.mxu0 0.0
    %5359 = vmatmul.mubr.f32.gmra.mxu0 %v5269
    %v5360 = vpop.f32.mrf.mxu0
    %v5361 = vadd.f32 %v5263, %v5360
    %v5362 = vpop.f32.mrf.mxu0
    %5363 = vmatprep.mubr.f32.mxu0 0.0
    %5364 = vmatmul.mubr.f32.gmra.mxu0 %v5272
    %v5365 = vpop.f32.mrf.mxu0
    %v5366 = vadd.f32 %v5263, %v5365
    %v5367 = vpop.f32.mrf.mxu0
    %5368 = vmatprep.mubr.f32.mxu0 0.0
    %5369 = vmatmul.mubr.f32.gmra.mxu0 %v5275
    %v5370 = vpop.f32.mrf.mxu0
    %v5371 = vadd.f32 %v5263, %v5370
    %v5372 = vpop.f32.mrf.mxu0
    %5373 = vmatprep.mubr.f32.mxu0 0.0
    %5374 = vmatmul.mubr.f32.gmra.mxu0 %v5278
    %v5375 = vpop.f32.mrf.mxu0
    %v5376 = vadd.f32 %v5263, %v5375
    %v5377 = vpop.f32.mrf.mxu0
    %5378 = vmatprep.mubr.f32.mxu0 0.0
    %5379 = vmatmul.mubr.f32.gmra.mxu0 %v5281
    %v5380 = vpop.f32.mrf.mxu0
    %v5381 = vadd.f32 %v5263, %v5380
    %v5382 = vpop.f32.mrf.mxu0
    %5383 = vmatprep.mubr.f32.mxu0 0.0
    %5384 = vmatmul.mubr.f32.gmra.mxu0 %v5284
    %v5385 = vpop.f32.mrf.mxu0
    %v5386 = vadd.f32 %v5263, %v5385
    %v5387 = vpop.f32.mrf.mxu0
    %5388 = vmatprep.mubr.f32.mxu0 0.0
    %5389 = vmatmul.mubr.f32.gmra.mxu0 %v5287
    %v5390 = vpop.f32.mrf.mxu0
    %v5391 = vadd.f32 %v5263, %v5390
    %v5392 = vpop.f32.mrf.mxu0
    %5393 = vdwg.mxu0
    %v5394 = vxor.u32 %v5356, 2147483648
    %v5395 = vxor.u32 %v5361, 2147483648
    %v5396 = vxor.u32 %v5366, 2147483648
    %v5397 = vxor.u32 %v5371, 2147483648
    %v5398 = vxor.u32 %v5376, 2147483648
    %v5399 = vxor.u32 %v5381, 2147483648
    %v5400 = vxor.u32 %v5386, 2147483648
    %v5401 = vxor.u32 %v5391, 2147483648
    %v5402 = vmul.f32 %v5394, 1.442695
    %v5403 = vpow.pop %v5402
    %v5404 = vmul.f32 %v5395, 1.442695
    %v5405 = vpow.pop %v5404
    %v5406 = vmul.f32 %v5396, 1.442695
    %v5407 = vpow.pop %v5406
    %v5408 = vmul.f32 %v5397, 1.442695
    %v5409 = vpow.pop %v5408
    %v5410 = vmul.f32 %v5398, 1.442695
    %v5411 = vpow.pop %v5410
    %v5412 = vmul.f32 %v5399, 1.442695
    %v5413 = vpow.pop %v5412
    %v5414 = vmul.f32 %v5400, 1.442695
    %v5415 = vpow.pop %v5414
    %v5416 = vmul.f32 %v5401, 1.442695
    %v5417 = vpow.pop %v5416
    %v5418 = vadd.f32 %v5403, 1.0
    %v5419 = vadd.f32 %v5405, 1.0
    %v5420 = vadd.f32 %v5407, 1.0
    %v5421 = vadd.f32 %v5409, 1.0
    %v5422 = vadd.f32 %v5411, 1.0
    %v5423 = vadd.f32 %v5413, 1.0
    %v5424 = vadd.f32 %v5415, 1.0
    %v5425 = vadd.f32 %v5417, 1.0
    %v5426 = vrcp.pop %v5418
    %v5427 = vmul.f32 1.0, %v5426
    %v5428 = vrcp.pop %v5419
    %v5429 = vmul.f32 1.0, %v5428
    %v5430 = vrcp.pop %v5420
    %v5431 = vmul.f32 1.0, %v5430
    %v5432 = vrcp.pop %v5421
    %v5433 = vmul.f32 1.0, %v5432
    %v5434 = vrcp.pop %v5422
    %v5435 = vmul.f32 1.0, %v5434
    %v5436 = vrcp.pop %v5423
    %v5437 = vmul.f32 1.0, %v5436
    %v5438 = vrcp.pop %v5424
    %v5439 = vmul.f32 1.0, %v5438
    %v5440 = vrcp.pop %v5425
    %v5441 = vmul.f32 1.0, %v5440
    %5442 = vst.msk [vmem:[#allocation16] sm:$0xff] %vm182, %v5427
    %5443 = vst.msk [vmem:[#allocation16 + $0x8] sm:$0xff] %vm182, %v5429
    %5444 = vst.msk [vmem:[#allocation16 + $0x10] sm:$0xff] %vm182, %v5431
    %5445 = vst.msk [vmem:[#allocation16 + $0x18] sm:$0xff] %vm182, %v5433
    %5446 = vst.msk [vmem:[#allocation16 + $0x20] sm:$0xff] %vm182, %v5435
    %5447 = vst.msk [vmem:[#allocation16 + $0x28] sm:$0xff] %vm182, %v5437
    %5448 = vst.msk [vmem:[#allocation16 + $0x30] sm:$0xff] %vm182, %v5439
    %5449 = vst.msk [vmem:[#allocation16 + $0x38] sm:$0xff] %vm182, %v5441
    // Predicated region
    $region74: #{discriminator_forward.1} parent=1 // pred_check
      _
    $region75: #{discriminator_forward.1} parent=1 // pred_check_branch
      %5451 = sbr.rel (0) target = $region77
    $region76: #{discriminator_forward.1} parent=1 // pred_region
      %s5453 = ssub.s32 1024, 1024
      %5454 = vsyncadd [#allocation6], %s5453
      %s5455 = sshll.u32 [#allocation16], 4
      %s5456 = int_to_ptr.vmem [resolvable:$true] %s5455
      %5461 = dma.vmem_to_hbm [thread:$0]  %s5456, 1024, %s11, [#allocation6], 128, 128, 8
    $region77: #{discriminator_forward.1} parent=1 // pred_fallthru
      _
    // Predicated region
    $region78: #{discriminator_forward.1} parent=1 // pred_check
      _
    $region79: #{discriminator_forward.1} parent=1 // pred_check_branch
      %5463 = sbr.rel (0) target = $region81
    $region80: #{discriminator_forward.1} parent=1 // pred_region
      %5464 = dma.done [#allocation6], 1024
    $region81: #{discriminator_forward.1} parent=1 // pred_fallthru
      _
    %5465 = vsyncpa [#allocation5], 1
    %5466 = vsyncpa [#allocation8], 1
    %5467 = vsyncpa [#allocation11], 1
    %5468 = vsyncpa [#allocation14], 1
    %5469 = vsyncpa [#allocation6], 1

</llo_original>
